<compile_context>
chip_gen: v6e
topology: v6e:2x2x1
jax: 0.10.0
libtpu: 0.0.40
codegen_flags: <defaults>
</compile_context>

<pallas_src>
from functools import partial

import numpy as np
import jax
import jax.numpy as jnp
from jax.experimental import pallas as pl
from jax.experimental.pallas import tpu as pltpu


# ----------------------------------------------------------------------------
# In-kernel helpers
# ----------------------------------------------------------------------------
def _mha_concat_proj(qb, kb, vb, w_proj, *, num_heads, hd, scale):
    """Multi-head attention (batched over the Bt block) + output projection.

    qb/kb/vb: (Bt, n, C) with heads contiguous along C.
    Returns (Bt*n, C) = concat(heads) @ w_proj   (bias added by caller).
    """
    Bt, n, C = qb.shape
    f32 = jnp.float32
    heads = []
    for h in range(num_heads):                      # static unroll over heads
        lo = h * hd
        qh = qb[..., lo:lo + hd]
        kh = kb[..., lo:lo + hd]
        vh = vb[..., lo:lo + hd]
        s = jnp.einsum('bqd,bkd->bqk', qh, kh,
                       preferred_element_type=f32) * scale       # (Bt, n, n)
        s = s - jnp.max(s, axis=-1, keepdims=True)
        p = jnp.exp(s)
        p = p * pl.reciprocal(jnp.sum(p, axis=-1, keepdims=True), approx=True)
        heads.append(jnp.einsum('bqk,bkd->bqd', p, vh,
                                preferred_element_type=f32))      # (Bt, n, hd)
    o = jnp.concatenate(heads, axis=-1).reshape(Bt * n, C)
    return jnp.dot(o, w_proj, preferred_element_type=f32)         # (Bt*n, C)


# ----------------------------------------------------------------------------
# Kernels
# ----------------------------------------------------------------------------
def _mil_attn_kernel(x_ref,
                     mil_w1_ref, mil_b1_ref, mil_w2_ref, mil_b2_ref,
                     qkv_w_ref, qkv_b_ref,
                     projp_w_ref, projp_b_ref,
                     prop_w_ref, prop_b_ref,
                     ln_g_ref, ln_b_ref,
                     proj_w_ref, proj_b_ref,
                     out_ref, *, num_heads, hd, scale):
    """ws > 1 branch.  x_ref / out_ref: (Bt, ws*ws, nW, C)."""
    Bt, wsq, nW, C = x_ref.shape
    f32 = jnp.float32

    x = x_ref[...].astype(f32)                                    # (Bt,wsq,nW,C)
    x2 = x.reshape(Bt * wsq * nW, C)

    # ---- MIL attention scores: one matmul + one tanh stream over all tokens --
    h = jnp.tanh(jnp.dot(x2, mil_w1_ref[...], preferred_element_type=f32)
                 + mil_b1_ref[...])                               # (M, C/2)
    s = jnp.sum(h * mil_w2_ref[...], axis=-1, keepdims=True) + mil_b2_ref[...]
    s = s.reshape(Bt, wsq, nW, 1)

    # ---- softmax pooling over the wsq within-window positions ---------------
    m = jnp.max(s, axis=1, keepdims=True)                         # (Bt,1,nW,1)
    e = jnp.exp(s - m)                                            # (Bt,wsq,nW,1)
    denom = jnp.sum(e, axis=1)                                    # (Bt,nW,1)
    z = jnp.sum(e * x, axis=1) * pl.reciprocal(denom, approx=True)  # (Bt,nW,C)

    # ---- qkv + multi-head attention over windows + inner projection ---------
    qkv = (jnp.dot(z.reshape(Bt * nW, C), qkv_w_ref[...],
                   preferred_element_type=f32) + qkv_b_ref[...])  # (Bt*nW, 3C)
    qb = qkv[:, :C].reshape(Bt, nW, C)
    kb = qkv[:, C:2 * C].reshape(Bt, nW, C)
    vb = qkv[:, 2 * C:].reshape(Bt, nW, C)
    u = _mha_concat_proj(qb, kb, vb, projp_w_ref[...],
                         num_heads=num_heads, hd=hd, scale=scale)
    u = (u + projp_b_ref[...]).reshape(Bt, nW, C) + z             # proj_(attn)+z

    # ---- propagate (depthwise ConvTranspose2d, kernel==stride==ws) ----------
    # followed by LayerNorm and the final proj, all batched over (Bt,wsq,nW,C).
    w_prop = prop_w_ref[...].reshape(1, wsq, 1, C)   # w_prop[k,c]=W[c,0,ki,kj]
    y = u[:, None, :, :] * w_prop + prop_b_ref[...]               # (Bt,wsq,nW,C)
    mu = jnp.mean(y, axis=-1, keepdims=True)
    var = jnp.mean((y - mu) ** 2, axis=-1, keepdims=True)
    yn = (y - mu) * jax.lax.rsqrt(var + 1e-5) * ln_g_ref[...] + ln_b_ref[...]
    o = (jnp.dot(yn.reshape(Bt * wsq * nW, C), proj_w_ref[...],
                 preferred_element_type=f32) + proj_b_ref[...])
    out_ref[...] = o.reshape(Bt, wsq, nW, C).astype(out_ref.dtype)  # one store


def _attn_ws1_kernel(x_ref, qkv_w_ref, qkv_b_ref, proj_w_ref, proj_b_ref,
                     out_ref, *, num_heads, hd, scale):
    """ws == 1 branch: plain multi-head self attention.  x_ref/out_ref: (Bt,N,C)."""
    Bt, N, C = x_ref.shape
    f32 = jnp.float32
    x = x_ref[...].astype(f32)
    qkv = (jnp.dot(x.reshape(Bt * N, C), qkv_w_ref[...],
                   preferred_element_type=f32) + qkv_b_ref[...])  # (Bt*N, 3C)
    qb = qkv[:, :C].reshape(Bt, N, C)
    kb = qkv[:, C:2 * C].reshape(Bt, N, C)
    vb = qkv[:, 2 * C:].reshape(Bt, N, C)
    out = _mha_concat_proj(qb, kb, vb, proj_w_ref[...],
                           num_heads=num_heads, hd=hd, scale=scale)
    out = out + proj_b_ref[...]
    out_ref[...] = out.reshape(Bt, N, C).astype(out_ref.dtype)


# ----------------------------------------------------------------------------
# pallas_call wrappers
# ----------------------------------------------------------------------------
_WS_PARAMS = ("mil_w1", "mil_b1", "mil_w2", "mil_b2",
              "qkv_w", "qkv_b", "projp_w", "projp_b",
              "prop_w", "prop_b", "ln_g", "ln_b", "proj_w", "proj_b")
_WS1_PARAMS = ("qkv_w", "qkv_b", "proj_w", "proj_b")


def _rep_spec(shape):
    nd = len(shape)
    return pl.BlockSpec(shape, lambda b, nd=nd: (0,) * nd)


def _pick_block_batch(B, per_batch_elems, itemsize,
                      vmem_budget_bytes=8 * 1024 * 1024):
    """Batch elements per grid step: big enough to amortize the ~0.35us/step
    overhead, small enough that the double-buffered in+out blocks stay well
    inside the default scoped VMEM on every generation (incl. v7x's 64 MiB),
    while keeping >=2 parallel grid steps so both v7x TensorCores get work."""
    per_b = 4 * per_batch_elems * itemsize        # in + out, double-buffered
    bt = max(1, min(B, vmem_budget_bytes // max(per_b, 1)))
    if B >= 2:
        bt = min(bt, B // 2)                      # >= 2 parallel grid steps
    bt = max(bt, 1)
    while B % bt:                                 # exact blocks only
        bt -= 1
    return bt


def _mil_attn_pallas(xw, params, num_heads):
    B, wsq, nW, C = xw.shape
    hd = C // num_heads
    Bt = _pick_block_batch(B, wsq * nW * C, xw.dtype.itemsize)
    kern = partial(_mil_attn_kernel, num_heads=num_heads, hd=hd, scale=hd ** -0.5)
    weights = [params[name] for name in _WS_PARAMS]
    in_specs = [pl.BlockSpec((Bt, wsq, nW, C), lambda b: (b, 0, 0, 0))]
    in_specs += [_rep_spec(w.shape) for w in weights]
    return pl.pallas_call(
        kern,
        out_shape=jax.ShapeDtypeStruct((B, wsq, nW, C), xw.dtype),
        grid=(B // Bt,),
        in_specs=in_specs,
        out_specs=pl.BlockSpec((Bt, wsq, nW, C), lambda b: (b, 0, 0, 0)),
        compiler_params=pltpu.CompilerParams(dimension_semantics=("parallel",)),
    )(xw, *weights)


def _attn_ws1_pallas(x, params, num_heads):
    B, N, C = x.shape
    hd = C // num_heads
    Bt = _pick_block_batch(B, N * C, x.dtype.itemsize)
    kern = partial(_attn_ws1_kernel, num_heads=num_heads, hd=hd, scale=hd ** -0.5)
    weights = [params[name] for name in _WS1_PARAMS]
    in_specs = [pl.BlockSpec((Bt, N, C), lambda b: (b, 0, 0))]
    in_specs += [_rep_spec(w.shape) for w in weights]
    return pl.pallas_call(
        kern,
        out_shape=jax.ShapeDtypeStruct((B, N, C), x.dtype),
        grid=(B // Bt,),
        in_specs=in_specs,
        out_specs=pl.BlockSpec((Bt, N, C), lambda b: (b, 0, 0)),
        compiler_params=pltpu.CompilerParams(dimension_semantics=("parallel",)),
    )(x, *weights)


def global_mil_pooling_attn(x, size, params, *, ws, num_heads):
    """Forward pass equivalent to GlobalMILPoolingBasedAttn.forward (eval mode)."""
    B, N, C = x.shape
    if ws > 1:
        H, W = size
        pad_b = (ws - H % ws) % ws
        pad_r = (ws - W % ws) % ws
        xh = x.reshape(B, H, W, C)
        xh = jnp.pad(xh, ((0, 0), (0, pad_b), (0, pad_r), (0, 0)))
        Hp, Wp = H + pad_b, W + pad_r
        _h, _w = Hp // ws, Wp // ws
        wsq, nW = ws * ws, _h * _w
        # window-partition glue: (B, H, W, C) -> (B, ws*ws, _h*_w, C)
        xw = (xh.reshape(B, _h, ws, _w, ws, C)
                .transpose(0, 2, 4, 1, 3, 5)
                .reshape(B, wsq, nW, C))
        out = _mil_attn_pallas(xw, params, num_heads)          # (B, wsq, nW, C)
        # un-partition (inverse of the propagate/window layout), crop padding
        y = (out.reshape(B, ws, ws, _h, _w, C)
                .transpose(0, 3, 1, 4, 2, 5)
                .reshape(B, Hp, Wp, C))
        y = y[:, :H, :W, :].reshape(B, N, C)
        return y
    else:
        return _attn_ws1_pallas(x, params, num_heads)


# ----------------------------------------------------------------------------
# Deterministic synthetic parameters (shapes follow the module __init__)
# ----------------------------------------------------------------------------
def init_params(key, dim, ws):
    C = dim
    ks = jax.random.split(key, 16)
    rnd = lambda k, shp, s=0.1: s * jax.random.normal(k, shp, jnp.float32)
    return {
        # mil_attention: Linear(C, C//2) -> Tanh -> Linear(C//2, 1)
        "mil_w1": rnd(ks[0], (C, C // 2)),          # stored (in, out)
        "mil_b1": rnd(ks[1], (1, C // 2), 0.05),
        "mil_w2": rnd(ks[2], (1, C // 2)),          # torch weight of Linear(C//2, 1)
        "mil_b2": rnd(ks[3], (1, 1), 0.05),
        # qkv: Linear(C, 3C)
        "qkv_w": rnd(ks[4], (C, 3 * C)),
        "qkv_b": rnd(ks[5], (1, 3 * C), 0.05),
        # proj_ : Linear(C, C)
        "projp_w": rnd(ks[6], (C, C)),
        "projp_b": rnd(ks[7], (1, C), 0.05),
        # propagate: ConvTranspose2d(C, C, k=ws, stride=ws, groups=C)
        # prop_w[k, c] == torch weight[c, 0, ki, kj] with k = ki*ws + kj
        "prop_w": rnd(ks[8], (ws * ws, C)),
        "prop_b": rnd(ks[9], (1, C), 0.05),
        # LayerNorm(C)
        "ln_g": 1.0 + rnd(ks[10], (1, C), 0.05),
        "ln_b": rnd(ks[11], (1, C), 0.05),
        # proj: Linear(C, C)
        "proj_w": rnd(ks[12], (C, C)),
        "proj_b": rnd(ks[13], (1, C), 0.05),
    }


# ----------------------------------------------------------------------------
# Pure-JAX reference (mirrors the PyTorch forward) for validation
# ----------------------------------------------------------------------------
def ref_forward(x, size, p, *, ws, num_heads):
    B, N, C = x.shape
    hd = C // num_heads
    scale = hd ** -0.5
    hp = jax.lax.Precision.HIGHEST
    dot = lambda a, b: jnp.matmul(a, b, precision=hp)
    if ws > 1:
        H, W = size
        pad_b = (ws - H % ws) % ws
        pad_r = (ws - W % ws) % ws
        xh = jnp.pad(x.reshape(B, H, W, C),
                     ((0, 0), (0, pad_b), (0, pad_r), (0, 0)))
        Hp, Wp = xh.shape[1], xh.shape[2]
        _h, _w = Hp // ws, Wp // ws
        xw = (xh.reshape(B, _h, ws, _w, ws, C).swapaxes(2, 3)
                .reshape(B, _h * _w, ws * ws, C))
        A = dot(jnp.tanh(dot(xw, p["mil_w1"]) + p["mil_b1"]), p["mil_w2"].T) + p["mil_b2"]
        A = jnp.swapaxes(A, -1, -2)
        A = jax.nn.softmax(A, axis=-1)
        z = dot(A, xw)[:, :, 0, :]                                   # (B, nW, C)
        qkv = (dot(z, p["qkv_w"]) + p["qkv_b"]).reshape(
            B, _h * _w, 3, num_heads, hd).transpose(2, 0, 3, 1, 4)
        q, k, v = qkv[0], qkv[1], qkv[2]
        attn = jax.nn.softmax(dot(q, jnp.swapaxes(k, -2, -1)) * scale, axis=-1)
        xo = dot(attn, v).transpose(0, 2, 1, 3).reshape(B, _h * _w, C)
        xo = dot(xo, p["projp_w"]) + p["projp_b"] + z
        xo = xo.reshape(B, _h, _w, C)
        wk = p["prop_w"].reshape(ws, ws, C)
        y = (xo[:, :, None, :, None, :] * wk[None, None, :, None, :, :]
             + p["prop_b"])
        y = y.reshape(B, Hp, Wp, C)[:, :H, :W, :].reshape(B, N, C)
        mu = y.mean(-1, keepdims=True)
        var = ((y - mu) ** 2).mean(-1, keepdims=True)
        y = (y - mu) / jnp.sqrt(var + 1e-5) * p["ln_g"] + p["ln_b"]
        return dot(y, p["proj_w"]) + p["proj_b"]
    else:
        qkv = (dot(x, p["qkv_w"]) + p["qkv_b"]).reshape(
            B, N, 3, num_heads, hd).transpose(2, 0, 3, 1, 4)
        q, k, v = qkv[0], qkv[1], qkv[2]
        attn = jax.nn.softmax(dot(q, jnp.swapaxes(k, -2, -1)) * scale, axis=-1)
        xo = dot(attn, v).transpose(0, 2, 1, 3).reshape(B, N, C)
        return dot(xo, p["proj_w"]) + p["proj_b"]


# ----------------------------------------------------------------------------
if __name__ == "__main__":
    B, H, W, C, num_heads = 2, 8, 8, 32, 8
    N = H * W
    key = jax.random.PRNGKey(0)
    kx, kp = jax.random.split(key)
    x = jax.random.normal(kx, (B, N, C), jnp.float32)

    # --- ws = 2: MIL-pooling window-attention branch ---
    ws = 2
    params = init_params(kp, C, ws)
    out = global_mil_pooling_attn(x, (H, W), params, ws=ws, num_heads=num_heads)
    out = jax.block_until_ready(out)
    ref = ref_forward(x, (H, W), params, ws=ws, num_heads=num_heads)
    np.testing.assert_allclose(np.asarray(out), np.asarray(ref), rtol=2e-2, atol=2e-2)

    # --- ws = 1: plain multi-head attention branch ---
    out1 = global_mil_pooling_attn(x, (H, W), params, ws=1, num_heads=num_heads)
    out1 = jax.block_until_ready(out1)
    ref1 = ref_forward(x, (H, W), params, ws=1, num_heads=num_heads)
    np.testing.assert_allclose(np.asarray(out1), np.asarray(ref1), rtol=2e-2, atol=2e-2)

    print("KERNEL_OK")
</pallas_src>

<mosaic_0001>
module attributes {stable_mosaic.version = 11 : i64} {
  func.func @_mil_attn_kernel(%arg0: i32, %arg1: memref<1x4x16x32xf32, #tpu.memory_space<vmem>>, %arg2: memref<32x16xf32, #tpu.memory_space<vmem>>, %arg3: memref<1x16xf32, #tpu.memory_space<vmem>>, %arg4: memref<1x16xf32, #tpu.memory_space<vmem>>, %arg5: memref<1x1xf32, #tpu.memory_space<vmem>>, %arg6: memref<32x96xf32, #tpu.memory_space<vmem>>, %arg7: memref<1x96xf32, #tpu.memory_space<vmem>>, %arg8: memref<32x32xf32, #tpu.memory_space<vmem>>, %arg9: memref<1x32xf32, #tpu.memory_space<vmem>>, %arg10: memref<4x32xf32, #tpu.memory_space<vmem>>, %arg11: memref<1x32xf32, #tpu.memory_space<vmem>>, %arg12: memref<1x32xf32, #tpu.memory_space<vmem>>, %arg13: memref<1x32xf32, #tpu.memory_space<vmem>>, %arg14: memref<32x32xf32, #tpu.memory_space<vmem>>, %arg15: memref<1x32xf32, #tpu.memory_space<vmem>>, %arg16: memref<1x4x16x32xf32, #tpu.memory_space<vmem>>) attributes {dimension_semantics = [#tpu.dimension_semantics<parallel>], iteration_bounds = array<i64: 2>, scalar_prefetch = 0 : i64, scratch_operands = 0 : i64, tpu.core_type = #tpu.core_type<tc>, window_params = [{transform_indices = @transform_0, window_bounds = array<i64: 1, 4, 16, 32>}, {pipeline_mode = #tpu.pipeline_mode<synchronous>, transform_indices = @transform_1, window_bounds = array<i64: 32, 16>}, {pipeline_mode = #tpu.pipeline_mode<synchronous>, transform_indices = @transform_2, window_bounds = array<i64: 1, 16>}, {pipeline_mode = #tpu.pipeline_mode<synchronous>, transform_indices = @transform_3, window_bounds = array<i64: 1, 16>}, {pipeline_mode = #tpu.pipeline_mode<synchronous>, transform_indices = @transform_4, window_bounds = array<i64: 1, 1>}, {pipeline_mode = #tpu.pipeline_mode<synchronous>, transform_indices = @transform_5, window_bounds = array<i64: 32, 96>}, {pipeline_mode = #tpu.pipeline_mode<synchronous>, transform_indices = @transform_6, window_bounds = array<i64: 1, 96>}, {pipeline_mode = #tpu.pipeline_mode<synchronous>, transform_indices = @transform_7, window_bounds = array<i64: 32, 32>}, {pipeline_mode = #tpu.pipeline_mode<synchronous>, transform_indices = @transform_8, window_bounds = array<i64: 1, 32>}, {pipeline_mode = #tpu.pipeline_mode<synchronous>, transform_indices = @transform_9, window_bounds = array<i64: 4, 32>}, {pipeline_mode = #tpu.pipeline_mode<synchronous>, transform_indices = @transform_10, window_bounds = array<i64: 1, 32>}, {pipeline_mode = #tpu.pipeline_mode<synchronous>, transform_indices = @transform_11, window_bounds = array<i64: 1, 32>}, {pipeline_mode = #tpu.pipeline_mode<synchronous>, transform_indices = @transform_12, window_bounds = array<i64: 1, 32>}, {pipeline_mode = #tpu.pipeline_mode<synchronous>, transform_indices = @transform_13, window_bounds = array<i64: 32, 32>}, {pipeline_mode = #tpu.pipeline_mode<synchronous>, transform_indices = @transform_14, window_bounds = array<i64: 1, 32>}, {transform_indices = @transform_15, window_bounds = array<i64: 1, 4, 16, 32>}]} {
    %c0 = arith.constant 0 : index
    %c0_0 = arith.constant 0 : index
    %c0_1 = arith.constant 0 : index
    %c0_2 = arith.constant 0 : index
    %0 = vector.load %arg1[%c0, %c0_0, %c0_1, %c0_2] : memref<1x4x16x32xf32, #tpu.memory_space<vmem>>, vector<1x4x16x32xf32>
    %1 = vector.shape_cast %0 : vector<1x4x16x32xf32> to vector<64x32xf32>
    %c0_3 = arith.constant 0 : index
    %c0_4 = arith.constant 0 : index
    %2 = vector.load %arg2[%c0_3, %c0_4] : memref<32x16xf32, #tpu.memory_space<vmem>>, vector<32x16xf32>
    %cst = arith.constant dense<0.000000e+00> : vector<64x16xf32>
    %3 = tpu.matmul %1, %2, %cst {dimension_numbers = #tpu.dot_dimension_numbers<[1], [0], [0], [1], [0, 0, 1, 1], [], []>} : vector<64x32xf32>, vector<32x16xf32>, vector<64x16xf32> -> vector<64x16xf32>
    %c0_5 = arith.constant 0 : index
    %c0_6 = arith.constant 0 : index
    %4 = vector.load %arg3[%c0_5, %c0_6] : memref<1x16xf32, #tpu.memory_space<vmem>>, vector<1x16xf32>
    %5 = vector.broadcast %4 : vector<1x16xf32> to vector<64x16xf32>
    %6 = arith.addf %3, %5 : vector<64x16xf32>
    %7 = math.tanh %6 : vector<64x16xf32>
    %c0_7 = arith.constant 0 : index
    %c0_8 = arith.constant 0 : index
    %8 = vector.load %arg4[%c0_7, %c0_8] : memref<1x16xf32, #tpu.memory_space<vmem>>, vector<1x16xf32>
    %9 = vector.broadcast %8 : vector<1x16xf32> to vector<64x16xf32>
    %10 = arith.mulf %7, %9 : vector<64x16xf32>
    %cst_9 = arith.constant dense<0.000000e+00> : vector<64xf32>
    %11 = vector.multi_reduction <add>, %10, %cst_9 [1] : vector<64x16xf32> to vector<64xf32>
    %12 = vector.shape_cast %11 : vector<64xf32> to vector<64x1xf32>
    %c0_10 = arith.constant 0 : index
    %c0_11 = arith.constant 0 : index
    %13 = vector.load %arg5[%c0_10, %c0_11] : memref<1x1xf32, #tpu.memory_space<vmem>>, vector<1x1xf32>
    %14 = vector.broadcast %13 : vector<1x1xf32> to vector<64x1xf32>
    %15 = arith.addf %12, %14 : vector<64x1xf32>
    %16 = vector.shape_cast %15 : vector<64x1xf32> to vector<1x4x16x1xf32>
    %cst_12 = arith.constant dense<0xFF800000> : vector<1x16x1xf32>
    %17 = vector.multi_reduction <maximumf>, %16, %cst_12 [1] : vector<1x4x16x1xf32> to vector<1x16x1xf32>
    %18 = vector.shape_cast %17 : vector<1x16x1xf32> to vector<1x1x16x1xf32>
    %19 = vector.broadcast %18 : vector<1x1x16x1xf32> to vector<1x4x16x1xf32>
    %20 = arith.subf %16, %19 : vector<1x4x16x1xf32>
    %21 = math.exp %20 : vector<1x4x16x1xf32>
    %cst_13 = arith.constant dense<0.000000e+00> : vector<1x16x1xf32>
    %22 = vector.multi_reduction <add>, %21, %cst_13 [1] : vector<1x4x16x1xf32> to vector<1x16x1xf32>
    %23 = vector.broadcast %21 : vector<1x4x16x1xf32> to vector<1x4x16x32xf32>
    %24 = arith.mulf %23, %0 : vector<1x4x16x32xf32>
    %cst_14 = arith.constant dense<0.000000e+00> : vector<1x16x32xf32>
    %25 = vector.multi_reduction <add>, %24, %cst_14 [1] : vector<1x4x16x32xf32> to vector<1x16x32xf32>
    %26 = tpu.reciprocal %22 {approx = true} : vector<1x16x1xf32> -> vector<1x16x1xf32>
    %27 = vector.broadcast %26 : vector<1x16x1xf32> to vector<1x16x32xf32>
    %28 = arith.mulf %25, %27 : vector<1x16x32xf32>
    %29 = vector.shape_cast %28 : vector<1x16x32xf32> to vector<16x32xf32>
    %c0_15 = arith.constant 0 : index
    %c0_16 = arith.constant 0 : index
    %30 = vector.load %arg6[%c0_15, %c0_16] : memref<32x96xf32, #tpu.memory_space<vmem>>, vector<32x96xf32>
    %cst_17 = arith.constant dense<0.000000e+00> : vector<16x96xf32>
    %31 = tpu.matmul %29, %30, %cst_17 {dimension_numbers = #tpu.dot_dimension_numbers<[1], [0], [0], [1], [0, 0, 1, 1], [], []>} : vector<16x32xf32>, vector<32x96xf32>, vector<16x96xf32> -> vector<16x96xf32>
    %c0_18 = arith.constant 0 : index
    %c0_19 = arith.constant 0 : index
    %32 = vector.load %arg7[%c0_18, %c0_19] : memref<1x96xf32, #tpu.memory_space<vmem>>, vector<1x96xf32>
    %33 = vector.broadcast %32 : vector<1x96xf32> to vector<16x96xf32>
    %34 = arith.addf %31, %33 : vector<16x96xf32>
    %35 = vector.extract_strided_slice %34 {offsets = [0, 0], sizes = [16, 32], strides = [1, 1]} : vector<16x96xf32> to vector<16x32xf32>
    %36 = vector.shape_cast %35 : vector<16x32xf32> to vector<1x16x32xf32>
    %37 = vector.extract_strided_slice %34 {offsets = [0, 32], sizes = [16, 32], strides = [1, 1]} : vector<16x96xf32> to vector<16x32xf32>
    %38 = vector.shape_cast %37 : vector<16x32xf32> to vector<1x16x32xf32>
    %39 = vector.extract_strided_slice %34 {offsets = [0, 64], sizes = [16, 32], strides = [1, 1]} : vector<16x96xf32> to vector<16x32xf32>
    %40 = vector.shape_cast %39 : vector<16x32xf32> to vector<1x16x32xf32>
    %c0_20 = arith.constant 0 : index
    %c0_21 = arith.constant 0 : index
    %41 = vector.load %arg8[%c0_20, %c0_21] : memref<32x32xf32, #tpu.memory_space<vmem>>, vector<32x32xf32>
    %42 = vector.extract_strided_slice %36 {offsets = [0, 0, 0], sizes = [1, 16, 4], strides = [1, 1, 1]} : vector<1x16x32xf32> to vector<1x16x4xf32>
    %43 = vector.extract_strided_slice %38 {offsets = [0, 0, 0], sizes = [1, 16, 4], strides = [1, 1, 1]} : vector<1x16x32xf32> to vector<1x16x4xf32>
    %44 = vector.extract_strided_slice %40 {offsets = [0, 0, 0], sizes = [1, 16, 4], strides = [1, 1, 1]} : vector<1x16x32xf32> to vector<1x16x4xf32>
    "tpu.trace_start"() <{level = 10 : i32, message = "bqd,bkd->bqk"}> : () -> ()
    %cst_22 = arith.constant dense<0.000000e+00> : vector<1x16x16xf32>
    %45 = tpu.matmul %42, %43, %cst_22 {dimension_numbers = #tpu.dot_dimension_numbers<[2], [2], [1], [1], [0, 0, 0, 1, 1, 1], [0], [0]>} : vector<1x16x4xf32>, vector<1x16x4xf32>, vector<1x16x16xf32> -> vector<1x16x16xf32>
    "tpu.trace_stop"() : () -> ()
    %cst_23 = arith.constant 5.000000e-01 : f32
    %46 = vector.broadcast %cst_23 : f32 to vector<1x16x16xf32>
    %47 = arith.mulf %45, %46 : vector<1x16x16xf32>
    %cst_24 = arith.constant dense<0xFF800000> : vector<1x16xf32>
    %48 = vector.multi_reduction <maximumf>, %47, %cst_24 [2] : vector<1x16x16xf32> to vector<1x16xf32>
    %49 = vector.shape_cast %48 : vector<1x16xf32> to vector<1x16x1xf32>
    %50 = vector.broadcast %49 : vector<1x16x1xf32> to vector<1x16x16xf32>
    %51 = arith.subf %47, %50 : vector<1x16x16xf32>
    %52 = math.exp %51 : vector<1x16x16xf32>
    %cst_25 = arith.constant dense<0.000000e+00> : vector<1x16xf32>
    %53 = vector.multi_reduction <add>, %52, %cst_25 [2] : vector<1x16x16xf32> to vector<1x16xf32>
    %54 = vector.shape_cast %53 : vector<1x16xf32> to vector<1x16x1xf32>
    %55 = tpu.reciprocal %54 {approx = true} : vector<1x16x1xf32> -> vector<1x16x1xf32>
    %56 = vector.broadcast %55 : vector<1x16x1xf32> to vector<1x16x16xf32>
    %57 = arith.mulf %52, %56 : vector<1x16x16xf32>
    "tpu.trace_start"() <{level = 10 : i32, message = "bqk,bkd->bqd"}> : () -> ()
    %cst_26 = arith.constant dense<0.000000e+00> : vector<1x16x4xf32>
    %58 = tpu.matmul %57, %44, %cst_26 {dimension_numbers = #tpu.dot_dimension_numbers<[2], [1], [1], [2], [0, 0, 0, 1, 1, 2], [0], [0]>} : vector<1x16x16xf32>, vector<1x16x4xf32>, vector<1x16x4xf32> -> vector<1x16x4xf32>
    "tpu.trace_stop"() : () -> ()
    %59 = vector.extract_strided_slice %36 {offsets = [0, 0, 4], sizes = [1, 16, 4], strides = [1, 1, 1]} : vector<1x16x32xf32> to vector<1x16x4xf32>
    %60 = vector.extract_strided_slice %38 {offsets = [0, 0, 4], sizes = [1, 16, 4], strides = [1, 1, 1]} : vector<1x16x32xf32> to vector<1x16x4xf32>
    %61 = vector.extract_strided_slice %40 {offsets = [0, 0, 4], sizes = [1, 16, 4], strides = [1, 1, 1]} : vector<1x16x32xf32> to vector<1x16x4xf32>
    "tpu.trace_start"() <{level = 10 : i32, message = "bqd,bkd->bqk"}> : () -> ()
    %cst_27 = arith.constant dense<0.000000e+00> : vector<1x16x16xf32>
    %62 = tpu.matmul %59, %60, %cst_27 {dimension_numbers = #tpu.dot_dimension_numbers<[2], [2], [1], [1], [0, 0, 0, 1, 1, 1], [0], [0]>} : vector<1x16x4xf32>, vector<1x16x4xf32>, vector<1x16x16xf32> -> vector<1x16x16xf32>
    "tpu.trace_stop"() : () -> ()
    %cst_28 = arith.constant 5.000000e-01 : f32
    %63 = vector.broadcast %cst_28 : f32 to vector<1x16x16xf32>
    %64 = arith.mulf %62, %63 : vector<1x16x16xf32>
    %cst_29 = arith.constant dense<0xFF800000> : vector<1x16xf32>
    %65 = vector.multi_reduction <maximumf>, %64, %cst_29 [2] : vector<1x16x16xf32> to vector<1x16xf32>
    %66 = vector.shape_cast %65 : vector<1x16xf32> to vector<1x16x1xf32>
    %67 = vector.broadcast %66 : vector<1x16x1xf32> to vector<1x16x16xf32>
    %68 = arith.subf %64, %67 : vector<1x16x16xf32>
    %69 = math.exp %68 : vector<1x16x16xf32>
    %cst_30 = arith.constant dense<0.000000e+00> : vector<1x16xf32>
    %70 = vector.multi_reduction <add>, %69, %cst_30 [2] : vector<1x16x16xf32> to vector<1x16xf32>
    %71 = vector.shape_cast %70 : vector<1x16xf32> to vector<1x16x1xf32>
    %72 = tpu.reciprocal %71 {approx = true} : vector<1x16x1xf32> -> vector<1x16x1xf32>
    %73 = vector.broadcast %72 : vector<1x16x1xf32> to vector<1x16x16xf32>
    %74 = arith.mulf %69, %73 : vector<1x16x16xf32>
    "tpu.trace_start"() <{level = 10 : i32, message = "bqk,bkd->bqd"}> : () -> ()
    %cst_31 = arith.constant dense<0.000000e+00> : vector<1x16x4xf32>
    %75 = tpu.matmul %74, %61, %cst_31 {dimension_numbers = #tpu.dot_dimension_numbers<[2], [1], [1], [2], [0, 0, 0, 1, 1, 2], [0], [0]>} : vector<1x16x16xf32>, vector<1x16x4xf32>, vector<1x16x4xf32> -> vector<1x16x4xf32>
    "tpu.trace_stop"() : () -> ()
    %76 = vector.extract_strided_slice %36 {offsets = [0, 0, 8], sizes = [1, 16, 4], strides = [1, 1, 1]} : vector<1x16x32xf32> to vector<1x16x4xf32>
    %77 = vector.extract_strided_slice %38 {offsets = [0, 0, 8], sizes = [1, 16, 4], strides = [1, 1, 1]} : vector<1x16x32xf32> to vector<1x16x4xf32>
    %78 = vector.extract_strided_slice %40 {offsets = [0, 0, 8], sizes = [1, 16, 4], strides = [1, 1, 1]} : vector<1x16x32xf32> to vector<1x16x4xf32>
    "tpu.trace_start"() <{level = 10 : i32, message = "bqd,bkd->bqk"}> : () -> ()
    %cst_32 = arith.constant dense<0.000000e+00> : vector<1x16x16xf32>
    %79 = tpu.matmul %76, %77, %cst_32 {dimension_numbers = #tpu.dot_dimension_numbers<[2], [2], [1], [1], [0, 0, 0, 1, 1, 1], [0], [0]>} : vector<1x16x4xf32>, vector<1x16x4xf32>, vector<1x16x16xf32> -> vector<1x16x16xf32>
    "tpu.trace_stop"() : () -> ()
    %cst_33 = arith.constant 5.000000e-01 : f32
    %80 = vector.broadcast %cst_33 : f32 to vector<1x16x16xf32>
    %81 = arith.mulf %79, %80 : vector<1x16x16xf32>
    %cst_34 = arith.constant dense<0xFF800000> : vector<1x16xf32>
    %82 = vector.multi_reduction <maximumf>, %81, %cst_34 [2] : vector<1x16x16xf32> to vector<1x16xf32>
    %83 = vector.shape_cast %82 : vector<1x16xf32> to vector<1x16x1xf32>
    %84 = vector.broadcast %83 : vector<1x16x1xf32> to vector<1x16x16xf32>
    %85 = arith.subf %81, %84 : vector<1x16x16xf32>
    %86 = math.exp %85 : vector<1x16x16xf32>
    %cst_35 = arith.constant dense<0.000000e+00> : vector<1x16xf32>
    %87 = vector.multi_reduction <add>, %86, %cst_35 [2] : vector<1x16x16xf32> to vector<1x16xf32>
    %88 = vector.shape_cast %87 : vector<1x16xf32> to vector<1x16x1xf32>
    %89 = tpu.reciprocal %88 {approx = true} : vector<1x16x1xf32> -> vector<1x16x1xf32>
    %90 = vector.broadcast %89 : vector<1x16x1xf32> to vector<1x16x16xf32>
    %91 = arith.mulf %86, %90 : vector<1x16x16xf32>
    "tpu.trace_start"() <{level = 10 : i32, message = "bqk,bkd->bqd"}> : () -> ()
    %cst_36 = arith.constant dense<0.000000e+00> : vector<1x16x4xf32>
    %92 = tpu.matmul %91, %78, %cst_36 {dimension_numbers = #tpu.dot_dimension_numbers<[2], [1], [1], [2], [0, 0, 0, 1, 1, 2], [0], [0]>} : vector<1x16x16xf32>, vector<1x16x4xf32>, vector<1x16x4xf32> -> vector<1x16x4xf32>
    "tpu.trace_stop"() : () -> ()
    %93 = vector.extract_strided_slice %36 {offsets = [0, 0, 12], sizes = [1, 16, 4], strides = [1, 1, 1]} : vector<1x16x32xf32> to vector<1x16x4xf32>
    %94 = vector.extract_strided_slice %38 {offsets = [0, 0, 12], sizes = [1, 16, 4], strides = [1, 1, 1]} : vector<1x16x32xf32> to vector<1x16x4xf32>
    %95 = vector.extract_strided_slice %40 {offsets = [0, 0, 12], sizes = [1, 16, 4], strides = [1, 1, 1]} : vector<1x16x32xf32> to vector<1x16x4xf32>
    "tpu.trace_start"() <{level = 10 : i32, message = "bqd,bkd->bqk"}> : () -> ()
    %cst_37 = arith.constant dense<0.000000e+00> : vector<1x16x16xf32>
    %96 = tpu.matmul %93, %94, %cst_37 {dimension_numbers = #tpu.dot_dimension_numbers<[2], [2], [1], [1], [0, 0, 0, 1, 1, 1], [0], [0]>} : vector<1x16x4xf32>, vector<1x16x4xf32>, vector<1x16x16xf32> -> vector<1x16x16xf32>
    "tpu.trace_stop"() : () -> ()
    %cst_38 = arith.constant 5.000000e-01 : f32
    %97 = vector.broadcast %cst_38 : f32 to vector<1x16x16xf32>
    %98 = arith.mulf %96, %97 : vector<1x16x16xf32>
    %cst_39 = arith.constant dense<0xFF800000> : vector<1x16xf32>
    %99 = vector.multi_reduction <maximumf>, %98, %cst_39 [2] : vector<1x16x16xf32> to vector<1x16xf32>
    %100 = vector.shape_cast %99 : vector<1x16xf32> to vector<1x16x1xf32>
    %101 = vector.broadcast %100 : vector<1x16x1xf32> to vector<1x16x16xf32>
    %102 = arith.subf %98, %101 : vector<1x16x16xf32>
    %103 = math.exp %102 : vector<1x16x16xf32>
    %cst_40 = arith.constant dense<0.000000e+00> : vector<1x16xf32>
    %104 = vector.multi_reduction <add>, %103, %cst_40 [2] : vector<1x16x16xf32> to vector<1x16xf32>
    %105 = vector.shape_cast %104 : vector<1x16xf32> to vector<1x16x1xf32>
    %106 = tpu.reciprocal %105 {approx = true} : vector<1x16x1xf32> -> vector<1x16x1xf32>
    %107 = vector.broadcast %106 : vector<1x16x1xf32> to vector<1x16x16xf32>
    %108 = arith.mulf %103, %107 : vector<1x16x16xf32>
    "tpu.trace_start"() <{level = 10 : i32, message = "bqk,bkd->bqd"}> : () -> ()
    %cst_41 = arith.constant dense<0.000000e+00> : vector<1x16x4xf32>
    %109 = tpu.matmul %108, %95, %cst_41 {dimension_numbers = #tpu.dot_dimension_numbers<[2], [1], [1], [2], [0, 0, 0, 1, 1, 2], [0], [0]>} : vector<1x16x16xf32>, vector<1x16x4xf32>, vector<1x16x4xf32> -> vector<1x16x4xf32>
    "tpu.trace_stop"() : () -> ()
    %110 = vector.extract_strided_slice %36 {offsets = [0, 0, 16], sizes = [1, 16, 4], strides = [1, 1, 1]} : vector<1x16x32xf32> to vector<1x16x4xf32>
    %111 = vector.extract_strided_slice %38 {offsets = [0, 0, 16], sizes = [1, 16, 4], strides = [1, 1, 1]} : vector<1x16x32xf32> to vector<1x16x4xf32>
    %112 = vector.extract_strided_slice %40 {offsets = [0, 0, 16], sizes = [1, 16, 4], strides = [1, 1, 1]} : vector<1x16x32xf32> to vector<1x16x4xf32>
    "tpu.trace_start"() <{level = 10 : i32, message = "bqd,bkd->bqk"}> : () -> ()
    %cst_42 = arith.constant dense<0.000000e+00> : vector<1x16x16xf32>
    %113 = tpu.matmul %110, %111, %cst_42 {dimension_numbers = #tpu.dot_dimension_numbers<[2], [2], [1], [1], [0, 0, 0, 1, 1, 1], [0], [0]>} : vector<1x16x4xf32>, vector<1x16x4xf32>, vector<1x16x16xf32> -> vector<1x16x16xf32>
    "tpu.trace_stop"() : () -> ()
    %cst_43 = arith.constant 5.000000e-01 : f32
    %114 = vector.broadcast %cst_43 : f32 to vector<1x16x16xf32>
    %115 = arith.mulf %113, %114 : vector<1x16x16xf32>
    %cst_44 = arith.constant dense<0xFF800000> : vector<1x16xf32>
    %116 = vector.multi_reduction <maximumf>, %115, %cst_44 [2] : vector<1x16x16xf32> to vector<1x16xf32>
    %117 = vector.shape_cast %116 : vector<1x16xf32> to vector<1x16x1xf32>
    %118 = vector.broadcast %117 : vector<1x16x1xf32> to vector<1x16x16xf32>
    %119 = arith.subf %115, %118 : vector<1x16x16xf32>
    %120 = math.exp %119 : vector<1x16x16xf32>
    %cst_45 = arith.constant dense<0.000000e+00> : vector<1x16xf32>
    %121 = vector.multi_reduction <add>, %120, %cst_45 [2] : vector<1x16x16xf32> to vector<1x16xf32>
    %122 = vector.shape_cast %121 : vector<1x16xf32> to vector<1x16x1xf32>
    %123 = tpu.reciprocal %122 {approx = true} : vector<1x16x1xf32> -> vector<1x16x1xf32>
    %124 = vector.broadcast %123 : vector<1x16x1xf32> to vector<1x16x16xf32>
    %125 = arith.mulf %120, %124 : vector<1x16x16xf32>
    "tpu.trace_start"() <{level = 10 : i32, message = "bqk,bkd->bqd"}> : () -> ()
    %cst_46 = arith.constant dense<0.000000e+00> : vector<1x16x4xf32>
    %126 = tpu.matmul %125, %112, %cst_46 {dimension_numbers = #tpu.dot_dimension_numbers<[2], [1], [1], [2], [0, 0, 0, 1, 1, 2], [0], [0]>} : vector<1x16x16xf32>, vector<1x16x4xf32>, vector<1x16x4xf32> -> vector<1x16x4xf32>
    "tpu.trace_stop"() : () -> ()
    %127 = vector.extract_strided_slice %36 {offsets = [0, 0, 20], sizes = [1, 16, 4], strides = [1, 1, 1]} : vector<1x16x32xf32> to vector<1x16x4xf32>
    %128 = vector.extract_strided_slice %38 {offsets = [0, 0, 20], sizes = [1, 16, 4], strides = [1, 1, 1]} : vector<1x16x32xf32> to vector<1x16x4xf32>
    %129 = vector.extract_strided_slice %40 {offsets = [0, 0, 20], sizes = [1, 16, 4], strides = [1, 1, 1]} : vector<1x16x32xf32> to vector<1x16x4xf32>
    "tpu.trace_start"() <{level = 10 : i32, message = "bqd,bkd->bqk"}> : () -> ()
    %cst_47 = arith.constant dense<0.000000e+00> : vector<1x16x16xf32>
    %130 = tpu.matmul %127, %128, %cst_47 {dimension_numbers = #tpu.dot_dimension_numbers<[2], [2], [1], [1], [0, 0, 0, 1, 1, 1], [0], [0]>} : vector<1x16x4xf32>, vector<1x16x4xf32>, vector<1x16x16xf32> -> vector<1x16x16xf32>
    "tpu.trace_stop"() : () -> ()
    %cst_48 = arith.constant 5.000000e-01 : f32
    %131 = vector.broadcast %cst_48 : f32 to vector<1x16x16xf32>
    %132 = arith.mulf %130, %131 : vector<1x16x16xf32>
    %cst_49 = arith.constant dense<0xFF800000> : vector<1x16xf32>
    %133 = vector.multi_reduction <maximumf>, %132, %cst_49 [2] : vector<1x16x16xf32> to vector<1x16xf32>
    %134 = vector.shape_cast %133 : vector<1x16xf32> to vector<1x16x1xf32>
    %135 = vector.broadcast %134 : vector<1x16x1xf32> to vector<1x16x16xf32>
    %136 = arith.subf %132, %135 : vector<1x16x16xf32>
    %137 = math.exp %136 : vector<1x16x16xf32>
    %cst_50 = arith.constant dense<0.000000e+00> : vector<1x16xf32>
    %138 = vector.multi_reduction <add>, %137, %cst_50 [2] : vector<1x16x16xf32> to vector<1x16xf32>
    %139 = vector.shape_cast %138 : vector<1x16xf32> to vector<1x16x1xf32>
    %140 = tpu.reciprocal %139 {approx = true} : vector<1x16x1xf32> -> vector<1x16x1xf32>
    %141 = vector.broadcast %140 : vector<1x16x1xf32> to vector<1x16x16xf32>
    %142 = arith.mulf %137, %141 : vector<1x16x16xf32>
    "tpu.trace_start"() <{level = 10 : i32, message = "bqk,bkd->bqd"}> : () -> ()
    %cst_51 = arith.constant dense<0.000000e+00> : vector<1x16x4xf32>
    %143 = tpu.matmul %142, %129, %cst_51 {dimension_numbers = #tpu.dot_dimension_numbers<[2], [1], [1], [2], [0, 0, 0, 1, 1, 2], [0], [0]>} : vector<1x16x16xf32>, vector<1x16x4xf32>, vector<1x16x4xf32> -> vector<1x16x4xf32>
    "tpu.trace_stop"() : () -> ()
    %144 = vector.extract_strided_slice %36 {offsets = [0, 0, 24], sizes = [1, 16, 4], strides = [1, 1, 1]} : vector<1x16x32xf32> to vector<1x16x4xf32>
    %145 = vector.extract_strided_slice %38 {offsets = [0, 0, 24], sizes = [1, 16, 4], strides = [1, 1, 1]} : vector<1x16x32xf32> to vector<1x16x4xf32>
    %146 = vector.extract_strided_slice %40 {offsets = [0, 0, 24], sizes = [1, 16, 4], strides = [1, 1, 1]} : vector<1x16x32xf32> to vector<1x16x4xf32>
    "tpu.trace_start"() <{level = 10 : i32, message = "bqd,bkd->bqk"}> : () -> ()
    %cst_52 = arith.constant dense<0.000000e+00> : vector<1x16x16xf32>
    %147 = tpu.matmul %144, %145, %cst_52 {dimension_numbers = #tpu.dot_dimension_numbers<[2], [2], [1], [1], [0, 0, 0, 1, 1, 1], [0], [0]>} : vector<1x16x4xf32>, vector<1x16x4xf32>, vector<1x16x16xf32> -> vector<1x16x16xf32>
    "tpu.trace_stop"() : () -> ()
    %cst_53 = arith.constant 5.000000e-01 : f32
    %148 = vector.broadcast %cst_53 : f32 to vector<1x16x16xf32>
    %149 = arith.mulf %147, %148 : vector<1x16x16xf32>
    %cst_54 = arith.constant dense<0xFF800000> : vector<1x16xf32>
    %150 = vector.multi_reduction <maximumf>, %149, %cst_54 [2] : vector<1x16x16xf32> to vector<1x16xf32>
    %151 = vector.shape_cast %150 : vector<1x16xf32> to vector<1x16x1xf32>
    %152 = vector.broadcast %151 : vector<1x16x1xf32> to vector<1x16x16xf32>
    %153 = arith.subf %149, %152 : vector<1x16x16xf32>
    %154 = math.exp %153 : vector<1x16x16xf32>
    %cst_55 = arith.constant dense<0.000000e+00> : vector<1x16xf32>
    %155 = vector.multi_reduction <add>, %154, %cst_55 [2] : vector<1x16x16xf32> to vector<1x16xf32>
    %156 = vector.shape_cast %155 : vector<1x16xf32> to vector<1x16x1xf32>
    %157 = tpu.reciprocal %156 {approx = true} : vector<1x16x1xf32> -> vector<1x16x1xf32>
    %158 = vector.broadcast %157 : vector<1x16x1xf32> to vector<1x16x16xf32>
    %159 = arith.mulf %154, %158 : vector<1x16x16xf32>
    "tpu.trace_start"() <{level = 10 : i32, message = "bqk,bkd->bqd"}> : () -> ()
    %cst_56 = arith.constant dense<0.000000e+00> : vector<1x16x4xf32>
    %160 = tpu.matmul %159, %146, %cst_56 {dimension_numbers = #tpu.dot_dimension_numbers<[2], [1], [1], [2], [0, 0, 0, 1, 1, 2], [0], [0]>} : vector<1x16x16xf32>, vector<1x16x4xf32>, vector<1x16x4xf32> -> vector<1x16x4xf32>
    "tpu.trace_stop"() : () -> ()
    %161 = vector.extract_strided_slice %36 {offsets = [0, 0, 28], sizes = [1, 16, 4], strides = [1, 1, 1]} : vector<1x16x32xf32> to vector<1x16x4xf32>
    %162 = vector.extract_strided_slice %38 {offsets = [0, 0, 28], sizes = [1, 16, 4], strides = [1, 1, 1]} : vector<1x16x32xf32> to vector<1x16x4xf32>
    %163 = vector.extract_strided_slice %40 {offsets = [0, 0, 28], sizes = [1, 16, 4], strides = [1, 1, 1]} : vector<1x16x32xf32> to vector<1x16x4xf32>
    "tpu.trace_start"() <{level = 10 : i32, message = "bqd,bkd->bqk"}> : () -> ()
    %cst_57 = arith.constant dense<0.000000e+00> : vector<1x16x16xf32>
    %164 = tpu.matmul %161, %162, %cst_57 {dimension_numbers = #tpu.dot_dimension_numbers<[2], [2], [1], [1], [0, 0, 0, 1, 1, 1], [0], [0]>} : vector<1x16x4xf32>, vector<1x16x4xf32>, vector<1x16x16xf32> -> vector<1x16x16xf32>
    "tpu.trace_stop"() : () -> ()
    %cst_58 = arith.constant 5.000000e-01 : f32
    %165 = vector.broadcast %cst_58 : f32 to vector<1x16x16xf32>
    %166 = arith.mulf %164, %165 : vector<1x16x16xf32>
    %cst_59 = arith.constant dense<0xFF800000> : vector<1x16xf32>
    %167 = vector.multi_reduction <maximumf>, %166, %cst_59 [2] : vector<1x16x16xf32> to vector<1x16xf32>
    %168 = vector.shape_cast %167 : vector<1x16xf32> to vector<1x16x1xf32>
    %169 = vector.broadcast %168 : vector<1x16x1xf32> to vector<1x16x16xf32>
    %170 = arith.subf %166, %169 : vector<1x16x16xf32>
    %171 = math.exp %170 : vector<1x16x16xf32>
    %cst_60 = arith.constant dense<0.000000e+00> : vector<1x16xf32>
    %172 = vector.multi_reduction <add>, %171, %cst_60 [2] : vector<1x16x16xf32> to vector<1x16xf32>
    %173 = vector.shape_cast %172 : vector<1x16xf32> to vector<1x16x1xf32>
    %174 = tpu.reciprocal %173 {approx = true} : vector<1x16x1xf32> -> vector<1x16x1xf32>
    %175 = vector.broadcast %174 : vector<1x16x1xf32> to vector<1x16x16xf32>
    %176 = arith.mulf %171, %175 : vector<1x16x16xf32>
    "tpu.trace_start"() <{level = 10 : i32, message = "bqk,bkd->bqd"}> : () -> ()
    %cst_61 = arith.constant dense<0.000000e+00> : vector<1x16x4xf32>
    %177 = tpu.matmul %176, %163, %cst_61 {dimension_numbers = #tpu.dot_dimension_numbers<[2], [1], [1], [2], [0, 0, 0, 1, 1, 2], [0], [0]>} : vector<1x16x16xf32>, vector<1x16x4xf32>, vector<1x16x4xf32> -> vector<1x16x4xf32>
    "tpu.trace_stop"() : () -> ()
    %178 = tpu.concatenate %58, %75, %92, %109, %126, %143, %160, %177 in 2 : vector<1x16x4xf32>, vector<1x16x4xf32>, vector<1x16x4xf32>, vector<1x16x4xf32>, vector<1x16x4xf32>, vector<1x16x4xf32>, vector<1x16x4xf32>, vector<1x16x4xf32> -> vector<1x16x32xf32>
    %179 = vector.shape_cast %178 : vector<1x16x32xf32> to vector<16x32xf32>
    %cst_62 = arith.constant dense<0.000000e+00> : vector<16x32xf32>
    %180 = tpu.matmul %179, %41, %cst_62 {dimension_numbers = #tpu.dot_dimension_numbers<[1], [0], [0], [1], [0, 0, 1, 1], [], []>} : vector<16x32xf32>, vector<32x32xf32>, vector<16x32xf32> -> vector<16x32xf32>
    %c0_63 = arith.constant 0 : index
    %c0_64 = arith.constant 0 : index
    %181 = vector.load %arg9[%c0_63, %c0_64] : memref<1x32xf32, #tpu.memory_space<vmem>>, vector<1x32xf32>
    %182 = vector.broadcast %181 : vector<1x32xf32> to vector<16x32xf32>
    %183 = arith.addf %180, %182 : vector<16x32xf32>
    %184 = vector.shape_cast %183 : vector<16x32xf32> to vector<1x16x32xf32>
    %185 = arith.addf %184, %28 : vector<1x16x32xf32>
    %c0_65 = arith.constant 0 : index
    %c0_66 = arith.constant 0 : index
    %186 = vector.load %arg10[%c0_65, %c0_66] : memref<4x32xf32, #tpu.memory_space<vmem>>, vector<4x32xf32>
    %187 = vector.shape_cast %186 : vector<4x32xf32> to vector<1x4x1x32xf32>
    %188 = vector.shape_cast %185 : vector<1x16x32xf32> to vector<1x1x16x32xf32>
    %189 = vector.broadcast %188 : vector<1x1x16x32xf32> to vector<1x4x16x32xf32>
    %190 = vector.broadcast %187 : vector<1x4x1x32xf32> to vector<1x4x16x32xf32>
    %191 = arith.mulf %189, %190 : vector<1x4x16x32xf32>
    %c0_67 = arith.constant 0 : index
    %c0_68 = arith.constant 0 : index
    %192 = vector.load %arg11[%c0_67, %c0_68] : memref<1x32xf32, #tpu.memory_space<vmem>>, vector<1x32xf32>
    %193 = vector.shape_cast %192 : vector<1x32xf32> to vector<1x1x1x32xf32>
    %194 = vector.broadcast %193 : vector<1x1x1x32xf32> to vector<1x4x16x32xf32>
    %195 = arith.addf %191, %194 : vector<1x4x16x32xf32>
    %cst_69 = arith.constant dense<0.000000e+00> : vector<1x4x16xf32>
    %196 = vector.multi_reduction <add>, %195, %cst_69 [3] : vector<1x4x16x32xf32> to vector<1x4x16xf32>
    %197 = vector.shape_cast %196 : vector<1x4x16xf32> to vector<1x4x16x1xf32>
    %cst_70 = arith.constant 3.200000e+01 : f32
    %198 = vector.broadcast %cst_70 : f32 to vector<1x4x16x1xf32>
    %199 = arith.divf %197, %198 : vector<1x4x16x1xf32>
    %200 = vector.broadcast %199 : vector<1x4x16x1xf32> to vector<1x4x16x32xf32>
    %201 = arith.subf %195, %200 : vector<1x4x16x32xf32>
    %202 = arith.mulf %201, %201 : vector<1x4x16x32xf32>
    %cst_71 = arith.constant dense<0.000000e+00> : vector<1x4x16xf32>
    %203 = vector.multi_reduction <add>, %202, %cst_71 [3] : vector<1x4x16x32xf32> to vector<1x4x16xf32>
    %204 = vector.shape_cast %203 : vector<1x4x16xf32> to vector<1x4x16x1xf32>
    %cst_72 = arith.constant 3.200000e+01 : f32
    %205 = vector.broadcast %cst_72 : f32 to vector<1x4x16x1xf32>
    %206 = arith.divf %204, %205 : vector<1x4x16x1xf32>
    %207 = vector.broadcast %199 : vector<1x4x16x1xf32> to vector<1x4x16x32xf32>
    %208 = arith.subf %195, %207 : vector<1x4x16x32xf32>
    %cst_73 = arith.constant 9.99999974E-6 : f32
    %209 = vector.broadcast %cst_73 : f32 to vector<1x4x16x1xf32>
    %210 = arith.addf %206, %209 : vector<1x4x16x1xf32>
    %211 = math.rsqrt %210 : vector<1x4x16x1xf32>
    %212 = vector.broadcast %211 : vector<1x4x16x1xf32> to vector<1x4x16x32xf32>
    %213 = arith.mulf %208, %212 : vector<1x4x16x32xf32>
    %c0_74 = arith.constant 0 : index
    %c0_75 = arith.constant 0 : index
    %214 = vector.load %arg12[%c0_74, %c0_75] : memref<1x32xf32, #tpu.memory_space<vmem>>, vector<1x32xf32>
    %215 = vector.shape_cast %214 : vector<1x32xf32> to vector<1x1x1x32xf32>
    %216 = vector.broadcast %215 : vector<1x1x1x32xf32> to vector<1x4x16x32xf32>
    %217 = arith.mulf %213, %216 : vector<1x4x16x32xf32>
    %c0_76 = arith.constant 0 : index
    %c0_77 = arith.constant 0 : index
    %218 = vector.load %arg13[%c0_76, %c0_77] : memref<1x32xf32, #tpu.memory_space<vmem>>, vector<1x32xf32>
    %219 = vector.shape_cast %218 : vector<1x32xf32> to vector<1x1x1x32xf32>
    %220 = vector.broadcast %219 : vector<1x1x1x32xf32> to vector<1x4x16x32xf32>
    %221 = arith.addf %217, %220 : vector<1x4x16x32xf32>
    %222 = vector.shape_cast %221 : vector<1x4x16x32xf32> to vector<64x32xf32>
    %c0_78 = arith.constant 0 : index
    %c0_79 = arith.constant 0 : index
    %223 = vector.load %arg14[%c0_78, %c0_79] : memref<32x32xf32, #tpu.memory_space<vmem>>, vector<32x32xf32>
    %cst_80 = arith.constant dense<0.000000e+00> : vector<64x32xf32>
    %224 = tpu.matmul %222, %223, %cst_80 {dimension_numbers = #tpu.dot_dimension_numbers<[1], [0], [0], [1], [0, 0, 1, 1], [], []>} : vector<64x32xf32>, vector<32x32xf32>, vector<64x32xf32> -> vector<64x32xf32>
    %c0_81 = arith.constant 0 : index
    %c0_82 = arith.constant 0 : index
    %225 = vector.load %arg15[%c0_81, %c0_82] : memref<1x32xf32, #tpu.memory_space<vmem>>, vector<1x32xf32>
    %226 = vector.broadcast %225 : vector<1x32xf32> to vector<64x32xf32>
    %227 = arith.addf %224, %226 : vector<64x32xf32>
    %228 = vector.shape_cast %227 : vector<64x32xf32> to vector<1x4x16x32xf32>
    %c0_83 = arith.constant 0 : index
    %c0_84 = arith.constant 0 : index
    %c0_85 = arith.constant 0 : index
    %c0_86 = arith.constant 0 : index
    %229 = vector.load %arg16[%c0_83, %c0_84, %c0_85, %c0_86] : memref<1x4x16x32xf32, #tpu.memory_space<vmem>>, vector<1x4x16x32xf32>
    tpu.vector_store %arg16[%c0_83, %c0_84, %c0_85, %c0_86], %228 {strides = array<i32>} : memref<1x4x16x32xf32, #tpu.memory_space<vmem>>, vector<1x4x16x32xf32>,
    return
  }
  func.func @transform_0(%arg0: i32) -> (i32, i32, i32, i32) {
    %c0_i32 = arith.constant 0 : i32
    %c0_i32_0 = arith.constant 0 : i32
    %c0_i32_1 = arith.constant 0 : i32
    %c0_i32_2 = arith.constant 0 : i32
    return %arg0, %c0_i32, %c0_i32_0, %c0_i32_1 : i32, i32, i32, i32
  }
  func.func @transform_1(%arg0: i32) -> (i32, i32) {
    %c0_i32 = arith.constant 0 : i32
    %c0_i32_0 = arith.constant 0 : i32
    %c0_i32_1 = arith.constant 0 : i32
    return %c0_i32, %c0_i32_0 : i32, i32
  }
  func.func @transform_2(%arg0: i32) -> (i32, i32) {
    %c0_i32 = arith.constant 0 : i32
    %c0_i32_0 = arith.constant 0 : i32
    %c0_i32_1 = arith.constant 0 : i32
    return %c0_i32, %c0_i32_0 : i32, i32
  }
  func.func @transform_3(%arg0: i32) -> (i32, i32) {
    %c0_i32 = arith.constant 0 : i32
    %c0_i32_0 = arith.constant 0 : i32
    %c0_i32_1 = arith.constant 0 : i32
    return %c0_i32, %c0_i32_0 : i32, i32
  }
  func.func @transform_4(%arg0: i32) -> (i32, i32) {
    %c0_i32 = arith.constant 0 : i32
    %c0_i32_0 = arith.constant 0 : i32
    %c0_i32_1 = arith.constant 0 : i32
    return %c0_i32, %c0_i32_0 : i32, i32
  }
  func.func @transform_5(%arg0: i32) -> (i32, i32) {
    %c0_i32 = arith.constant 0 : i32
    %c0_i32_0 = arith.constant 0 : i32
    %c0_i32_1 = arith.constant 0 : i32
    return %c0_i32, %c0_i32_0 : i32, i32
  }
  func.func @transform_6(%arg0: i32) -> (i32, i32) {
    %c0_i32 = arith.constant 0 : i32
    %c0_i32_0 = arith.constant 0 : i32
    %c0_i32_1 = arith.constant 0 : i32
    return %c0_i32, %c0_i32_0 : i32, i32
  }
  func.func @transform_7(%arg0: i32) -> (i32, i32) {
    %c0_i32 = arith.constant 0 : i32
    %c0_i32_0 = arith.constant 0 : i32
    %c0_i32_1 = arith.constant 0 : i32
    return %c0_i32, %c0_i32_0 : i32, i32
  }
  func.func @transform_8(%arg0: i32) -> (i32, i32) {
    %c0_i32 = arith.constant 0 : i32
    %c0_i32_0 = arith.constant 0 : i32
    %c0_i32_1 = arith.constant 0 : i32
    return %c0_i32, %c0_i32_0 : i32, i32
  }
  func.func @transform_9(%arg0: i32) -> (i32, i32) {
    %c0_i32 = arith.constant 0 : i32
    %c0_i32_0 = arith.constant 0 : i32
    %c0_i32_1 = arith.constant 0 : i32
    return %c0_i32, %c0_i32_0 : i32, i32
  }
  func.func @transform_10(%arg0: i32) -> (i32, i32) {
    %c0_i32 = arith.constant 0 : i32
    %c0_i32_0 = arith.constant 0 : i32
    %c0_i32_1 = arith.constant 0 : i32
    return %c0_i32, %c0_i32_0 : i32, i32
  }
  func.func @transform_11(%arg0: i32) -> (i32, i32) {
    %c0_i32 = arith.constant 0 : i32
    %c0_i32_0 = arith.constant 0 : i32
    %c0_i32_1 = arith.constant 0 : i32
    return %c0_i32, %c0_i32_0 : i32, i32
  }
  func.func @transform_12(%arg0: i32) -> (i32, i32) {
    %c0_i32 = arith.constant 0 : i32
    %c0_i32_0 = arith.constant 0 : i32
    %c0_i32_1 = arith.constant 0 : i32
    return %c0_i32, %c0_i32_0 : i32, i32
  }
  func.func @transform_13(%arg0: i32) -> (i32, i32) {
    %c0_i32 = arith.constant 0 : i32
    %c0_i32_0 = arith.constant 0 : i32
    %c0_i32_1 = arith.constant 0 : i32
    return %c0_i32, %c0_i32_0 : i32, i32
  }
  func.func @transform_14(%arg0: i32) -> (i32, i32) {
    %c0_i32 = arith.constant 0 : i32
    %c0_i32_0 = arith.constant 0 : i32
    %c0_i32_1 = arith.constant 0 : i32
    return %c0_i32, %c0_i32_0 : i32, i32
  }
  func.func @transform_15(%arg0: i32) -> (i32, i32, i32, i32) {
    %c0_i32 = arith.constant 0 : i32
    %c0_i32_0 = arith.constant 0 : i32
    %c0_i32_1 = arith.constant 0 : i32
    %c0_i32_2 = arith.constant 0 : i32
    return %arg0, %c0_i32, %c0_i32_0, %c0_i32_1 : i32, i32, i32, i32
  }
}

</mosaic_0001>

<llo_original>
// kernel: tpu_custom_call.1
$region0: #{tpu_custom_call.1}
  #allocation0 [shape = 'u32[]', space=smem, size = 0x4, offset = 0x4, fixed_abs, tag = 'smem constant byte address 0x4 - core index']
  #allocation1 [shape = 'u32[144,128]{1,0:T(1,128)}', space=vmem, size = 0x12000, scoped, tag = 'internal scratch']
  #allocation2 [shape = 'f32[1,1]{1,0:T(1,128)S(1)}', space=vmem, size = 0x200, scoped, tag = 'scoped memory for tpu_custom_call.1']
  %s0 = inlined_call_operand.hbm [shape: f32[2,4,16,32], index: 0, kind: input, shape index: {}]
  %s1 = inlined_call_operand.vmem [shape: f32[32,16], index: 1, kind: input, shape index: {}]
  %s2 = inlined_call_operand.hbm [shape: f32[1,16], index: 2, kind: input, shape index: {}]
  %s3 = inlined_call_operand.hbm [shape: f32[1,16], index: 3, kind: input, shape index: {}]
  %s4 = inlined_call_operand.<no memory space> [shape: f32[1,1], index: 4, kind: input, shape index: {}]
  %s5 = inlined_call_operand.vmem [shape: f32[32,96], index: 5, kind: input, shape index: {}]
  %s6 = inlined_call_operand.hbm [shape: f32[1,96], index: 6, kind: input, shape index: {}]
  %s7 = inlined_call_operand.hbm [shape: f32[32,32], index: 7, kind: input, shape index: {}]
  %s8 = inlined_call_operand.hbm [shape: f32[1,32], index: 8, kind: input, shape index: {}]
  %s9 = inlined_call_operand.hbm [shape: f32[4,32], index: 9, kind: input, shape index: {}]
  %s10 = inlined_call_operand.vmem [shape: f32[1,32], index: 10, kind: input, shape index: {}]
  %s11 = inlined_call_operand.vmem [shape: f32[1,32], index: 11, kind: input, shape index: {}]
  %s12 = inlined_call_operand.vmem [shape: f32[1,32], index: 12, kind: input, shape index: {}]
  %s13 = inlined_call_operand.vmem [shape: f32[32,32], index: 13, kind: input, shape index: {}]
  %s14 = inlined_call_operand.vmem [shape: f32[1,32], index: 14, kind: input, shape index: {}]
  %s15 = inlined_call_operand.hbm [shape: f32[2,4,16,32], index: 15, kind: output, shape index: {}]
  %s16 = sld [smem:[#allocation0]]
  $region121: #{tpu_custom_call.1} parent=0
    _
  %s18 = ssub.s32 1, %s16
  %s19 = scalar_select 0, %s18, %s16
  %v20 = vstv %s4
  %21 = vst [vmem:[#allocation2] sm:$0x1] %v20
  $region1: #{tpu_custom_call.1} parent=0
    #allocation3 [shape = 'u8[65536]{0}', space=vmem, size = 0x10000, scoped, tag = 'input window, operand 0']
    #allocation4 [shape = 's32[2]{0}', space=sflag, size = 0x8, scoped, tag = 'scoped memory for tpu_custom_call.1']
    #allocation5 [shape = 's32[2]{0}', space=sflag, size = 0x8, scoped, tag = 'scoped memory for tpu_custom_call.1']
    #allocation6 [shape = 'u8[512]{0}', space=vmem, size = 0x400, scoped, tag = 'input window, operand 2, single buffered']
    #allocation7 [shape = 's32[1]{0}', space=sflag, size = 0x4, scoped, tag = 'scoped memory for tpu_custom_call.1']
    #allocation8 [shape = 'u8[512]{0}', space=vmem, size = 0x400, scoped, tag = 'input window, operand 3, single buffered']
    #allocation9 [shape = 'u8[512]{0}', space=vmem, size = 0x400, scoped, tag = 'input window, operand 6, single buffered']
    #allocation10 [shape = 's32[1]{0}', space=sflag, size = 0x4, scoped, tag = 'scoped memory for tpu_custom_call.1']
    #allocation11 [shape = 'u8[16384]{0}', space=vmem, size = 0x4000, scoped, tag = 'input window, operand 7, single buffered']
    #allocation12 [shape = 'u8[512]{0}', space=vmem, size = 0x400, scoped, tag = 'input window, operand 8, single buffered']
    #allocation13 [shape = 's32[1]{0}', space=sflag, size = 0x4, scoped, tag = 'scoped memory for tpu_custom_call.1']
    #allocation14 [shape = 'u8[2048]{0}', space=vmem, size = 0x800, scoped, tag = 'input window, operand 9, single buffered']
    #allocation15 [shape = 'u8[65536]{0}', space=vmem, size = 0x10000, scoped, tag = 'output window, operand 0']
    %22 = vsyncpa [#allocation4], 0
    %s23 = scalar_lea.sflag [#allocation4], 1
    %24 = vsyncpa %s23, 0
    %25 = vsyncpa [#allocation7], 0
    %26 = vsyncpa [#allocation10], 0
    %27 = vsyncpa [#allocation13], 0
    %28 = vsyncpa [#allocation5], 0
    %s29 = scalar_lea.sflag [#allocation5], 1
    %30 = vsyncpa %s29, 0
    loop: start=0, step=1, limit=4
    $region2: #{tpu_custom_call.1} parent=1 // loop_pre_header
      _
    $region3: #{tpu_custom_call.1} parent=1 // loop_header
      %s32 = sphi 0, %s36
      %p33 = scmp.ge.s32.totalorder %s32, 4
      %s42 = sphi 0, %s44
      %s45 = sphi 0, %s42
      %s46 = sphi 0, %s45
      %s62 = sphi 0, %s46
      %s66 = sphi 0, %s66
      %s68 = sphi 0, %s66
      %s69 = sphi 0, %s68
      %s83 = sphi 0, %s69
      %s87 = sphi 0, %s87
      %s89 = sphi 0, %s87
      %s90 = sphi 0, %s89
      %s104 = sphi 0, %s90
      %s108 = sphi 0, %s108
      %s110 = sphi 0, %s108
      %s111 = sphi 0, %s110
      %s125 = sphi 0, %s111
      %s129 = sphi 0, %s129
      %s131 = sphi 0, %s129
      %s132 = sphi 0, %s131
      %s146 = sphi 0, %s132
      %s150 = sphi 0, %s150
      %s152 = sphi 0, %s150
      %s153 = sphi 0, %s152
      %s167 = sphi 0, %s153
      %s171 = sphi 0, %s171
      %s173 = sphi 0, %s171
      %s174 = sphi 0, %s173
      %s188 = sphi 0, %s174
      %s192 = sphi 0, %s192
      %s194 = sphi 0, %s192
      %s195 = sphi 0, %s194
      %s209 = sphi 0, %s195
      %s213 = sphi 0, %s213
      %s215 = sphi 0, %s213
      %s216 = sphi 0, %s215
      %s230 = sphi 0, %s216
      %s234 = sphi 0, %s234
      %s236 = sphi 0, %s234
      %s237 = sphi 0, %s236
      %s251 = sphi 0, %s237
      %s255 = sphi 0, %s255
      %s257 = sphi 0, %s255
      %s258 = sphi 0, %s257
      %s272 = sphi 0, %s258
      %s276 = sphi 0, %s276
      %s278 = sphi 0, %s276
      %s279 = sphi 0, %s278
      %s293 = sphi 0, %s279
      %s297 = sphi 0, %s297
      %s299 = sphi 0, %s297
      %s300 = sphi 0, %s299
      %s314 = sphi 0, %s300
      %s318 = sphi 0, %s318
      %s320 = sphi 0, %s318
      %s321 = sphi 0, %s320
      %s335 = sphi 0, %s321
      %s339 = sphi 0, %s339
      %s341 = sphi 0, %s339
      %s342 = sphi 0, %s341
      %s356 = sphi 0, %s342
      %s362 = sphi 0, %s364
      %s365 = sphi 0, %s362
      %s366 = sphi 0, %s365
      %s382 = sphi 0, %s366
    $region4: #{tpu_custom_call.1} parent=1 // loop_header_branch
      %35 = sbr.rel (%p33) target = $region8
    $region5: #{tpu_custom_call.1} parent=1 // loop_body
      %s37 = ssub.s32 %s32, 1
      %s38 = ssub.s32 %s32, 2
      %s39 = sadd.s32 %s32, 1
      %s40 = ssub.s32 %s32, %s39
      %p41 = scmp.eq.s32.totalorder %s40, 0
      %s43 = sadd.s32 %s42, 1
      %s44 = scalar_select %p41, %s42, %s43
      %p47 = pneg %p41
      %p48 = scmp.eq.s32.totalorder %s32, 1
      %p49 = por %p47, %p48
      %p50 = scmp.ne.s32.totalorder %s42, %s45
      %p51 = scmp.eq.s32.totalorder %s32, 0
      %p52 = por %p50, %p51
      %p53 = scmp.ne.s32.totalorder %s42, %s45
      %p54 = scmp.eq.s32.totalorder %s37, 1
      %p55 = por %p53, %p54
      %p56 = scmp.ne.s32.totalorder %s45, %s46
      %p57 = scmp.eq.s32.totalorder %s37, 0
      %p58 = por %p56, %p57
      %p59 = scmp.ne.s32.totalorder %s45, %s46
      %p60 = scmp.eq.s32.totalorder %s38, 1
      %p61 = por %p59, %p60
      %p63 = scmp.ne.s32.totalorder %s46, %s62
      %p64 = scmp.eq.s32.totalorder %s38, 0
      %p65 = por %p63, %p64
      %s67 = sadd.s32 %s66, 1
      %p70 = scmp.eq.s32.totalorder %s32, 1
      %p71 = scmp.ne.s32.totalorder %s66, %s68
      %p72 = scmp.eq.s32.totalorder %s32, 0
      %p73 = por %p71, %p72
      %p74 = scmp.ne.s32.totalorder %s66, %s68
      %p75 = scmp.eq.s32.totalorder %s37, 1
      %p76 = por %p74, %p75
      %p77 = scmp.ne.s32.totalorder %s68, %s69
      %p78 = scmp.eq.s32.totalorder %s37, 0
      %p79 = por %p77, %p78
      %p80 = scmp.ne.s32.totalorder %s68, %s69
      %p81 = scmp.eq.s32.totalorder %s38, 1
      %p82 = por %p80, %p81
      %p84 = scmp.ne.s32.totalorder %s69, %s83
      %p85 = scmp.eq.s32.totalorder %s38, 0
      %p86 = por %p84, %p85
      %s88 = sadd.s32 %s87, 1
      %p91 = scmp.eq.s32.totalorder %s32, 1
      %p92 = scmp.ne.s32.totalorder %s87, %s89
      %p93 = scmp.eq.s32.totalorder %s32, 0
      %p94 = por %p92, %p93
      %p95 = scmp.ne.s32.totalorder %s87, %s89
      %p96 = scmp.eq.s32.totalorder %s37, 1
      %p97 = por %p95, %p96
      %p98 = scmp.ne.s32.totalorder %s89, %s90
      %p99 = scmp.eq.s32.totalorder %s37, 0
      %p100 = por %p98, %p99
      %p101 = scmp.ne.s32.totalorder %s89, %s90
      %p102 = scmp.eq.s32.totalorder %s38, 1
      %p103 = por %p101, %p102
      %p105 = scmp.ne.s32.totalorder %s90, %s104
      %p106 = scmp.eq.s32.totalorder %s38, 0
      %p107 = por %p105, %p106
      %s109 = sadd.s32 %s108, 1
      %p112 = scmp.eq.s32.totalorder %s32, 1
      %p113 = scmp.ne.s32.totalorder %s108, %s110
      %p114 = scmp.eq.s32.totalorder %s32, 0
      %p115 = por %p113, %p114
      %p116 = scmp.ne.s32.totalorder %s108, %s110
      %p117 = scmp.eq.s32.totalorder %s37, 1
      %p118 = por %p116, %p117
      %p119 = scmp.ne.s32.totalorder %s110, %s111
      %p120 = scmp.eq.s32.totalorder %s37, 0
      %p121 = por %p119, %p120
      %p122 = scmp.ne.s32.totalorder %s110, %s111
      %p123 = scmp.eq.s32.totalorder %s38, 1
      %p124 = por %p122, %p123
      %p126 = scmp.ne.s32.totalorder %s111, %s125
      %p127 = scmp.eq.s32.totalorder %s38, 0
      %p128 = por %p126, %p127
      %s130 = sadd.s32 %s129, 1
      %p133 = scmp.eq.s32.totalorder %s32, 1
      %p134 = scmp.ne.s32.totalorder %s129, %s131
      %p135 = scmp.eq.s32.totalorder %s32, 0
      %p136 = por %p134, %p135
      %p137 = scmp.ne.s32.totalorder %s129, %s131
      %p138 = scmp.eq.s32.totalorder %s37, 1
      %p139 = por %p137, %p138
      %p140 = scmp.ne.s32.totalorder %s131, %s132
      %p141 = scmp.eq.s32.totalorder %s37, 0
      %p142 = por %p140, %p141
      %p143 = scmp.ne.s32.totalorder %s131, %s132
      %p144 = scmp.eq.s32.totalorder %s38, 1
      %p145 = por %p143, %p144
      %p147 = scmp.ne.s32.totalorder %s132, %s146
      %p148 = scmp.eq.s32.totalorder %s38, 0
      %p149 = por %p147, %p148
      %s151 = sadd.s32 %s150, 1
      %p154 = scmp.eq.s32.totalorder %s32, 1
      %p155 = scmp.ne.s32.totalorder %s150, %s152
      %p156 = scmp.eq.s32.totalorder %s32, 0
      %p157 = por %p155, %p156
      %p158 = scmp.ne.s32.totalorder %s150, %s152
      %p159 = scmp.eq.s32.totalorder %s37, 1
      %p160 = por %p158, %p159
      %p161 = scmp.ne.s32.totalorder %s152, %s153
      %p162 = scmp.eq.s32.totalorder %s37, 0
      %p163 = por %p161, %p162
      %p164 = scmp.ne.s32.totalorder %s152, %s153
      %p165 = scmp.eq.s32.totalorder %s38, 1
      %p166 = por %p164, %p165
      %p168 = scmp.ne.s32.totalorder %s153, %s167
      %p169 = scmp.eq.s32.totalorder %s38, 0
      %p170 = por %p168, %p169
      %s172 = sadd.s32 %s171, 1
      %p175 = scmp.eq.s32.totalorder %s32, 1
      %p176 = scmp.ne.s32.totalorder %s171, %s173
      %p177 = scmp.eq.s32.totalorder %s32, 0
      %p178 = por %p176, %p177
      %p179 = scmp.ne.s32.totalorder %s171, %s173
      %p180 = scmp.eq.s32.totalorder %s37, 1
      %p181 = por %p179, %p180
      %p182 = scmp.ne.s32.totalorder %s173, %s174
      %p183 = scmp.eq.s32.totalorder %s37, 0
      %p184 = por %p182, %p183
      %p185 = scmp.ne.s32.totalorder %s173, %s174
      %p186 = scmp.eq.s32.totalorder %s38, 1
      %p187 = por %p185, %p186
      %p189 = scmp.ne.s32.totalorder %s174, %s188
      %p190 = scmp.eq.s32.totalorder %s38, 0
      %p191 = por %p189, %p190
      %s193 = sadd.s32 %s192, 1
      %p196 = scmp.eq.s32.totalorder %s32, 1
      %p197 = scmp.ne.s32.totalorder %s192, %s194
      %p198 = scmp.eq.s32.totalorder %s32, 0
      %p199 = por %p197, %p198
      %p200 = scmp.ne.s32.totalorder %s192, %s194
      %p201 = scmp.eq.s32.totalorder %s37, 1
      %p202 = por %p200, %p201
      %p203 = scmp.ne.s32.totalorder %s194, %s195
      %p204 = scmp.eq.s32.totalorder %s37, 0
      %p205 = por %p203, %p204
      %p206 = scmp.ne.s32.totalorder %s194, %s195
      %p207 = scmp.eq.s32.totalorder %s38, 1
      %p208 = por %p206, %p207
      %p210 = scmp.ne.s32.totalorder %s195, %s209
      %p211 = scmp.eq.s32.totalorder %s38, 0
      %p212 = por %p210, %p211
      %s214 = sadd.s32 %s213, 1
      %p217 = scmp.eq.s32.totalorder %s32, 1
      %p218 = scmp.ne.s32.totalorder %s213, %s215
      %p219 = scmp.eq.s32.totalorder %s32, 0
      %p220 = por %p218, %p219
      %p221 = scmp.ne.s32.totalorder %s213, %s215
      %p222 = scmp.eq.s32.totalorder %s37, 1
      %p223 = por %p221, %p222
      %p224 = scmp.ne.s32.totalorder %s215, %s216
      %p225 = scmp.eq.s32.totalorder %s37, 0
      %p226 = por %p224, %p225
      %p227 = scmp.ne.s32.totalorder %s215, %s216
      %p228 = scmp.eq.s32.totalorder %s38, 1
      %p229 = por %p227, %p228
      %p231 = scmp.ne.s32.totalorder %s216, %s230
      %p232 = scmp.eq.s32.totalorder %s38, 0
      %p233 = por %p231, %p232
      %s235 = sadd.s32 %s234, 1
      %p238 = scmp.eq.s32.totalorder %s32, 1
      %p239 = scmp.ne.s32.totalorder %s234, %s236
      %p240 = scmp.eq.s32.totalorder %s32, 0
      %p241 = por %p239, %p240
      %p242 = scmp.ne.s32.totalorder %s234, %s236
      %p243 = scmp.eq.s32.totalorder %s37, 1
      %p244 = por %p242, %p243
      %p245 = scmp.ne.s32.totalorder %s236, %s237
      %p246 = scmp.eq.s32.totalorder %s37, 0
      %p247 = por %p245, %p246
      %p248 = scmp.ne.s32.totalorder %s236, %s237
      %p249 = scmp.eq.s32.totalorder %s38, 1
      %p250 = por %p248, %p249
      %p252 = scmp.ne.s32.totalorder %s237, %s251
      %p253 = scmp.eq.s32.totalorder %s38, 0
      %p254 = por %p252, %p253
      %s256 = sadd.s32 %s255, 1
      %p259 = scmp.eq.s32.totalorder %s32, 1
      %p260 = scmp.ne.s32.totalorder %s255, %s257
      %p261 = scmp.eq.s32.totalorder %s32, 0
      %p262 = por %p260, %p261
      %p263 = scmp.ne.s32.totalorder %s255, %s257
      %p264 = scmp.eq.s32.totalorder %s37, 1
      %p265 = por %p263, %p264
      %p266 = scmp.ne.s32.totalorder %s257, %s258
      %p267 = scmp.eq.s32.totalorder %s37, 0
      %p268 = por %p266, %p267
      %p269 = scmp.ne.s32.totalorder %s257, %s258
      %p270 = scmp.eq.s32.totalorder %s38, 1
      %p271 = por %p269, %p270
      %p273 = scmp.ne.s32.totalorder %s258, %s272
      %p274 = scmp.eq.s32.totalorder %s38, 0
      %p275 = por %p273, %p274
      %s277 = sadd.s32 %s276, 1
      %p280 = scmp.eq.s32.totalorder %s32, 1
      %p281 = scmp.ne.s32.totalorder %s276, %s278
      %p282 = scmp.eq.s32.totalorder %s32, 0
      %p283 = por %p281, %p282
      %p284 = scmp.ne.s32.totalorder %s276, %s278
      %p285 = scmp.eq.s32.totalorder %s37, 1
      %p286 = por %p284, %p285
      %p287 = scmp.ne.s32.totalorder %s278, %s279
      %p288 = scmp.eq.s32.totalorder %s37, 0
      %p289 = por %p287, %p288
      %p290 = scmp.ne.s32.totalorder %s278, %s279
      %p291 = scmp.eq.s32.totalorder %s38, 1
      %p292 = por %p290, %p291
      %p294 = scmp.ne.s32.totalorder %s279, %s293
      %p295 = scmp.eq.s32.totalorder %s38, 0
      %p296 = por %p294, %p295
      %s298 = sadd.s32 %s297, 1
      %p301 = scmp.eq.s32.totalorder %s32, 1
      %p302 = scmp.ne.s32.totalorder %s297, %s299
      %p303 = scmp.eq.s32.totalorder %s32, 0
      %p304 = por %p302, %p303
      %p305 = scmp.ne.s32.totalorder %s297, %s299
      %p306 = scmp.eq.s32.totalorder %s37, 1
      %p307 = por %p305, %p306
      %p308 = scmp.ne.s32.totalorder %s299, %s300
      %p309 = scmp.eq.s32.totalorder %s37, 0
      %p310 = por %p308, %p309
      %p311 = scmp.ne.s32.totalorder %s299, %s300
      %p312 = scmp.eq.s32.totalorder %s38, 1
      %p313 = por %p311, %p312
      %p315 = scmp.ne.s32.totalorder %s300, %s314
      %p316 = scmp.eq.s32.totalorder %s38, 0
      %p317 = por %p315, %p316
      %s319 = sadd.s32 %s318, 1
      %p322 = scmp.eq.s32.totalorder %s32, 1
      %p323 = scmp.ne.s32.totalorder %s318, %s320
      %p324 = scmp.eq.s32.totalorder %s32, 0
      %p325 = por %p323, %p324
      %p326 = scmp.ne.s32.totalorder %s318, %s320
      %p327 = scmp.eq.s32.totalorder %s37, 1
      %p328 = por %p326, %p327
      %p329 = scmp.ne.s32.totalorder %s320, %s321
      %p330 = scmp.eq.s32.totalorder %s37, 0
      %p331 = por %p329, %p330
      %p332 = scmp.ne.s32.totalorder %s320, %s321
      %p333 = scmp.eq.s32.totalorder %s38, 1
      %p334 = por %p332, %p333
      %p336 = scmp.ne.s32.totalorder %s321, %s335
      %p337 = scmp.eq.s32.totalorder %s38, 0
      %p338 = por %p336, %p337
      %s340 = sadd.s32 %s339, 1
      %p343 = scmp.eq.s32.totalorder %s32, 1
      %p344 = scmp.ne.s32.totalorder %s339, %s341
      %p345 = scmp.eq.s32.totalorder %s32, 0
      %p346 = por %p344, %p345
      %p347 = scmp.ne.s32.totalorder %s339, %s341
      %p348 = scmp.eq.s32.totalorder %s37, 1
      %p349 = por %p347, %p348
      %p350 = scmp.ne.s32.totalorder %s341, %s342
      %p351 = scmp.eq.s32.totalorder %s37, 0
      %p352 = por %p350, %p351
      %p353 = scmp.ne.s32.totalorder %s341, %s342
      %p354 = scmp.eq.s32.totalorder %s38, 1
      %p355 = por %p353, %p354
      %p357 = scmp.ne.s32.totalorder %s342, %s356
      %p358 = scmp.eq.s32.totalorder %s38, 0
      %p359 = por %p357, %p358
      %s360 = ssub.s32 %s32, %s39
      %p361 = scmp.eq.s32.totalorder %s360, 0
      %s363 = sadd.s32 %s362, 1
      %s364 = scalar_select %p361, %s362, %s363
      %p367 = pneg %p361
      %p368 = scmp.eq.s32.totalorder %s32, 1
      %p369 = por %p367, %p368
      %p370 = scmp.ne.s32.totalorder %s362, %s365
      %p371 = scmp.eq.s32.totalorder %s32, 0
      %p372 = por %p370, %p371
      %p373 = scmp.ne.s32.totalorder %s362, %s365
      %p374 = scmp.eq.s32.totalorder %s37, 1
      %p375 = por %p373, %p374
      %p376 = scmp.ne.s32.totalorder %s365, %s366
      %p377 = scmp.eq.s32.totalorder %s37, 0
      %p378 = por %p376, %p377
      %p379 = scmp.ne.s32.totalorder %s365, %s366
      %p380 = scmp.eq.s32.totalorder %s38, 1
      %p381 = por %p379, %p380
      %p383 = scmp.ne.s32.totalorder %s366, %s382
      %p384 = scmp.eq.s32.totalorder %s38, 0
      %p385 = por %p383, %p384
      %p386 = scmp.le.s32.totalorder 1, %s32
      %p387 = scmp.lt.s32.totalorder %s32, 3
      %p388 = pnand %p386, %p387
      %p389 = pneg %p388
      // Predicated region
      $region9: #{tpu_custom_call.1} parent=5 // pred_check
        _
      $region10: #{tpu_custom_call.1} parent=5 // pred_check_branch
        %391 = sbr.rel (%p388) target = $region12
      $region11: #{tpu_custom_call.1} parent=5 // pred_region
        %s392 = ssub.s32 %s32, 1
        // Predicated region
        $region13: #{tpu_custom_call.1} parent=11 // pred_check
          %p393 = pneg %p79
        $region14: #{tpu_custom_call.1} parent=11 // pred_check_branch
          %395 = sbr.rel (%p393) target = $region16
        $region15: #{tpu_custom_call.1} parent=11 // pred_region
          _
        $region16: #{tpu_custom_call.1} parent=11 // pred_fallthru
          _
        // Predicated region
        $region17: #{tpu_custom_call.1} parent=11 // pred_check
          %p396 = pneg %p100
        $region18: #{tpu_custom_call.1} parent=11 // pred_check_branch
          %398 = sbr.rel (%p396) target = $region20
        $region19: #{tpu_custom_call.1} parent=11 // pred_region
          %s400 = ssub.s32 16, 16
          %401 = vsyncadd [#allocation7], %s400
          %s403 = sshll.u32 [#allocation6], 4
          %s404 = int_to_ptr.vmem [resolvable:$true] %s403
          %406 = dma.hbm_to_vmem [thread:$0]  %s2, 16, %s404, [#allocation7]
        $region20: #{tpu_custom_call.1} parent=11 // pred_fallthru
          _
        // Predicated region
        $region21: #{tpu_custom_call.1} parent=11 // pred_check
          %p407 = pneg %p121
        $region22: #{tpu_custom_call.1} parent=11 // pred_check_branch
          %409 = sbr.rel (%p407) target = $region24
        $region23: #{tpu_custom_call.1} parent=11 // pred_region
          %s411 = ssub.s32 16, 16
          %412 = vsyncadd [#allocation7], %s411
          %s414 = sshll.u32 [#allocation8], 4
          %s415 = int_to_ptr.vmem [resolvable:$true] %s414
          %417 = dma.hbm_to_vmem [thread:$0]  %s3, 16, %s415, [#allocation7]
        $region24: #{tpu_custom_call.1} parent=11 // pred_fallthru
          _
        // Predicated region
        $region25: #{tpu_custom_call.1} parent=11 // pred_check
          %p418 = pneg %p142
        $region26: #{tpu_custom_call.1} parent=11 // pred_check_branch
          %420 = sbr.rel (%p418) target = $region28
        $region27: #{tpu_custom_call.1} parent=11 // pred_region
          _
        $region28: #{tpu_custom_call.1} parent=11 // pred_fallthru
          _
        // Predicated region
        $region29: #{tpu_custom_call.1} parent=11 // pred_check
          %p421 = pneg %p163
        $region30: #{tpu_custom_call.1} parent=11 // pred_check_branch
          %423 = sbr.rel (%p421) target = $region32
        $region31: #{tpu_custom_call.1} parent=11 // pred_region
          _
        $region32: #{tpu_custom_call.1} parent=11 // pred_fallthru
          _
        // Predicated region
        $region33: #{tpu_custom_call.1} parent=11 // pred_check
          %p424 = pneg %p184
        $region34: #{tpu_custom_call.1} parent=11 // pred_check_branch
          %426 = sbr.rel (%p424) target = $region36
        $region35: #{tpu_custom_call.1} parent=11 // pred_region
          %s428 = ssub.s32 16, 16
          %429 = vsyncadd [#allocation10], %s428
          %s431 = sshll.u32 [#allocation9], 4
          %s432 = int_to_ptr.vmem [resolvable:$true] %s431
          %434 = dma.hbm_to_vmem [thread:$0]  %s6, 16, %s432, [#allocation10]
        $region36: #{tpu_custom_call.1} parent=11 // pred_fallthru
          _
        // Predicated region
        $region37: #{tpu_custom_call.1} parent=11 // pred_check
          %p435 = pneg %p205
        $region38: #{tpu_custom_call.1} parent=11 // pred_check_branch
          %437 = sbr.rel (%p435) target = $region40
        $region39: #{tpu_custom_call.1} parent=11 // pred_region
          %s439 = ssub.s32 512, 512
          %440 = vsyncadd [#allocation10], %s439
          %s441 = sshll.u32 [#allocation11], 4
          %s442 = int_to_ptr.vmem [resolvable:$true] %s441
          %447 = dma.hbm_to_vmem [thread:$0]  %s7, 512, %s442, [#allocation10], 128, 128, 8
        $region40: #{tpu_custom_call.1} parent=11 // pred_fallthru
          _
        // Predicated region
        $region41: #{tpu_custom_call.1} parent=11 // pred_check
          %p448 = pneg %p226
        $region42: #{tpu_custom_call.1} parent=11 // pred_check_branch
          %450 = sbr.rel (%p448) target = $region44
        $region43: #{tpu_custom_call.1} parent=11 // pred_region
          %s452 = ssub.s32 16, 16
          %453 = vsyncadd [#allocation13], %s452
          %s455 = sshll.u32 [#allocation12], 4
          %s456 = int_to_ptr.vmem [resolvable:$true] %s455
          %458 = dma.hbm_to_vmem [thread:$0]  %s8, 16, %s456, [#allocation13]
        $region44: #{tpu_custom_call.1} parent=11 // pred_fallthru
          _
        // Predicated region
        $region45: #{tpu_custom_call.1} parent=11 // pred_check
          %p459 = pneg %p247
        $region46: #{tpu_custom_call.1} parent=11 // pred_check_branch
          %461 = sbr.rel (%p459) target = $region48
        $region47: #{tpu_custom_call.1} parent=11 // pred_region
          %s463 = ssub.s32 64, 64
          %464 = vsyncadd [#allocation13], %s463
          %s466 = sshll.u32 [#allocation14], 4
          %s467 = int_to_ptr.vmem [resolvable:$true] %s466
          %469 = dma.hbm_to_vmem [thread:$0]  %s9, 64, %s467, [#allocation13]
        $region48: #{tpu_custom_call.1} parent=11 // pred_fallthru
          _
        // Predicated region
        $region49: #{tpu_custom_call.1} parent=11 // pred_check
          %p470 = pneg %p268
        $region50: #{tpu_custom_call.1} parent=11 // pred_check_branch
          %472 = sbr.rel (%p470) target = $region52
        $region51: #{tpu_custom_call.1} parent=11 // pred_region
          _
        $region52: #{tpu_custom_call.1} parent=11 // pred_fallthru
          _
        // Predicated region
        $region53: #{tpu_custom_call.1} parent=11 // pred_check
          %p473 = pneg %p289
        $region54: #{tpu_custom_call.1} parent=11 // pred_check_branch
          %475 = sbr.rel (%p473) target = $region56
        $region55: #{tpu_custom_call.1} parent=11 // pred_region
          _
        $region56: #{tpu_custom_call.1} parent=11 // pred_fallthru
          _
        // Predicated region
        $region57: #{tpu_custom_call.1} parent=11 // pred_check
          %p476 = pneg %p310
        $region58: #{tpu_custom_call.1} parent=11 // pred_check_branch
          %478 = sbr.rel (%p476) target = $region60
        $region59: #{tpu_custom_call.1} parent=11 // pred_region
          _
        $region60: #{tpu_custom_call.1} parent=11 // pred_fallthru
          _
        // Predicated region
        $region61: #{tpu_custom_call.1} parent=11 // pred_check
          %p479 = pneg %p331
        $region62: #{tpu_custom_call.1} parent=11 // pred_check_branch
          %481 = sbr.rel (%p479) target = $region64
        $region63: #{tpu_custom_call.1} parent=11 // pred_region
          _
        $region64: #{tpu_custom_call.1} parent=11 // pred_fallthru
          _
        // Predicated region
        $region65: #{tpu_custom_call.1} parent=11 // pred_check
          %p482 = pneg %p352
        $region66: #{tpu_custom_call.1} parent=11 // pred_check_branch
          %484 = sbr.rel (%p482) target = $region68
        $region67: #{tpu_custom_call.1} parent=11 // pred_region
          _
        $region68: #{tpu_custom_call.1} parent=11 // pred_fallthru
          _
      $region12: #{tpu_custom_call.1} parent=5 // pred_fallthru
        _
      %p485 = scmp.lt.s32.totalorder %s32, 2
      // Predicated region
      $region69: #{tpu_custom_call.1} parent=5 // pred_check
        %p486 = pneg %p485
      $region70: #{tpu_custom_call.1} parent=5 // pred_check_branch
        %488 = sbr.rel (%p486) target = $region72
      $region71: #{tpu_custom_call.1} parent=5 // pred_region
        // Predicated region
        $region73: #{tpu_custom_call.1} parent=71 // pred_check
          %p489 = pneg %p52
        $region74: #{tpu_custom_call.1} parent=71 // pred_check_branch
          %491 = sbr.rel (%p489) target = $region76
        $region75: #{tpu_custom_call.1} parent=71 // pred_region
          %s492 = sand.u32 %s42, 1
          %s493 = scalar_lea.sflag [#allocation4], %s492
          %s494 = sand.u32 %s42, 1
          %s495 = smul.addr %s494, 64
          %s496 = scalar_lea.vmem [#allocation3], %s495
          %s498 = ssub.s32 1024, 1024
          %499 = vsyncadd %s493, %s498
          %s500 = smul.addr %s32, 8
          %s501 = smul.addr %s500, 128
          %s502 = scalar_lea.hbm %s0, %s501
          %s503 = sshll.u32 %s496, 4
          %s504 = int_to_ptr.vmem [resolvable:$true] %s503
          %509 = dma.hbm_to_vmem [thread:$0]  %s502, 1024, %s504, %s493, 128, 128, 8
        $region76: #{tpu_custom_call.1} parent=71 // pred_fallthru
          _
      $region72: #{tpu_custom_call.1} parent=5 // pred_fallthru
        _
      %p510 = scmp.le.s32.totalorder 1, %s32
      %p511 = scmp.lt.s32.totalorder %s32, 3
      %p512 = pnand %p510, %p511
      %p513 = pneg %p512
      // Predicated region
      $region77: #{tpu_custom_call.1} parent=5 // pred_check
        _
      $region78: #{tpu_custom_call.1} parent=5 // pred_check_branch
        %515 = sbr.rel (%p512) target = $region80
      $region79: #{tpu_custom_call.1} parent=5 // pred_region
        %s516 = ssub.s32 %s32, 1
        %s517 = sand.u32 %s45, 1
        %s518 = scalar_lea.sflag [#allocation4], %s517
        %s519 = sand.u32 %s45, 1
        %s520 = smul.addr %s519, 64
        %s521 = scalar_lea.vmem [#allocation3], %s520
        // Predicated region
        $region81: #{tpu_custom_call.1} parent=79 // pred_check
          %p522 = pneg %p58
        $region82: #{tpu_custom_call.1} parent=79 // pred_check_branch
          %524 = sbr.rel (%p522) target = $region84
        $region83: #{tpu_custom_call.1} parent=79 // pred_region
          %525 = dma.done %s518, 1024
        $region84: #{tpu_custom_call.1} parent=79 // pred_fallthru
          _
        // Predicated region
        $region85: #{tpu_custom_call.1} parent=79 // pred_check
          %p526 = pneg %p100
        $region86: #{tpu_custom_call.1} parent=79 // pred_check_branch
          %528 = sbr.rel (%p526) target = $region88
        $region87: #{tpu_custom_call.1} parent=79 // pred_region
          %529 = dma.done [#allocation7], 16
        $region88: #{tpu_custom_call.1} parent=79 // pred_fallthru
          _
        // Predicated region
        $region89: #{tpu_custom_call.1} parent=79 // pred_check
          %p530 = pneg %p121
        $region90: #{tpu_custom_call.1} parent=79 // pred_check_branch
          %532 = sbr.rel (%p530) target = $region92
        $region91: #{tpu_custom_call.1} parent=79 // pred_region
          %533 = dma.done [#allocation7], 16
        $region92: #{tpu_custom_call.1} parent=79 // pred_fallthru
          _
        // Predicated region
        $region93: #{tpu_custom_call.1} parent=79 // pred_check
          %p534 = pneg %p184
        $region94: #{tpu_custom_call.1} parent=79 // pred_check_branch
          %536 = sbr.rel (%p534) target = $region96
        $region95: #{tpu_custom_call.1} parent=79 // pred_region
          %537 = dma.done [#allocation10], 16
        $region96: #{tpu_custom_call.1} parent=79 // pred_fallthru
          _
        // Predicated region
        $region97: #{tpu_custom_call.1} parent=79 // pred_check
          %p538 = pneg %p205
        $region98: #{tpu_custom_call.1} parent=79 // pred_check_branch
          %540 = sbr.rel (%p538) target = $region100
        $region99: #{tpu_custom_call.1} parent=79 // pred_region
          %541 = dma.done [#allocation10], 512
        $region100: #{tpu_custom_call.1} parent=79 // pred_fallthru
          _
        // Predicated region
        $region101: #{tpu_custom_call.1} parent=79 // pred_check
          %p542 = pneg %p226
        $region102: #{tpu_custom_call.1} parent=79 // pred_check_branch
          %544 = sbr.rel (%p542) target = $region104
        $region103: #{tpu_custom_call.1} parent=79 // pred_region
          %545 = dma.done [#allocation13], 16
        $region104: #{tpu_custom_call.1} parent=79 // pred_fallthru
          _
        // Predicated region
        $region105: #{tpu_custom_call.1} parent=79 // pred_check
          %p546 = pneg %p247
        $region106: #{tpu_custom_call.1} parent=79 // pred_check_branch
          %548 = sbr.rel (%p546) target = $region108
        $region107: #{tpu_custom_call.1} parent=79 // pred_region
          %549 = dma.done [#allocation13], 64
        $region108: #{tpu_custom_call.1} parent=79 // pred_fallthru
          _
        %s550 = sand.u32 %s45, 1
        %s551 = scalar_lea.sflag [#allocation4], %s550
        %s552 = sand.u32 %s45, 1
        %s553 = smul.addr %s552, 64
        %s554 = scalar_lea.vmem [#allocation3], %s553
        %p555 = pneg %p58
        %p556 = pneg %p55
        %p557 = pneg %p79
        %p558 = pneg %p76
        %p559 = pneg %p100
        %p560 = pneg %p97
        %p561 = pneg %p121
        %p562 = pneg %p118
        %p563 = pneg %p142
        %p564 = pneg %p139
        %p565 = pneg %p163
        %p566 = pneg %p160
        %p567 = pneg %p184
        %p568 = pneg %p181
        %p569 = pneg %p205
        %p570 = pneg %p202
        %p571 = pneg %p226
        %p572 = pneg %p223
        %p573 = pneg %p247
        %p574 = pneg %p244
        %p575 = pneg %p268
        %p576 = pneg %p265
        %p577 = pneg %p289
        %p578 = pneg %p286
        %p579 = pneg %p310
        %p580 = pneg %p307
        %p581 = pneg %p331
        %p582 = pneg %p328
        %p583 = pneg %p352
        %p584 = pneg %p349
        %p585 = pneg %p378
        %p586 = pneg %p375
        %s587 = sand.u32 %s365, 1
        %s588 = scalar_lea.sflag [#allocation5], %s587
        %s589 = sand.u32 %s365, 1
        %s590 = smul.addr %s589, 64
        %s591 = scalar_lea.vmem [#allocation15], %s590
        %v592 = vld [vmem:[%s521] sm:$0xff]
        %v593 = vld [vmem:[%s521 + $0x8] sm:$0xff]
        %v594 = vld [vmem:[%s521 + $0x10] sm:$0xff]
        %v595 = vld [vmem:[%s521 + $0x18] sm:$0xff]
        %v596 = vld [vmem:[%s521 + $0x20] sm:$0xff]
        %v597 = vld [vmem:[%s521 + $0x28] sm:$0xff]
        %v598 = vld [vmem:[%s521 + $0x30] sm:$0xff]
        %v599 = vld [vmem:[%s521 + $0x38] sm:$0xff]
        %v600 = vld [vmem:[%s1] sm:$0xff]
        %v601 = vld [vmem:[%s1 + $0x8] sm:$0xff]
        %v602 = vld [vmem:[%s1 + $0x10] sm:$0xff]
        %v603 = vld [vmem:[%s1 + $0x18] sm:$0xff]
        %v604 = vld [vmem:[#allocation6] sm:$0x1]
        %v606 = vlaneseq
        %v607 = vshrl.u32 %v606, 7
        %v608 = vsub.s32 0, %v607
        %v609 = vrot.slane %v604, %v608
        %vm611 = vcmask 261120
        %v613 = vsel %vm611, %v592, 0
        %v616 = vsel %vm611, %v593, 0
        %v619 = vsel %vm611, %v594, 0
        %v622 = vsel %vm611, %v595, 0
        %v625 = vsel %vm611, %v596, 0
        %v628 = vsel %vm611, %v597, 0
        %v631 = vsel %vm611, %v598, 0
        %v634 = vsel %vm611, %v599, 0
        %636 = vmatprep.subr.mxu0 0.0
        %637 = vmatpush1.msra.mxu0 0.0
        %638 = vmatprep.subr.mxu0 0.0
        %639 = vmatpush1.msra.mxu0 0.0
        %640 = vmatprep.subr.mxu0 0.0
        %641 = vmatpush1.msra.mxu0 0.0
        %642 = vmatprep.subr.mxu0 0.0
        %643 = vmatpush1.msra.mxu0 0.0
        %644 = vmatprep.subr.mxu0 0.0
        %645 = vmatpush1.msra.mxu0 0.0
        %646 = vmatprep.subr.mxu0 0.0
        %647 = vmatpush1.msra.mxu0 0.0
        %648 = vmatprep.subr.mxu0 0.0
        %649 = vmatpush1.msra.mxu0 0.0
        %650 = vmatprep.subr.mxu0 0.0
        %651 = vmatpush1.msra.mxu0 0.0
        %652 = vmatprep.subr.mxu0 0.0
        %653 = vmatpush1.msra.mxu0 0.0
        %654 = vmatprep.subr.mxu0 0.0
        %655 = vmatpush1.msra.mxu0 0.0
        %656 = vmatprep.subr.mxu0 0.0
        %657 = vmatpush1.msra.mxu0 0.0
        %658 = vmatprep.subr.mxu0 0.0
        %659 = vmatpush1.msra.mxu0 0.0
        %660 = vmatprep.subr.mxu0 0.0
        %661 = vmatpush1.msra.mxu0 %v603
        %662 = vmatprep.subr.mxu0 0.0
        %663 = vmatpush1.msra.mxu0 %v602
        %664 = vmatprep.subr.mxu0 0.0
        %665 = vmatpush1.msra.mxu0 %v601
        %666 = vmatprep.subr.mxu0 0.0
        %667 = vmatpush1.msra.mxu0 %v600
        %668 = vmatprep.subr.mxu0 0.0
        %669 = vmatpush2.msra.mxu0 0.0
        %670 = vmatprep.subr.mxu0 0.0
        %671 = vmatpush2.msra.mxu0 0.0
        %672 = vmatprep.subr.mxu0 0.0
        %673 = vmatpush2.msra.mxu0 0.0
        %674 = vmatprep.subr.mxu0 0.0
        %675 = vmatpush2.msra.mxu0 0.0
        %676 = vmatprep.subr.mxu0 0.0
        %677 = vmatpush2.msra.mxu0 0.0
        %678 = vmatprep.subr.mxu0 0.0
        %679 = vmatpush2.msra.mxu0 0.0
        %680 = vmatprep.subr.mxu0 0.0
        %681 = vmatpush2.msra.mxu0 0.0
        %682 = vmatprep.subr.mxu0 0.0
        %683 = vmatpush2.msra.mxu0 0.0
        %684 = vmatprep.subr.mxu0 0.0
        %685 = vmatpush2.msra.mxu0 0.0
        %686 = vmatprep.subr.mxu0 0.0
        %687 = vmatpush2.msra.mxu0 0.0
        %688 = vmatprep.subr.mxu0 0.0
        %689 = vmatpush2.msra.mxu0 0.0
        %690 = vmatprep.subr.mxu0 0.0
        %691 = vmatpush2.msra.mxu0 0.0
        %692 = vmatprep.subr.mxu0 0.0
        %693 = vmatpush2.msra.mxu0 0.0
        %694 = vmatprep.subr.mxu0 0.0
        %695 = vmatpush2.msra.mxu0 0.0
        %696 = vmatprep.subr.mxu0 0.0
        %697 = vmatpush2.msra.mxu0 0.0
        %698 = vmatprep.subr.mxu0 0.0
        %699 = vmatpush2.msra.mxu0 0.0
        %700 = vmatprep.mubr.f32.mxu0 0.0
        %701 = vmatmul.mubr.f32.gmra.mxu0 %v613
        %v702 = vpop.f32.mrf.mxu0
        %v703 = vadd.f32 %v609, %v702
        %v704 = vpop.f32.mrf.mxu0
        %705 = vmatprep.mubr.f32.mxu0 0.0
        %706 = vmatmul.mubr.f32.gmra.mxu0 %v616
        %v707 = vpop.f32.mrf.mxu0
        %v708 = vadd.f32 %v609, %v707
        %v709 = vpop.f32.mrf.mxu0
        %710 = vmatprep.mubr.f32.mxu0 0.0
        %711 = vmatmul.mubr.f32.gmra.mxu0 %v619
        %v712 = vpop.f32.mrf.mxu0
        %v713 = vadd.f32 %v609, %v712
        %v714 = vpop.f32.mrf.mxu0
        %715 = vmatprep.mubr.f32.mxu0 0.0
        %716 = vmatmul.mubr.f32.gmra.mxu0 %v622
        %v717 = vpop.f32.mrf.mxu0
        %v718 = vadd.f32 %v609, %v717
        %v719 = vpop.f32.mrf.mxu0
        %720 = vmatprep.mubr.f32.mxu0 0.0
        %721 = vmatmul.mubr.f32.gmra.mxu0 %v625
        %v722 = vpop.f32.mrf.mxu0
        %v723 = vadd.f32 %v609, %v722
        %v724 = vpop.f32.mrf.mxu0
        %725 = vmatprep.mubr.f32.mxu0 0.0
        %726 = vmatmul.mubr.f32.gmra.mxu0 %v628
        %v727 = vpop.f32.mrf.mxu0
        %v728 = vadd.f32 %v609, %v727
        %v729 = vpop.f32.mrf.mxu0
        %730 = vmatprep.mubr.f32.mxu0 0.0
        %731 = vmatmul.mubr.f32.gmra.mxu0 %v631
        %v732 = vpop.f32.mrf.mxu0
        %v733 = vadd.f32 %v609, %v732
        %v734 = vpop.f32.mrf.mxu0
        %735 = vmatprep.mubr.f32.mxu0 0.0
        %736 = vmatmul.mubr.f32.gmra.mxu0 %v634
        %v737 = vpop.f32.mrf.mxu0
        %v738 = vadd.f32 %v609, %v737
        %v739 = vpop.f32.mrf.mxu0
        %740 = vdwg.mxu0
        %v741 = vtanh.pop %v703
        %v742 = vtanh.pop %v708
        %v743 = vtanh.pop %v713
        %v744 = vtanh.pop %v718
        %v745 = vtanh.pop %v723
        %v746 = vtanh.pop %v728
        %v747 = vtanh.pop %v733
        %v748 = vtanh.pop %v738
        %v749 = vld [vmem:[#allocation8] sm:$0x1]
        %v751 = vlaneseq
        %v752 = vshrl.u32 %v751, 7
        %v753 = vsub.s32 0, %v752
        %v754 = vrot.slane %v749, %v753
        %v756 = vmul.f32 %v741, %v754
        %v757 = vmul.f32 %v742, %v754
        %v758 = vmul.f32 %v743, %v754
        %v759 = vmul.f32 %v744, %v754
        %v760 = vmul.f32 %v745, %v754
        %v761 = vmul.f32 %v746, %v754
        %v762 = vmul.f32 %v747, %v754
        %v763 = vmul.f32 %v748, %v754
        %vm764 = vcmask 130048
        %v765 = vsel %vm764, %v756, 0.0
        %766 = vadd.xlane.f32.xlu0 %v765
        %v767 = vpop.xlane.xlu0 %766
        %v768 = vsel %vm764, %v757, 0.0
        %769 = vadd.xlane.f32.xlu0 %v768
        %v770 = vpop.xlane.xlu0 %769
        %v771 = vsel %vm764, %v758, 0.0
        %772 = vadd.xlane.f32.xlu0 %v771
        %v773 = vpop.xlane.xlu0 %772
        %v774 = vsel %vm764, %v759, 0.0
        %775 = vadd.xlane.f32.xlu0 %v774
        %v776 = vpop.xlane.xlu0 %775
        %v777 = vsel %vm764, %v760, 0.0
        %778 = vadd.xlane.f32.xlu0 %v777
        %v779 = vpop.xlane.xlu0 %778
        %v780 = vsel %vm764, %v761, 0.0
        %781 = vadd.xlane.f32.xlu0 %v780
        %v782 = vpop.xlane.xlu0 %781
        %v783 = vsel %vm764, %v762, 0.0
        %784 = vadd.xlane.f32.xlu0 %v783
        %v785 = vpop.xlane.xlu0 %784
        %v786 = vsel %vm764, %v763, 0.0
        %787 = vadd.xlane.f32.xlu0 %v786
        %v788 = vpop.xlane.xlu0 %787
        %v789 = vld [vmem:[#allocation2] sm:$0x1]
        %v791 = vlaneseq
        %v792 = vshrl.u32 %v791, 7
        %v793 = vsub.s32 0, %v792
        %v794 = vrot.slane %v789, %v793
        %v796 = vadd.f32 %v767, %v794
        %v797 = vadd.f32 %v770, %v794
        %v798 = vadd.f32 %v773, %v794
        %v799 = vadd.f32 %v776, %v794
        %v800 = vadd.f32 %v779, %v794
        %v801 = vadd.f32 %v782, %v794
        %v802 = vadd.f32 %v785, %v794
        %v803 = vadd.f32 %v788, %v794
        %vm804 = vcmask 7168
        %v805 = vsel %vm804, %v796, -inf
        %v806 = vsel %vm804, %v798, -inf
        %v807 = vsel %vm804, %v800, -inf
        %v808 = vmax.f32 %v805, %v807
        %v809 = vsel %vm804, %v802, -inf
        %v810 = vmax.f32 %v806, %v809
        %v811 = vmax.f32 %v808, %v810
        %v812 = vsel %vm804, %v797, -inf
        %v813 = vsel %vm804, %v799, -inf
        %v814 = vsel %vm804, %v801, -inf
        %v815 = vmax.f32 %v812, %v814
        %v816 = vsel %vm804, %v803, -inf
        %v817 = vmax.f32 %v813, %v816
        %v818 = vmax.f32 %v815, %v817
        %v819 = vsub.f32 %v796, %v811
        %v820 = vsub.f32 %v797, %v818
        %v821 = vsub.f32 %v798, %v811
        %v822 = vsub.f32 %v799, %v818
        %v823 = vsub.f32 %v800, %v811
        %v824 = vsub.f32 %v801, %v818
        %v825 = vsub.f32 %v802, %v811
        %v826 = vsub.f32 %v803, %v818
        %v827 = vmul.f32 %v819, 1.442695
        %v828 = vpow.pop %v827
        %v829 = vmul.f32 %v820, 1.442695
        %v830 = vpow.pop %v829
        %v831 = vmul.f32 %v821, 1.442695
        %v832 = vpow.pop %v831
        %v833 = vmul.f32 %v822, 1.442695
        %v834 = vpow.pop %v833
        %v835 = vmul.f32 %v823, 1.442695
        %v836 = vpow.pop %v835
        %v837 = vmul.f32 %v824, 1.442695
        %v838 = vpow.pop %v837
        %v839 = vmul.f32 %v825, 1.442695
        %v840 = vpow.pop %v839
        %v841 = vmul.f32 %v826, 1.442695
        %v842 = vpow.pop %v841
        %v843 = vsel %vm804, %v828, 0.0
        %v844 = vsel %vm804, %v832, 0.0
        %v845 = vadd.f32 %v843, %v844
        %v846 = vsel %vm804, %v836, 0.0
        %v847 = vadd.f32 %v845, %v846
        %v848 = vsel %vm804, %v840, 0.0
        %v849 = vadd.f32 %v847, %v848
        %v850 = vsel %vm804, %v830, 0.0
        %v851 = vsel %vm804, %v834, 0.0
        %v852 = vadd.f32 %v850, %v851
        %v853 = vsel %vm804, %v838, 0.0
        %v854 = vadd.f32 %v852, %v853
        %v855 = vsel %vm804, %v842, 0.0
        %v856 = vadd.f32 %v854, %v855
        %858 = vset.pattern.permute.xlu0 0
        %859 = vperm.xlu0 %858, %v828
        %v860 = vpop.permute.xlu0 %859
        %863 = vset.pattern.permute.xlu0 0
        %864 = vperm.xlu0 %863, %v830
        %v865 = vpop.permute.xlu0 %864
        %868 = vset.pattern.permute.xlu0 0
        %869 = vperm.xlu0 %868, %v832
        %v870 = vpop.permute.xlu0 %869
        %873 = vset.pattern.permute.xlu0 0
        %874 = vperm.xlu0 %873, %v834
        %v875 = vpop.permute.xlu0 %874
        %878 = vset.pattern.permute.xlu0 0
        %879 = vperm.xlu0 %878, %v836
        %v880 = vpop.permute.xlu0 %879
        %883 = vset.pattern.permute.xlu0 0
        %884 = vperm.xlu0 %883, %v838
        %v885 = vpop.permute.xlu0 %884
        %888 = vset.pattern.permute.xlu0 0
        %889 = vperm.xlu0 %888, %v840
        %v890 = vpop.permute.xlu0 %889
        %893 = vset.pattern.permute.xlu0 0
        %894 = vperm.xlu0 %893, %v842
        %v895 = vpop.permute.xlu0 %894
        %v897 = vmul.f32 %v860, %v592
        %v898 = vmul.f32 %v865, %v593
        %v899 = vmul.f32 %v870, %v594
        %v900 = vmul.f32 %v875, %v595
        %v901 = vmul.f32 %v880, %v596
        %v902 = vmul.f32 %v885, %v597
        %v903 = vmul.f32 %v890, %v598
        %v904 = vmul.f32 %v895, %v599
        %v905 = vsel %vm611, %v897, 0.0
        %v906 = vsel %vm611, %v899, 0.0
        %v907 = vadd.f32 %v905, %v906
        %v908 = vsel %vm611, %v901, 0.0
        %v909 = vadd.f32 %v907, %v908
        %v910 = vsel %vm611, %v903, 0.0
        %v911 = vadd.f32 %v909, %v910
        %v912 = vsel %vm611, %v898, 0.0
        %v913 = vsel %vm611, %v900, 0.0
        %v914 = vadd.f32 %v912, %v913
        %v915 = vsel %vm611, %v902, 0.0
        %v916 = vadd.f32 %v914, %v915
        %v917 = vsel %vm611, %v904, 0.0
        %v918 = vadd.f32 %v916, %v917
        %v919 = vrcp.pop %v849
        %v920 = vrcp.pop %v856
        %922 = vset.pattern.permute.xlu0 0
        %923 = vperm.xlu0 %922, %v919
        %v924 = vpop.permute.xlu0 %923
        %927 = vset.pattern.permute.xlu0 0
        %928 = vperm.xlu0 %927, %v920
        %v929 = vpop.permute.xlu0 %928
        %v931 = vmul.f32 %v911, %v924
        %v932 = vmul.f32 %v918, %v929
        %v933 = vld [vmem:[%s5] sm:$0xff]
        %v934 = vld [vmem:[%s5 + $0x8] sm:$0xff]
        %v935 = vld [vmem:[%s5 + $0x10] sm:$0xff]
        %v936 = vld [vmem:[%s5 + $0x18] sm:$0xff]
        %v937 = vld [vmem:[#allocation9] sm:$0x1]
        %v939 = vlaneseq
        %v940 = vshrl.u32 %v939, 7
        %v941 = vsub.s32 0, %v940
        %v942 = vrot.slane %v937, %v941
        %v945 = vsel %vm611, %v931, 0
        %v948 = vsel %vm611, %v932, 0
        %950 = vmatprep.subr.mxu0 0.0
        %951 = vmatpush1.msra.mxu0 0.0
        %952 = vmatprep.subr.mxu0 0.0
        %953 = vmatpush1.msra.mxu0 0.0
        %954 = vmatprep.subr.mxu0 0.0
        %955 = vmatpush1.msra.mxu0 0.0
        %956 = vmatprep.subr.mxu0 0.0
        %957 = vmatpush1.msra.mxu0 0.0
        %958 = vmatprep.subr.mxu0 0.0
        %959 = vmatpush1.msra.mxu0 0.0
        %960 = vmatprep.subr.mxu0 0.0
        %961 = vmatpush1.msra.mxu0 0.0
        %962 = vmatprep.subr.mxu0 0.0
        %963 = vmatpush1.msra.mxu0 0.0
        %964 = vmatprep.subr.mxu0 0.0
        %965 = vmatpush1.msra.mxu0 0.0
        %966 = vmatprep.subr.mxu0 0.0
        %967 = vmatpush1.msra.mxu0 0.0
        %968 = vmatprep.subr.mxu0 0.0
        %969 = vmatpush1.msra.mxu0 0.0
        %970 = vmatprep.subr.mxu0 0.0
        %971 = vmatpush1.msra.mxu0 0.0
        %972 = vmatprep.subr.mxu0 0.0
        %973 = vmatpush1.msra.mxu0 0.0
        %974 = vmatprep.subr.mxu0 0.0
        %975 = vmatpush1.msra.mxu0 %v936
        %976 = vmatprep.subr.mxu0 0.0
        %977 = vmatpush1.msra.mxu0 %v935
        %978 = vmatprep.subr.mxu0 0.0
        %979 = vmatpush1.msra.mxu0 %v934
        %980 = vmatprep.subr.mxu0 0.0
        %981 = vmatpush1.msra.mxu0 %v933
        %982 = vmatprep.subr.mxu0 0.0
        %983 = vmatpush2.msra.mxu0 0.0
        %984 = vmatprep.subr.mxu0 0.0
        %985 = vmatpush2.msra.mxu0 0.0
        %986 = vmatprep.subr.mxu0 0.0
        %987 = vmatpush2.msra.mxu0 0.0
        %988 = vmatprep.subr.mxu0 0.0
        %989 = vmatpush2.msra.mxu0 0.0
        %990 = vmatprep.subr.mxu0 0.0
        %991 = vmatpush2.msra.mxu0 0.0
        %992 = vmatprep.subr.mxu0 0.0
        %993 = vmatpush2.msra.mxu0 0.0
        %994 = vmatprep.subr.mxu0 0.0
        %995 = vmatpush2.msra.mxu0 0.0
        %996 = vmatprep.subr.mxu0 0.0
        %997 = vmatpush2.msra.mxu0 0.0
        %998 = vmatprep.subr.mxu0 0.0
        %999 = vmatpush2.msra.mxu0 0.0
        %1000 = vmatprep.subr.mxu0 0.0
        %1001 = vmatpush2.msra.mxu0 0.0
        %1002 = vmatprep.subr.mxu0 0.0
        %1003 = vmatpush2.msra.mxu0 0.0
        %1004 = vmatprep.subr.mxu0 0.0
        %1005 = vmatpush2.msra.mxu0 0.0
        %1006 = vmatprep.subr.mxu0 0.0
        %1007 = vmatpush2.msra.mxu0 0.0
        %1008 = vmatprep.subr.mxu0 0.0
        %1009 = vmatpush2.msra.mxu0 0.0
        %1010 = vmatprep.subr.mxu0 0.0
        %1011 = vmatpush2.msra.mxu0 0.0
        %1012 = vmatprep.subr.mxu0 0.0
        %1013 = vmatpush2.msra.mxu0 0.0
        %1014 = vmatprep.mubr.f32.mxu0 0.0
        %1015 = vmatmul.mubr.f32.gmra.mxu0 %v945
        %v1016 = vpop.f32.mrf.mxu0
        %v1017 = vadd.f32 %v942, %v1016
        %v1018 = vpop.f32.mrf.mxu0
        %1019 = vmatprep.mubr.f32.mxu0 0.0
        %1020 = vmatmul.mubr.f32.gmra.mxu0 %v948
        %v1021 = vpop.f32.mrf.mxu0
        %v1022 = vadd.f32 %v942, %v1021
        %v1023 = vpop.f32.mrf.mxu0
        %1024 = vdwg.mxu0
        %v1025 = vld [vmem:[#allocation11] sm:$0xff]
        %v1026 = vld [vmem:[#allocation11 + $0x8] sm:$0xff]
        %v1027 = vld [vmem:[#allocation11 + $0x10] sm:$0xff]
        %v1028 = vld [vmem:[#allocation11 + $0x18] sm:$0xff]
        %1031 = vrot.lane.b32.xlu0 %v1017, 96
        %v1032 = vpop.permute.xlu0 %1031
        %1033 = vrot.lane.b32.xlu0 %v1022, 96
        %v1034 = vpop.permute.xlu0 %1033
        %vm1035 = vcmask 31744
        %v1036 = vsel %vm1035, %v1017, 0
        %v1038 = vsel %vm1035, %v1022, 0
        %v1040 = vsel %vm1035, %v1032, 0
        %v1042 = vsel %vm1035, %v1034, 0
        %1044 = vmatprep.subr.mxu0 0.0
        %1045 = vmatpush1.xpose.msra.mxu0 0.0
        %1046 = vmatprep.subr.mxu0 0.0
        %1047 = vmatpush1.xpose.msra.mxu0 0.0
        %1048 = vmatprep.subr.mxu0 0.0
        %1049 = vmatpush1.xpose.msra.mxu0 0.0
        %1050 = vmatprep.subr.mxu0 0.0
        %1051 = vmatpush1.xpose.msra.mxu0 0.0
        %1052 = vmatprep.subr.mxu0 0.0
        %1053 = vmatpush1.xpose.msra.mxu0 0.0
        %1054 = vmatprep.subr.mxu0 0.0
        %1055 = vmatpush1.xpose.msra.mxu0 0.0
        %1056 = vmatprep.subr.mxu0 0.0
        %1057 = vmatpush1.xpose.msra.mxu0 0.0
        %1058 = vmatprep.subr.mxu0 0.0
        %1059 = vmatpush1.xpose.msra.mxu0 0.0
        %1060 = vmatprep.subr.mxu0 0.0
        %1061 = vmatpush1.xpose.msra.mxu0 0.0
        %1062 = vmatprep.subr.mxu0 0.0
        %1063 = vmatpush1.xpose.msra.mxu0 0.0
        %1064 = vmatprep.subr.mxu0 0.0
        %1065 = vmatpush1.xpose.msra.mxu0 0.0
        %1066 = vmatprep.subr.mxu0 0.0
        %1067 = vmatpush1.xpose.msra.mxu0 0.0
        %1068 = vmatprep.subr.mxu0 0.0
        %1069 = vmatpush1.xpose.msra.mxu0 0.0
        %1070 = vmatprep.subr.mxu0 0.0
        %1071 = vmatpush1.xpose.msra.mxu0 0.0
        %1072 = vmatprep.subr.mxu0 0.0
        %1073 = vmatpush1.xpose.msra.mxu0 %v1042
        %1074 = vmatprep.subr.mxu0 0.0
        %1075 = vmatpush1.xpose.msra.mxu0 %v1040
        %1076 = vmatprep.subr.mxu0 0.0
        %1077 = vmatpush2.xpose.msra.mxu0 0.0
        %1078 = vmatprep.subr.mxu0 0.0
        %1079 = vmatpush2.xpose.msra.mxu0 0.0
        %1080 = vmatprep.subr.mxu0 0.0
        %1081 = vmatpush2.xpose.msra.mxu0 0.0
        %1082 = vmatprep.subr.mxu0 0.0
        %1083 = vmatpush2.xpose.msra.mxu0 0.0
        %1084 = vmatprep.subr.mxu0 0.0
        %1085 = vmatpush2.xpose.msra.mxu0 0.0
        %1086 = vmatprep.subr.mxu0 0.0
        %1087 = vmatpush2.xpose.msra.mxu0 0.0
        %1088 = vmatprep.subr.mxu0 0.0
        %1089 = vmatpush2.xpose.msra.mxu0 0.0
        %1090 = vmatprep.subr.mxu0 0.0
        %1091 = vmatpush2.xpose.msra.mxu0 0.0
        %1092 = vmatprep.subr.mxu0 0.0
        %1093 = vmatpush2.xpose.msra.mxu0 0.0
        %1094 = vmatprep.subr.mxu0 0.0
        %1095 = vmatpush2.xpose.msra.mxu0 0.0
        %1096 = vmatprep.subr.mxu0 0.0
        %1097 = vmatpush2.xpose.msra.mxu0 0.0
        %1098 = vmatprep.subr.mxu0 0.0
        %1099 = vmatpush2.xpose.msra.mxu0 0.0
        %1100 = vmatprep.subr.mxu0 0.0
        %1101 = vmatpush2.xpose.msra.mxu0 0.0
        %1102 = vmatprep.subr.mxu0 0.0
        %1103 = vmatpush2.xpose.msra.mxu0 0.0
        %1104 = vmatprep.subr.mxu0 0.0
        %1105 = vmatpush2.xpose.msra.mxu0 0.0
        %1106 = vmatprep.subr.mxu0 0.0
        %1107 = vmatpush2.xpose.msra.mxu0 0.0
        %1108 = vmatprep.mubr.f32.mxu0 0.0
        %1109 = vmatmul.mubr.f32.gmra.mxu0 %v1036
        %v1110 = vpop.f32.mrf.mxu0
        %v1111 = vadd.f32 0.0, %v1110
        %v1112 = vpop.f32.mrf.mxu0
        %1113 = vmatprep.mubr.f32.mxu0 0.0
        %1114 = vmatmul.mubr.f32.gmra.mxu0 %v1038
        %v1115 = vpop.f32.mrf.mxu0
        %v1116 = vadd.f32 0.0, %v1115
        %v1117 = vpop.f32.mrf.mxu0
        %1118 = vdwg.mxu0
        %v1119 = vmul.f32 %v1111, 0.5
        %v1120 = vmul.f32 %v1116, 0.5
        %v1121 = vsel %vm764, %v1119, -inf
        %1122 = vmax.xlane.f32.xlu0 %v1121
        %v1123 = vpop.xlane.xlu0 %1122
        %v1124 = vsel %vm764, %v1120, -inf
        %1125 = vmax.xlane.f32.xlu0 %v1124
        %v1126 = vpop.xlane.xlu0 %1125
        %v1127 = vsub.f32 %v1119, %v1123
        %v1128 = vsub.f32 %v1120, %v1126
        %v1129 = vmul.f32 %v1127, 1.442695
        %v1130 = vpow.pop %v1129
        %v1131 = vmul.f32 %v1128, 1.442695
        %v1132 = vpow.pop %v1131
        %v1133 = vsel %vm764, %v1130, 0.0
        %1134 = vadd.xlane.f32.xlu0 %v1133
        %v1135 = vpop.xlane.xlu0 %1134
        %v1136 = vsel %vm764, %v1132, 0.0
        %1137 = vadd.xlane.f32.xlu0 %v1136
        %v1138 = vpop.xlane.xlu0 %1137
        %v1139 = vrcp.pop %v1135
        %v1140 = vrcp.pop %v1138
        %v1141 = vmul.f32 %v1130, %v1139
        %v1142 = vmul.f32 %v1132, %v1140
        %1143 = vrot.lane.b32.xlu0 %v1017, 64
        %v1144 = vpop.permute.xlu0 %1143
        %1145 = vrot.lane.b32.xlu0 %v1022, 64
        %v1146 = vpop.permute.xlu0 %1145
        %v1150 = vsel %vm764, %v1141, 0
        %v1153 = vsel %vm764, %v1142, 0
        %1155 = vmatprep.subr.mxu0 0.0
        %1156 = vmatpush1.msra.mxu0 0.0
        %1157 = vmatprep.subr.mxu0 0.0
        %1158 = vmatpush1.msra.mxu0 0.0
        %1159 = vmatprep.subr.mxu0 0.0
        %1160 = vmatpush1.msra.mxu0 0.0
        %1161 = vmatprep.subr.mxu0 0.0
        %1162 = vmatpush1.msra.mxu0 0.0
        %1163 = vmatprep.subr.mxu0 0.0
        %1164 = vmatpush1.msra.mxu0 0.0
        %1165 = vmatprep.subr.mxu0 0.0
        %1166 = vmatpush1.msra.mxu0 0.0
        %1167 = vmatprep.subr.mxu0 0.0
        %1168 = vmatpush1.msra.mxu0 0.0
        %1169 = vmatprep.subr.mxu0 0.0
        %1170 = vmatpush1.msra.mxu0 0.0
        %1171 = vmatprep.subr.mxu0 0.0
        %1172 = vmatpush1.msra.mxu0 0.0
        %1173 = vmatprep.subr.mxu0 0.0
        %1174 = vmatpush1.msra.mxu0 0.0
        %1175 = vmatprep.subr.mxu0 0.0
        %1176 = vmatpush1.msra.mxu0 0.0
        %1177 = vmatprep.subr.mxu0 0.0
        %1178 = vmatpush1.msra.mxu0 0.0
        %1179 = vmatprep.subr.mxu0 0.0
        %1180 = vmatpush1.msra.mxu0 0.0
        %1181 = vmatprep.subr.mxu0 0.0
        %1182 = vmatpush1.msra.mxu0 0.0
        %1183 = vmatprep.subr.mxu0 0.0
        %1184 = vmatpush1.msra.mxu0 %v1146
        %1185 = vmatprep.subr.mxu0 0.0
        %1186 = vmatpush1.msra.mxu0 %v1144
        %1187 = vmatprep.subr.mxu0 0.0
        %1188 = vmatpush2.msra.mxu0 0.0
        %1189 = vmatprep.subr.mxu0 0.0
        %1190 = vmatpush2.msra.mxu0 0.0
        %1191 = vmatprep.subr.mxu0 0.0
        %1192 = vmatpush2.msra.mxu0 0.0
        %1193 = vmatprep.subr.mxu0 0.0
        %1194 = vmatpush2.msra.mxu0 0.0
        %1195 = vmatprep.subr.mxu0 0.0
        %1196 = vmatpush2.msra.mxu0 0.0
        %1197 = vmatprep.subr.mxu0 0.0
        %1198 = vmatpush2.msra.mxu0 0.0
        %1199 = vmatprep.subr.mxu0 0.0
        %1200 = vmatpush2.msra.mxu0 0.0
        %1201 = vmatprep.subr.mxu0 0.0
        %1202 = vmatpush2.msra.mxu0 0.0
        %1203 = vmatprep.subr.mxu0 0.0
        %1204 = vmatpush2.msra.mxu0 0.0
        %1205 = vmatprep.subr.mxu0 0.0
        %1206 = vmatpush2.msra.mxu0 0.0
        %1207 = vmatprep.subr.mxu0 0.0
        %1208 = vmatpush2.msra.mxu0 0.0
        %1209 = vmatprep.subr.mxu0 0.0
        %1210 = vmatpush2.msra.mxu0 0.0
        %1211 = vmatprep.subr.mxu0 0.0
        %1212 = vmatpush2.msra.mxu0 0.0
        %1213 = vmatprep.subr.mxu0 0.0
        %1214 = vmatpush2.msra.mxu0 0.0
        %1215 = vmatprep.subr.mxu0 0.0
        %1216 = vmatpush2.msra.mxu0 0.0
        %1217 = vmatprep.subr.mxu0 0.0
        %1218 = vmatpush2.msra.mxu0 0.0
        %1219 = vmatprep.mubr.f32.mxu0 0.0
        %1220 = vmatmul.mubr.f32.gmra.mxu0 %v1150
        %v1221 = vpop.f32.mrf.mxu0
        %v1222 = vadd.f32 0.0, %v1221
        %v1223 = vpop.f32.mrf.mxu0
        %1224 = vmatprep.mubr.f32.mxu0 0.0
        %1225 = vmatmul.mubr.f32.gmra.mxu0 %v1153
        %v1226 = vpop.f32.mrf.mxu0
        %v1227 = vadd.f32 0.0, %v1226
        %v1228 = vpop.f32.mrf.mxu0
        %1229 = vdwg.mxu0
        %1230 = vrot.lane.b32.xlu0 %v1017, 124
        %v1231 = vpop.permute.xlu0 %1230
        %1232 = vrot.lane.b32.xlu0 %v1022, 124
        %v1233 = vpop.permute.xlu0 %1232
        %1234 = vrot.lane.b32.xlu0 %v1017, 92
        %v1235 = vpop.permute.xlu0 %1234
        %1236 = vrot.lane.b32.xlu0 %v1022, 92
        %v1237 = vpop.permute.xlu0 %1236
        %v1238 = vsel %vm1035, %v1231, 0
        %v1240 = vsel %vm1035, %v1233, 0
        %v1242 = vsel %vm1035, %v1235, 0
        %v1244 = vsel %vm1035, %v1237, 0
        %1246 = vmatprep.subr.mxu0 0.0
        %1247 = vmatpush1.xpose.msra.mxu0 0.0
        %1248 = vmatprep.subr.mxu0 0.0
        %1249 = vmatpush1.xpose.msra.mxu0 0.0
        %1250 = vmatprep.subr.mxu0 0.0
        %1251 = vmatpush1.xpose.msra.mxu0 0.0
        %1252 = vmatprep.subr.mxu0 0.0
        %1253 = vmatpush1.xpose.msra.mxu0 0.0
        %1254 = vmatprep.subr.mxu0 0.0
        %1255 = vmatpush1.xpose.msra.mxu0 0.0
        %1256 = vmatprep.subr.mxu0 0.0
        %1257 = vmatpush1.xpose.msra.mxu0 0.0
        %1258 = vmatprep.subr.mxu0 0.0
        %1259 = vmatpush1.xpose.msra.mxu0 0.0
        %1260 = vmatprep.subr.mxu0 0.0
        %1261 = vmatpush1.xpose.msra.mxu0 0.0
        %1262 = vmatprep.subr.mxu0 0.0
        %1263 = vmatpush1.xpose.msra.mxu0 0.0
        %1264 = vmatprep.subr.mxu0 0.0
        %1265 = vmatpush1.xpose.msra.mxu0 0.0
        %1266 = vmatprep.subr.mxu0 0.0
        %1267 = vmatpush1.xpose.msra.mxu0 0.0
        %1268 = vmatprep.subr.mxu0 0.0
        %1269 = vmatpush1.xpose.msra.mxu0 0.0
        %1270 = vmatprep.subr.mxu0 0.0
        %1271 = vmatpush1.xpose.msra.mxu0 0.0
        %1272 = vmatprep.subr.mxu0 0.0
        %1273 = vmatpush1.xpose.msra.mxu0 0.0
        %1274 = vmatprep.subr.mxu0 0.0
        %1275 = vmatpush1.xpose.msra.mxu0 %v1244
        %1276 = vmatprep.subr.mxu0 0.0
        %1277 = vmatpush1.xpose.msra.mxu0 %v1242
        %1278 = vmatprep.subr.mxu0 0.0
        %1279 = vmatpush2.xpose.msra.mxu0 0.0
        %1280 = vmatprep.subr.mxu0 0.0
        %1281 = vmatpush2.xpose.msra.mxu0 0.0
        %1282 = vmatprep.subr.mxu0 0.0
        %1283 = vmatpush2.xpose.msra.mxu0 0.0
        %1284 = vmatprep.subr.mxu0 0.0
        %1285 = vmatpush2.xpose.msra.mxu0 0.0
        %1286 = vmatprep.subr.mxu0 0.0
        %1287 = vmatpush2.xpose.msra.mxu0 0.0
        %1288 = vmatprep.subr.mxu0 0.0
        %1289 = vmatpush2.xpose.msra.mxu0 0.0
        %1290 = vmatprep.subr.mxu0 0.0
        %1291 = vmatpush2.xpose.msra.mxu0 0.0
        %1292 = vmatprep.subr.mxu0 0.0
        %1293 = vmatpush2.xpose.msra.mxu0 0.0
        %1294 = vmatprep.subr.mxu0 0.0
        %1295 = vmatpush2.xpose.msra.mxu0 0.0
        %1296 = vmatprep.subr.mxu0 0.0
        %1297 = vmatpush2.xpose.msra.mxu0 0.0
        %1298 = vmatprep.subr.mxu0 0.0
        %1299 = vmatpush2.xpose.msra.mxu0 0.0
        %1300 = vmatprep.subr.mxu0 0.0
        %1301 = vmatpush2.xpose.msra.mxu0 0.0
        %1302 = vmatprep.subr.mxu0 0.0
        %1303 = vmatpush2.xpose.msra.mxu0 0.0
        %1304 = vmatprep.subr.mxu0 0.0
        %1305 = vmatpush2.xpose.msra.mxu0 0.0
        %1306 = vmatprep.subr.mxu0 0.0
        %1307 = vmatpush2.xpose.msra.mxu0 0.0
        %1308 = vmatprep.subr.mxu0 0.0
        %1309 = vmatpush2.xpose.msra.mxu0 0.0
        %1310 = vmatprep.mubr.f32.mxu0 0.0
        %1311 = vmatmul.mubr.f32.gmra.mxu0 %v1238
        %v1312 = vpop.f32.mrf.mxu0
        %v1313 = vadd.f32 0.0, %v1312
        %v1314 = vpop.f32.mrf.mxu0
        %1315 = vmatprep.mubr.f32.mxu0 0.0
        %1316 = vmatmul.mubr.f32.gmra.mxu0 %v1240
        %v1317 = vpop.f32.mrf.mxu0
        %v1318 = vadd.f32 0.0, %v1317
        %v1319 = vpop.f32.mrf.mxu0
        %1320 = vdwg.mxu0
        %v1321 = vmul.f32 %v1313, 0.5
        %v1322 = vmul.f32 %v1318, 0.5
        %v1323 = vsel %vm764, %v1321, -inf
        %1324 = vmax.xlane.f32.xlu0 %v1323
        %v1325 = vpop.xlane.xlu0 %1324
        %v1326 = vsel %vm764, %v1322, -inf
        %1327 = vmax.xlane.f32.xlu0 %v1326
        %v1328 = vpop.xlane.xlu0 %1327
        %v1329 = vsub.f32 %v1321, %v1325
        %v1330 = vsub.f32 %v1322, %v1328
        %v1331 = vmul.f32 %v1329, 1.442695
        %v1332 = vpow.pop %v1331
        %v1333 = vmul.f32 %v1330, 1.442695
        %v1334 = vpow.pop %v1333
        %v1335 = vsel %vm764, %v1332, 0.0
        %1336 = vadd.xlane.f32.xlu0 %v1335
        %v1337 = vpop.xlane.xlu0 %1336
        %v1338 = vsel %vm764, %v1334, 0.0
        %1339 = vadd.xlane.f32.xlu0 %v1338
        %v1340 = vpop.xlane.xlu0 %1339
        %v1341 = vrcp.pop %v1337
        %v1342 = vrcp.pop %v1340
        %v1343 = vmul.f32 %v1332, %v1341
        %v1344 = vmul.f32 %v1334, %v1342
        %1345 = vrot.lane.b32.xlu0 %v1017, 60
        %v1346 = vpop.permute.xlu0 %1345
        %1347 = vrot.lane.b32.xlu0 %v1022, 60
        %v1348 = vpop.permute.xlu0 %1347
        %v1352 = vsel %vm764, %v1343, 0
        %v1355 = vsel %vm764, %v1344, 0
        %1357 = vmatprep.subr.mxu0 0.0
        %1358 = vmatpush1.msra.mxu0 0.0
        %1359 = vmatprep.subr.mxu0 0.0
        %1360 = vmatpush1.msra.mxu0 0.0
        %1361 = vmatprep.subr.mxu0 0.0
        %1362 = vmatpush1.msra.mxu0 0.0
        %1363 = vmatprep.subr.mxu0 0.0
        %1364 = vmatpush1.msra.mxu0 0.0
        %1365 = vmatprep.subr.mxu0 0.0
        %1366 = vmatpush1.msra.mxu0 0.0
        %1367 = vmatprep.subr.mxu0 0.0
        %1368 = vmatpush1.msra.mxu0 0.0
        %1369 = vmatprep.subr.mxu0 0.0
        %1370 = vmatpush1.msra.mxu0 0.0
        %1371 = vmatprep.subr.mxu0 0.0
        %1372 = vmatpush1.msra.mxu0 0.0
        %1373 = vmatprep.subr.mxu0 0.0
        %1374 = vmatpush1.msra.mxu0 0.0
        %1375 = vmatprep.subr.mxu0 0.0
        %1376 = vmatpush1.msra.mxu0 0.0
        %1377 = vmatprep.subr.mxu0 0.0
        %1378 = vmatpush1.msra.mxu0 0.0
        %1379 = vmatprep.subr.mxu0 0.0
        %1380 = vmatpush1.msra.mxu0 0.0
        %1381 = vmatprep.subr.mxu0 0.0
        %1382 = vmatpush1.msra.mxu0 0.0
        %1383 = vmatprep.subr.mxu0 0.0
        %1384 = vmatpush1.msra.mxu0 0.0
        %1385 = vmatprep.subr.mxu0 0.0
        %1386 = vmatpush1.msra.mxu0 %v1348
        %1387 = vmatprep.subr.mxu0 0.0
        %1388 = vmatpush1.msra.mxu0 %v1346
        %1389 = vmatprep.subr.mxu0 0.0
        %1390 = vmatpush2.msra.mxu0 0.0
        %1391 = vmatprep.subr.mxu0 0.0
        %1392 = vmatpush2.msra.mxu0 0.0
        %1393 = vmatprep.subr.mxu0 0.0
        %1394 = vmatpush2.msra.mxu0 0.0
        %1395 = vmatprep.subr.mxu0 0.0
        %1396 = vmatpush2.msra.mxu0 0.0
        %1397 = vmatprep.subr.mxu0 0.0
        %1398 = vmatpush2.msra.mxu0 0.0
        %1399 = vmatprep.subr.mxu0 0.0
        %1400 = vmatpush2.msra.mxu0 0.0
        %1401 = vmatprep.subr.mxu0 0.0
        %1402 = vmatpush2.msra.mxu0 0.0
        %1403 = vmatprep.subr.mxu0 0.0
        %1404 = vmatpush2.msra.mxu0 0.0
        %1405 = vmatprep.subr.mxu0 0.0
        %1406 = vmatpush2.msra.mxu0 0.0
        %1407 = vmatprep.subr.mxu0 0.0
        %1408 = vmatpush2.msra.mxu0 0.0
        %1409 = vmatprep.subr.mxu0 0.0
        %1410 = vmatpush2.msra.mxu0 0.0
        %1411 = vmatprep.subr.mxu0 0.0
        %1412 = vmatpush2.msra.mxu0 0.0
        %1413 = vmatprep.subr.mxu0 0.0
        %1414 = vmatpush2.msra.mxu0 0.0
        %1415 = vmatprep.subr.mxu0 0.0
        %1416 = vmatpush2.msra.mxu0 0.0
        %1417 = vmatprep.subr.mxu0 0.0
        %1418 = vmatpush2.msra.mxu0 0.0
        %1419 = vmatprep.subr.mxu0 0.0
        %1420 = vmatpush2.msra.mxu0 0.0
        %1421 = vmatprep.mubr.f32.mxu0 0.0
        %1422 = vmatmul.mubr.f32.gmra.mxu0 %v1352
        %v1423 = vpop.f32.mrf.mxu0
        %v1424 = vadd.f32 0.0, %v1423
        %v1425 = vpop.f32.mrf.mxu0
        %1426 = vmatprep.mubr.f32.mxu0 0.0
        %1427 = vmatmul.mubr.f32.gmra.mxu0 %v1355
        %v1428 = vpop.f32.mrf.mxu0
        %v1429 = vadd.f32 0.0, %v1428
        %v1430 = vpop.f32.mrf.mxu0
        %1431 = vdwg.mxu0
        %1432 = vrot.lane.b32.xlu0 %v1017, 120
        %v1433 = vpop.permute.xlu0 %1432
        %1434 = vrot.lane.b32.xlu0 %v1022, 120
        %v1435 = vpop.permute.xlu0 %1434
        %1436 = vrot.lane.b32.xlu0 %v1017, 88
        %v1437 = vpop.permute.xlu0 %1436
        %1438 = vrot.lane.b32.xlu0 %v1022, 88
        %v1439 = vpop.permute.xlu0 %1438
        %v1440 = vsel %vm1035, %v1433, 0
        %v1442 = vsel %vm1035, %v1435, 0
        %v1444 = vsel %vm1035, %v1437, 0
        %v1446 = vsel %vm1035, %v1439, 0
        %1448 = vmatprep.subr.mxu0 0.0
        %1449 = vmatpush1.xpose.msra.mxu0 0.0
        %1450 = vmatprep.subr.mxu0 0.0
        %1451 = vmatpush1.xpose.msra.mxu0 0.0
        %1452 = vmatprep.subr.mxu0 0.0
        %1453 = vmatpush1.xpose.msra.mxu0 0.0
        %1454 = vmatprep.subr.mxu0 0.0
        %1455 = vmatpush1.xpose.msra.mxu0 0.0
        %1456 = vmatprep.subr.mxu0 0.0
        %1457 = vmatpush1.xpose.msra.mxu0 0.0
        %1458 = vmatprep.subr.mxu0 0.0
        %1459 = vmatpush1.xpose.msra.mxu0 0.0
        %1460 = vmatprep.subr.mxu0 0.0
        %1461 = vmatpush1.xpose.msra.mxu0 0.0
        %1462 = vmatprep.subr.mxu0 0.0
        %1463 = vmatpush1.xpose.msra.mxu0 0.0
        %1464 = vmatprep.subr.mxu0 0.0
        %1465 = vmatpush1.xpose.msra.mxu0 0.0
        %1466 = vmatprep.subr.mxu0 0.0
        %1467 = vmatpush1.xpose.msra.mxu0 0.0
        %1468 = vmatprep.subr.mxu0 0.0
        %1469 = vmatpush1.xpose.msra.mxu0 0.0
        %1470 = vmatprep.subr.mxu0 0.0
        %1471 = vmatpush1.xpose.msra.mxu0 0.0
        %1472 = vmatprep.subr.mxu0 0.0
        %1473 = vmatpush1.xpose.msra.mxu0 0.0
        %1474 = vmatprep.subr.mxu0 0.0
        %1475 = vmatpush1.xpose.msra.mxu0 0.0
        %1476 = vmatprep.subr.mxu0 0.0
        %1477 = vmatpush1.xpose.msra.mxu0 %v1446
        %1478 = vmatprep.subr.mxu0 0.0
        %1479 = vmatpush1.xpose.msra.mxu0 %v1444
        %1480 = vmatprep.subr.mxu0 0.0
        %1481 = vmatpush2.xpose.msra.mxu0 0.0
        %1482 = vmatprep.subr.mxu0 0.0
        %1483 = vmatpush2.xpose.msra.mxu0 0.0
        %1484 = vmatprep.subr.mxu0 0.0
        %1485 = vmatpush2.xpose.msra.mxu0 0.0
        %1486 = vmatprep.subr.mxu0 0.0
        %1487 = vmatpush2.xpose.msra.mxu0 0.0
        %1488 = vmatprep.subr.mxu0 0.0
        %1489 = vmatpush2.xpose.msra.mxu0 0.0
        %1490 = vmatprep.subr.mxu0 0.0
        %1491 = vmatpush2.xpose.msra.mxu0 0.0
        %1492 = vmatprep.subr.mxu0 0.0
        %1493 = vmatpush2.xpose.msra.mxu0 0.0
        %1494 = vmatprep.subr.mxu0 0.0
        %1495 = vmatpush2.xpose.msra.mxu0 0.0
        %1496 = vmatprep.subr.mxu0 0.0
        %1497 = vmatpush2.xpose.msra.mxu0 0.0
        %1498 = vmatprep.subr.mxu0 0.0
        %1499 = vmatpush2.xpose.msra.mxu0 0.0
        %1500 = vmatprep.subr.mxu0 0.0
        %1501 = vmatpush2.xpose.msra.mxu0 0.0
        %1502 = vmatprep.subr.mxu0 0.0
        %1503 = vmatpush2.xpose.msra.mxu0 0.0
        %1504 = vmatprep.subr.mxu0 0.0
        %1505 = vmatpush2.xpose.msra.mxu0 0.0
        %1506 = vmatprep.subr.mxu0 0.0
        %1507 = vmatpush2.xpose.msra.mxu0 0.0
        %1508 = vmatprep.subr.mxu0 0.0
        %1509 = vmatpush2.xpose.msra.mxu0 0.0
        %1510 = vmatprep.subr.mxu0 0.0
        %1511 = vmatpush2.xpose.msra.mxu0 0.0
        %1512 = vmatprep.mubr.f32.mxu0 0.0
        %1513 = vmatmul.mubr.f32.gmra.mxu0 %v1440
        %v1514 = vpop.f32.mrf.mxu0
        %v1515 = vadd.f32 0.0, %v1514
        %v1516 = vpop.f32.mrf.mxu0
        %1517 = vmatprep.mubr.f32.mxu0 0.0
        %1518 = vmatmul.mubr.f32.gmra.mxu0 %v1442
        %v1519 = vpop.f32.mrf.mxu0
        %v1520 = vadd.f32 0.0, %v1519
        %v1521 = vpop.f32.mrf.mxu0
        %1522 = vdwg.mxu0
        %v1523 = vmul.f32 %v1515, 0.5
        %v1524 = vmul.f32 %v1520, 0.5
        %v1525 = vsel %vm764, %v1523, -inf
        %1526 = vmax.xlane.f32.xlu0 %v1525
        %v1527 = vpop.xlane.xlu0 %1526
        %v1528 = vsel %vm764, %v1524, -inf
        %1529 = vmax.xlane.f32.xlu0 %v1528
        %v1530 = vpop.xlane.xlu0 %1529
        %v1531 = vsub.f32 %v1523, %v1527
        %v1532 = vsub.f32 %v1524, %v1530
        %v1533 = vmul.f32 %v1531, 1.442695
        %v1534 = vpow.pop %v1533
        %v1535 = vmul.f32 %v1532, 1.442695
        %v1536 = vpow.pop %v1535
        %v1537 = vsel %vm764, %v1534, 0.0
        %1538 = vadd.xlane.f32.xlu0 %v1537
        %v1539 = vpop.xlane.xlu0 %1538
        %v1540 = vsel %vm764, %v1536, 0.0
        %1541 = vadd.xlane.f32.xlu0 %v1540
        %v1542 = vpop.xlane.xlu0 %1541
        %v1543 = vrcp.pop %v1539
        %v1544 = vrcp.pop %v1542
        %v1545 = vmul.f32 %v1534, %v1543
        %v1546 = vmul.f32 %v1536, %v1544
        %1547 = vrot.lane.b32.xlu0 %v1017, 56
        %v1548 = vpop.permute.xlu0 %1547
        %1549 = vrot.lane.b32.xlu0 %v1022, 56
        %v1550 = vpop.permute.xlu0 %1549
        %v1554 = vsel %vm764, %v1545, 0
        %v1557 = vsel %vm764, %v1546, 0
        %1559 = vmatprep.subr.mxu0 0.0
        %1560 = vmatpush1.msra.mxu0 0.0
        %1561 = vmatprep.subr.mxu0 0.0
        %1562 = vmatpush1.msra.mxu0 0.0
        %1563 = vmatprep.subr.mxu0 0.0
        %1564 = vmatpush1.msra.mxu0 0.0
        %1565 = vmatprep.subr.mxu0 0.0
        %1566 = vmatpush1.msra.mxu0 0.0
        %1567 = vmatprep.subr.mxu0 0.0
        %1568 = vmatpush1.msra.mxu0 0.0
        %1569 = vmatprep.subr.mxu0 0.0
        %1570 = vmatpush1.msra.mxu0 0.0
        %1571 = vmatprep.subr.mxu0 0.0
        %1572 = vmatpush1.msra.mxu0 0.0
        %1573 = vmatprep.subr.mxu0 0.0
        %1574 = vmatpush1.msra.mxu0 0.0
        %1575 = vmatprep.subr.mxu0 0.0
        %1576 = vmatpush1.msra.mxu0 0.0
        %1577 = vmatprep.subr.mxu0 0.0
        %1578 = vmatpush1.msra.mxu0 0.0
        %1579 = vmatprep.subr.mxu0 0.0
        %1580 = vmatpush1.msra.mxu0 0.0
        %1581 = vmatprep.subr.mxu0 0.0
        %1582 = vmatpush1.msra.mxu0 0.0
        %1583 = vmatprep.subr.mxu0 0.0
        %1584 = vmatpush1.msra.mxu0 0.0
        %1585 = vmatprep.subr.mxu0 0.0
        %1586 = vmatpush1.msra.mxu0 0.0
        %1587 = vmatprep.subr.mxu0 0.0
        %1588 = vmatpush1.msra.mxu0 %v1550
        %1589 = vmatprep.subr.mxu0 0.0
        %1590 = vmatpush1.msra.mxu0 %v1548
        %1591 = vmatprep.subr.mxu0 0.0
        %1592 = vmatpush2.msra.mxu0 0.0
        %1593 = vmatprep.subr.mxu0 0.0
        %1594 = vmatpush2.msra.mxu0 0.0
        %1595 = vmatprep.subr.mxu0 0.0
        %1596 = vmatpush2.msra.mxu0 0.0
        %1597 = vmatprep.subr.mxu0 0.0
        %1598 = vmatpush2.msra.mxu0 0.0
        %1599 = vmatprep.subr.mxu0 0.0
        %1600 = vmatpush2.msra.mxu0 0.0
        %1601 = vmatprep.subr.mxu0 0.0
        %1602 = vmatpush2.msra.mxu0 0.0
        %1603 = vmatprep.subr.mxu0 0.0
        %1604 = vmatpush2.msra.mxu0 0.0
        %1605 = vmatprep.subr.mxu0 0.0
        %1606 = vmatpush2.msra.mxu0 0.0
        %1607 = vmatprep.subr.mxu0 0.0
        %1608 = vmatpush2.msra.mxu0 0.0
        %1609 = vmatprep.subr.mxu0 0.0
        %1610 = vmatpush2.msra.mxu0 0.0
        %1611 = vmatprep.subr.mxu0 0.0
        %1612 = vmatpush2.msra.mxu0 0.0
        %1613 = vmatprep.subr.mxu0 0.0
        %1614 = vmatpush2.msra.mxu0 0.0
        %1615 = vmatprep.subr.mxu0 0.0
        %1616 = vmatpush2.msra.mxu0 0.0
        %1617 = vmatprep.subr.mxu0 0.0
        %1618 = vmatpush2.msra.mxu0 0.0
        %1619 = vmatprep.subr.mxu0 0.0
        %1620 = vmatpush2.msra.mxu0 0.0
        %1621 = vmatprep.subr.mxu0 0.0
        %1622 = vmatpush2.msra.mxu0 0.0
        %1623 = vmatprep.mubr.f32.mxu0 0.0
        %1624 = vmatmul.mubr.f32.gmra.mxu0 %v1554
        %v1625 = vpop.f32.mrf.mxu0
        %v1626 = vadd.f32 0.0, %v1625
        %v1627 = vpop.f32.mrf.mxu0
        %1628 = vmatprep.mubr.f32.mxu0 0.0
        %1629 = vmatmul.mubr.f32.gmra.mxu0 %v1557
        %v1630 = vpop.f32.mrf.mxu0
        %v1631 = vadd.f32 0.0, %v1630
        %v1632 = vpop.f32.mrf.mxu0
        %1633 = vdwg.mxu0
        %1634 = vrot.lane.b32.xlu0 %v1017, 116
        %v1635 = vpop.permute.xlu0 %1634
        %1636 = vrot.lane.b32.xlu0 %v1022, 116
        %v1637 = vpop.permute.xlu0 %1636
        %1638 = vrot.lane.b32.xlu0 %v1017, 84
        %v1639 = vpop.permute.xlu0 %1638
        %1640 = vrot.lane.b32.xlu0 %v1022, 84
        %v1641 = vpop.permute.xlu0 %1640
        %v1642 = vsel %vm1035, %v1635, 0
        %v1644 = vsel %vm1035, %v1637, 0
        %v1646 = vsel %vm1035, %v1639, 0
        %v1648 = vsel %vm1035, %v1641, 0
        %1650 = vmatprep.subr.mxu0 0.0
        %1651 = vmatpush1.xpose.msra.mxu0 0.0
        %1652 = vmatprep.subr.mxu0 0.0
        %1653 = vmatpush1.xpose.msra.mxu0 0.0
        %1654 = vmatprep.subr.mxu0 0.0
        %1655 = vmatpush1.xpose.msra.mxu0 0.0
        %1656 = vmatprep.subr.mxu0 0.0
        %1657 = vmatpush1.xpose.msra.mxu0 0.0
        %1658 = vmatprep.subr.mxu0 0.0
        %1659 = vmatpush1.xpose.msra.mxu0 0.0
        %1660 = vmatprep.subr.mxu0 0.0
        %1661 = vmatpush1.xpose.msra.mxu0 0.0
        %1662 = vmatprep.subr.mxu0 0.0
        %1663 = vmatpush1.xpose.msra.mxu0 0.0
        %1664 = vmatprep.subr.mxu0 0.0
        %1665 = vmatpush1.xpose.msra.mxu0 0.0
        %1666 = vmatprep.subr.mxu0 0.0
        %1667 = vmatpush1.xpose.msra.mxu0 0.0
        %1668 = vmatprep.subr.mxu0 0.0
        %1669 = vmatpush1.xpose.msra.mxu0 0.0
        %1670 = vmatprep.subr.mxu0 0.0
        %1671 = vmatpush1.xpose.msra.mxu0 0.0
        %1672 = vmatprep.subr.mxu0 0.0
        %1673 = vmatpush1.xpose.msra.mxu0 0.0
        %1674 = vmatprep.subr.mxu0 0.0
        %1675 = vmatpush1.xpose.msra.mxu0 0.0
        %1676 = vmatprep.subr.mxu0 0.0
        %1677 = vmatpush1.xpose.msra.mxu0 0.0
        %1678 = vmatprep.subr.mxu0 0.0
        %1679 = vmatpush1.xpose.msra.mxu0 %v1648
        %1680 = vmatprep.subr.mxu0 0.0
        %1681 = vmatpush1.xpose.msra.mxu0 %v1646
        %1682 = vmatprep.subr.mxu0 0.0
        %1683 = vmatpush2.xpose.msra.mxu0 0.0
        %1684 = vmatprep.subr.mxu0 0.0
        %1685 = vmatpush2.xpose.msra.mxu0 0.0
        %1686 = vmatprep.subr.mxu0 0.0
        %1687 = vmatpush2.xpose.msra.mxu0 0.0
        %1688 = vmatprep.subr.mxu0 0.0
        %1689 = vmatpush2.xpose.msra.mxu0 0.0
        %1690 = vmatprep.subr.mxu0 0.0
        %1691 = vmatpush2.xpose.msra.mxu0 0.0
        %1692 = vmatprep.subr.mxu0 0.0
        %1693 = vmatpush2.xpose.msra.mxu0 0.0
        %1694 = vmatprep.subr.mxu0 0.0
        %1695 = vmatpush2.xpose.msra.mxu0 0.0
        %1696 = vmatprep.subr.mxu0 0.0
        %1697 = vmatpush2.xpose.msra.mxu0 0.0
        %1698 = vmatprep.subr.mxu0 0.0
        %1699 = vmatpush2.xpose.msra.mxu0 0.0
        %1700 = vmatprep.subr.mxu0 0.0
        %1701 = vmatpush2.xpose.msra.mxu0 0.0
        %1702 = vmatprep.subr.mxu0 0.0
        %1703 = vmatpush2.xpose.msra.mxu0 0.0
        %1704 = vmatprep.subr.mxu0 0.0
        %1705 = vmatpush2.xpose.msra.mxu0 0.0
        %1706 = vmatprep.subr.mxu0 0.0
        %1707 = vmatpush2.xpose.msra.mxu0 0.0
        %1708 = vmatprep.subr.mxu0 0.0
        %1709 = vmatpush2.xpose.msra.mxu0 0.0
        %1710 = vmatprep.subr.mxu0 0.0
        %1711 = vmatpush2.xpose.msra.mxu0 0.0
        %1712 = vmatprep.subr.mxu0 0.0
        %1713 = vmatpush2.xpose.msra.mxu0 0.0
        %1714 = vmatprep.mubr.f32.mxu0 0.0
        %1715 = vmatmul.mubr.f32.gmra.mxu0 %v1642
        %v1716 = vpop.f32.mrf.mxu0
        %v1717 = vadd.f32 0.0, %v1716
        %v1718 = vpop.f32.mrf.mxu0
        %1719 = vmatprep.mubr.f32.mxu0 0.0
        %1720 = vmatmul.mubr.f32.gmra.mxu0 %v1644
        %v1721 = vpop.f32.mrf.mxu0
        %v1722 = vadd.f32 0.0, %v1721
        %v1723 = vpop.f32.mrf.mxu0
        %1724 = vdwg.mxu0
        %v1725 = vmul.f32 %v1717, 0.5
        %v1726 = vmul.f32 %v1722, 0.5
        %v1727 = vsel %vm764, %v1725, -inf
        %1728 = vmax.xlane.f32.xlu0 %v1727
        %v1729 = vpop.xlane.xlu0 %1728
        %v1730 = vsel %vm764, %v1726, -inf
        %1731 = vmax.xlane.f32.xlu0 %v1730
        %v1732 = vpop.xlane.xlu0 %1731
        %v1733 = vsub.f32 %v1725, %v1729
        %v1734 = vsub.f32 %v1726, %v1732
        %v1735 = vmul.f32 %v1733, 1.442695
        %v1736 = vpow.pop %v1735
        %v1737 = vmul.f32 %v1734, 1.442695
        %v1738 = vpow.pop %v1737
        %v1739 = vsel %vm764, %v1736, 0.0
        %1740 = vadd.xlane.f32.xlu0 %v1739
        %v1741 = vpop.xlane.xlu0 %1740
        %v1742 = vsel %vm764, %v1738, 0.0
        %1743 = vadd.xlane.f32.xlu0 %v1742
        %v1744 = vpop.xlane.xlu0 %1743
        %v1745 = vrcp.pop %v1741
        %v1746 = vrcp.pop %v1744
        %v1747 = vmul.f32 %v1736, %v1745
        %v1748 = vmul.f32 %v1738, %v1746
        %1749 = vrot.lane.b32.xlu0 %v1017, 52
        %v1750 = vpop.permute.xlu0 %1749
        %1751 = vrot.lane.b32.xlu0 %v1022, 52
        %v1752 = vpop.permute.xlu0 %1751
        %v1756 = vsel %vm764, %v1747, 0
        %v1759 = vsel %vm764, %v1748, 0
        %1761 = vmatprep.subr.mxu0 0.0
        %1762 = vmatpush1.msra.mxu0 0.0
        %1763 = vmatprep.subr.mxu0 0.0
        %1764 = vmatpush1.msra.mxu0 0.0
        %1765 = vmatprep.subr.mxu0 0.0
        %1766 = vmatpush1.msra.mxu0 0.0
        %1767 = vmatprep.subr.mxu0 0.0
        %1768 = vmatpush1.msra.mxu0 0.0
        %1769 = vmatprep.subr.mxu0 0.0
        %1770 = vmatpush1.msra.mxu0 0.0
        %1771 = vmatprep.subr.mxu0 0.0
        %1772 = vmatpush1.msra.mxu0 0.0
        %1773 = vmatprep.subr.mxu0 0.0
        %1774 = vmatpush1.msra.mxu0 0.0
        %1775 = vmatprep.subr.mxu0 0.0
        %1776 = vmatpush1.msra.mxu0 0.0
        %1777 = vmatprep.subr.mxu0 0.0
        %1778 = vmatpush1.msra.mxu0 0.0
        %1779 = vmatprep.subr.mxu0 0.0
        %1780 = vmatpush1.msra.mxu0 0.0
        %1781 = vmatprep.subr.mxu0 0.0
        %1782 = vmatpush1.msra.mxu0 0.0
        %1783 = vmatprep.subr.mxu0 0.0
        %1784 = vmatpush1.msra.mxu0 0.0
        %1785 = vmatprep.subr.mxu0 0.0
        %1786 = vmatpush1.msra.mxu0 0.0
        %1787 = vmatprep.subr.mxu0 0.0
        %1788 = vmatpush1.msra.mxu0 0.0
        %1789 = vmatprep.subr.mxu0 0.0
        %1790 = vmatpush1.msra.mxu0 %v1752
        %1791 = vmatprep.subr.mxu0 0.0
        %1792 = vmatpush1.msra.mxu0 %v1750
        %1793 = vmatprep.subr.mxu0 0.0
        %1794 = vmatpush2.msra.mxu0 0.0
        %1795 = vmatprep.subr.mxu0 0.0
        %1796 = vmatpush2.msra.mxu0 0.0
        %1797 = vmatprep.subr.mxu0 0.0
        %1798 = vmatpush2.msra.mxu0 0.0
        %1799 = vmatprep.subr.mxu0 0.0
        %1800 = vmatpush2.msra.mxu0 0.0
        %1801 = vmatprep.subr.mxu0 0.0
        %1802 = vmatpush2.msra.mxu0 0.0
        %1803 = vmatprep.subr.mxu0 0.0
        %1804 = vmatpush2.msra.mxu0 0.0
        %1805 = vmatprep.subr.mxu0 0.0
        %1806 = vmatpush2.msra.mxu0 0.0
        %1807 = vmatprep.subr.mxu0 0.0
        %1808 = vmatpush2.msra.mxu0 0.0
        %1809 = vmatprep.subr.mxu0 0.0
        %1810 = vmatpush2.msra.mxu0 0.0
        %1811 = vmatprep.subr.mxu0 0.0
        %1812 = vmatpush2.msra.mxu0 0.0
        %1813 = vmatprep.subr.mxu0 0.0
        %1814 = vmatpush2.msra.mxu0 0.0
        %1815 = vmatprep.subr.mxu0 0.0
        %1816 = vmatpush2.msra.mxu0 0.0
        %1817 = vmatprep.subr.mxu0 0.0
        %1818 = vmatpush2.msra.mxu0 0.0
        %1819 = vmatprep.subr.mxu0 0.0
        %1820 = vmatpush2.msra.mxu0 0.0
        %1821 = vmatprep.subr.mxu0 0.0
        %1822 = vmatpush2.msra.mxu0 0.0
        %1823 = vmatprep.subr.mxu0 0.0
        %1824 = vmatpush2.msra.mxu0 0.0
        %1825 = vmatprep.mubr.f32.mxu0 0.0
        %1826 = vmatmul.mubr.f32.gmra.mxu0 %v1756
        %v1827 = vpop.f32.mrf.mxu0
        %v1828 = vadd.f32 0.0, %v1827
        %v1829 = vpop.f32.mrf.mxu0
        %1830 = vmatprep.mubr.f32.mxu0 0.0
        %1831 = vmatmul.mubr.f32.gmra.mxu0 %v1759
        %v1832 = vpop.f32.mrf.mxu0
        %v1833 = vadd.f32 0.0, %v1832
        %v1834 = vpop.f32.mrf.mxu0
        %1835 = vdwg.mxu0
        %1836 = vrot.lane.b32.xlu0 %v1017, 112
        %v1837 = vpop.permute.xlu0 %1836
        %1838 = vrot.lane.b32.xlu0 %v1022, 112
        %v1839 = vpop.permute.xlu0 %1838
        %1840 = vrot.lane.b32.xlu0 %v1017, 80
        %v1841 = vpop.permute.xlu0 %1840
        %1842 = vrot.lane.b32.xlu0 %v1022, 80
        %v1843 = vpop.permute.xlu0 %1842
        %v1844 = vsel %vm1035, %v1837, 0
        %v1846 = vsel %vm1035, %v1839, 0
        %v1848 = vsel %vm1035, %v1841, 0
        %v1850 = vsel %vm1035, %v1843, 0
        %1852 = vmatprep.subr.mxu0 0.0
        %1853 = vmatpush1.xpose.msra.mxu0 0.0
        %1854 = vmatprep.subr.mxu0 0.0
        %1855 = vmatpush1.xpose.msra.mxu0 0.0
        %1856 = vmatprep.subr.mxu0 0.0
        %1857 = vmatpush1.xpose.msra.mxu0 0.0
        %1858 = vmatprep.subr.mxu0 0.0
        %1859 = vmatpush1.xpose.msra.mxu0 0.0
        %1860 = vmatprep.subr.mxu0 0.0
        %1861 = vmatpush1.xpose.msra.mxu0 0.0
        %1862 = vmatprep.subr.mxu0 0.0
        %1863 = vmatpush1.xpose.msra.mxu0 0.0
        %1864 = vmatprep.subr.mxu0 0.0
        %1865 = vmatpush1.xpose.msra.mxu0 0.0
        %1866 = vmatprep.subr.mxu0 0.0
        %1867 = vmatpush1.xpose.msra.mxu0 0.0
        %1868 = vmatprep.subr.mxu0 0.0
        %1869 = vmatpush1.xpose.msra.mxu0 0.0
        %1870 = vmatprep.subr.mxu0 0.0
        %1871 = vmatpush1.xpose.msra.mxu0 0.0
        %1872 = vmatprep.subr.mxu0 0.0
        %1873 = vmatpush1.xpose.msra.mxu0 0.0
        %1874 = vmatprep.subr.mxu0 0.0
        %1875 = vmatpush1.xpose.msra.mxu0 0.0
        %1876 = vmatprep.subr.mxu0 0.0
        %1877 = vmatpush1.xpose.msra.mxu0 0.0
        %1878 = vmatprep.subr.mxu0 0.0
        %1879 = vmatpush1.xpose.msra.mxu0 0.0
        %1880 = vmatprep.subr.mxu0 0.0
        %1881 = vmatpush1.xpose.msra.mxu0 %v1850
        %1882 = vmatprep.subr.mxu0 0.0
        %1883 = vmatpush1.xpose.msra.mxu0 %v1848
        %1884 = vmatprep.subr.mxu0 0.0
        %1885 = vmatpush2.xpose.msra.mxu0 0.0
        %1886 = vmatprep.subr.mxu0 0.0
        %1887 = vmatpush2.xpose.msra.mxu0 0.0
        %1888 = vmatprep.subr.mxu0 0.0
        %1889 = vmatpush2.xpose.msra.mxu0 0.0
        %1890 = vmatprep.subr.mxu0 0.0
        %1891 = vmatpush2.xpose.msra.mxu0 0.0
        %1892 = vmatprep.subr.mxu0 0.0
        %1893 = vmatpush2.xpose.msra.mxu0 0.0
        %1894 = vmatprep.subr.mxu0 0.0
        %1895 = vmatpush2.xpose.msra.mxu0 0.0
        %1896 = vmatprep.subr.mxu0 0.0
        %1897 = vmatpush2.xpose.msra.mxu0 0.0
        %1898 = vmatprep.subr.mxu0 0.0
        %1899 = vmatpush2.xpose.msra.mxu0 0.0
        %1900 = vmatprep.subr.mxu0 0.0
        %1901 = vmatpush2.xpose.msra.mxu0 0.0
        %1902 = vmatprep.subr.mxu0 0.0
        %1903 = vmatpush2.xpose.msra.mxu0 0.0
        %1904 = vmatprep.subr.mxu0 0.0
        %1905 = vmatpush2.xpose.msra.mxu0 0.0
        %1906 = vmatprep.subr.mxu0 0.0
        %1907 = vmatpush2.xpose.msra.mxu0 0.0
        %1908 = vmatprep.subr.mxu0 0.0
        %1909 = vmatpush2.xpose.msra.mxu0 0.0
        %1910 = vmatprep.subr.mxu0 0.0
        %1911 = vmatpush2.xpose.msra.mxu0 0.0
        %1912 = vmatprep.subr.mxu0 0.0
        %1913 = vmatpush2.xpose.msra.mxu0 0.0
        %1914 = vmatprep.subr.mxu0 0.0
        %1915 = vmatpush2.xpose.msra.mxu0 0.0
        %1916 = vmatprep.mubr.f32.mxu0 0.0
        %1917 = vmatmul.mubr.f32.gmra.mxu0 %v1844
        %v1918 = vpop.f32.mrf.mxu0
        %v1919 = vadd.f32 0.0, %v1918
        %v1920 = vpop.f32.mrf.mxu0
        %1921 = vmatprep.mubr.f32.mxu0 0.0
        %1922 = vmatmul.mubr.f32.gmra.mxu0 %v1846
        %v1923 = vpop.f32.mrf.mxu0
        %v1924 = vadd.f32 0.0, %v1923
        %v1925 = vpop.f32.mrf.mxu0
        %1926 = vdwg.mxu0
        %v1927 = vmul.f32 %v1919, 0.5
        %v1928 = vmul.f32 %v1924, 0.5
        %v1929 = vsel %vm764, %v1927, -inf
        %1930 = vmax.xlane.f32.xlu0 %v1929
        %v1931 = vpop.xlane.xlu0 %1930
        %v1932 = vsel %vm764, %v1928, -inf
        %1933 = vmax.xlane.f32.xlu0 %v1932
        %v1934 = vpop.xlane.xlu0 %1933
        %v1935 = vsub.f32 %v1927, %v1931
        %v1936 = vsub.f32 %v1928, %v1934
        %v1937 = vmul.f32 %v1935, 1.442695
        %v1938 = vpow.pop %v1937
        %v1939 = vmul.f32 %v1936, 1.442695
        %v1940 = vpow.pop %v1939
        %v1941 = vsel %vm764, %v1938, 0.0
        %1942 = vadd.xlane.f32.xlu0 %v1941
        %v1943 = vpop.xlane.xlu0 %1942
        %v1944 = vsel %vm764, %v1940, 0.0
        %1945 = vadd.xlane.f32.xlu0 %v1944
        %v1946 = vpop.xlane.xlu0 %1945
        %v1947 = vrcp.pop %v1943
        %v1948 = vrcp.pop %v1946
        %v1949 = vmul.f32 %v1938, %v1947
        %v1950 = vmul.f32 %v1940, %v1948
        %1951 = vrot.lane.b32.xlu0 %v1017, 48
        %v1952 = vpop.permute.xlu0 %1951
        %1953 = vrot.lane.b32.xlu0 %v1022, 48
        %v1954 = vpop.permute.xlu0 %1953
        %v1958 = vsel %vm764, %v1949, 0
        %v1961 = vsel %vm764, %v1950, 0
        %1963 = vmatprep.subr.mxu0 0.0
        %1964 = vmatpush1.msra.mxu0 0.0
        %1965 = vmatprep.subr.mxu0 0.0
        %1966 = vmatpush1.msra.mxu0 0.0
        %1967 = vmatprep.subr.mxu0 0.0
        %1968 = vmatpush1.msra.mxu0 0.0
        %1969 = vmatprep.subr.mxu0 0.0
        %1970 = vmatpush1.msra.mxu0 0.0
        %1971 = vmatprep.subr.mxu0 0.0
        %1972 = vmatpush1.msra.mxu0 0.0
        %1973 = vmatprep.subr.mxu0 0.0
        %1974 = vmatpush1.msra.mxu0 0.0
        %1975 = vmatprep.subr.mxu0 0.0
        %1976 = vmatpush1.msra.mxu0 0.0
        %1977 = vmatprep.subr.mxu0 0.0
        %1978 = vmatpush1.msra.mxu0 0.0
        %1979 = vmatprep.subr.mxu0 0.0
        %1980 = vmatpush1.msra.mxu0 0.0
        %1981 = vmatprep.subr.mxu0 0.0
        %1982 = vmatpush1.msra.mxu0 0.0
        %1983 = vmatprep.subr.mxu0 0.0
        %1984 = vmatpush1.msra.mxu0 0.0
        %1985 = vmatprep.subr.mxu0 0.0
        %1986 = vmatpush1.msra.mxu0 0.0
        %1987 = vmatprep.subr.mxu0 0.0
        %1988 = vmatpush1.msra.mxu0 0.0
        %1989 = vmatprep.subr.mxu0 0.0
        %1990 = vmatpush1.msra.mxu0 0.0
        %1991 = vmatprep.subr.mxu0 0.0
        %1992 = vmatpush1.msra.mxu0 %v1954
        %1993 = vmatprep.subr.mxu0 0.0
        %1994 = vmatpush1.msra.mxu0 %v1952
        %1995 = vmatprep.subr.mxu0 0.0
        %1996 = vmatpush2.msra.mxu0 0.0
        %1997 = vmatprep.subr.mxu0 0.0
        %1998 = vmatpush2.msra.mxu0 0.0
        %1999 = vmatprep.subr.mxu0 0.0
        %2000 = vmatpush2.msra.mxu0 0.0
        %2001 = vmatprep.subr.mxu0 0.0
        %2002 = vmatpush2.msra.mxu0 0.0
        %2003 = vmatprep.subr.mxu0 0.0
        %2004 = vmatpush2.msra.mxu0 0.0
        %2005 = vmatprep.subr.mxu0 0.0
        %2006 = vmatpush2.msra.mxu0 0.0
        %2007 = vmatprep.subr.mxu0 0.0
        %2008 = vmatpush2.msra.mxu0 0.0
        %2009 = vmatprep.subr.mxu0 0.0
        %2010 = vmatpush2.msra.mxu0 0.0
        %2011 = vmatprep.subr.mxu0 0.0
        %2012 = vmatpush2.msra.mxu0 0.0
        %2013 = vmatprep.subr.mxu0 0.0
        %2014 = vmatpush2.msra.mxu0 0.0
        %2015 = vmatprep.subr.mxu0 0.0
        %2016 = vmatpush2.msra.mxu0 0.0
        %2017 = vmatprep.subr.mxu0 0.0
        %2018 = vmatpush2.msra.mxu0 0.0
        %2019 = vmatprep.subr.mxu0 0.0
        %2020 = vmatpush2.msra.mxu0 0.0
        %2021 = vmatprep.subr.mxu0 0.0
        %2022 = vmatpush2.msra.mxu0 0.0
        %2023 = vmatprep.subr.mxu0 0.0
        %2024 = vmatpush2.msra.mxu0 0.0
        %2025 = vmatprep.subr.mxu0 0.0
        %2026 = vmatpush2.msra.mxu0 0.0
        %2027 = vmatprep.mubr.f32.mxu0 0.0
        %2028 = vmatmul.mubr.f32.gmra.mxu0 %v1958
        %v2029 = vpop.f32.mrf.mxu0
        %v2030 = vadd.f32 0.0, %v2029
        %v2031 = vpop.f32.mrf.mxu0
        %2032 = vmatprep.mubr.f32.mxu0 0.0
        %2033 = vmatmul.mubr.f32.gmra.mxu0 %v1961
        %v2034 = vpop.f32.mrf.mxu0
        %v2035 = vadd.f32 0.0, %v2034
        %v2036 = vpop.f32.mrf.mxu0
        %2037 = vdwg.mxu0
        %2038 = vrot.lane.b32.xlu0 %v1017, 108
        %v2039 = vpop.permute.xlu0 %2038
        %2040 = vrot.lane.b32.xlu0 %v1022, 108
        %v2041 = vpop.permute.xlu0 %2040
        %2042 = vrot.lane.b32.xlu0 %v1017, 76
        %v2043 = vpop.permute.xlu0 %2042
        %2044 = vrot.lane.b32.xlu0 %v1022, 76
        %v2045 = vpop.permute.xlu0 %2044
        %v2046 = vsel %vm1035, %v2039, 0
        %v2048 = vsel %vm1035, %v2041, 0
        %v2050 = vsel %vm1035, %v2043, 0
        %v2052 = vsel %vm1035, %v2045, 0
        %2054 = vmatprep.subr.mxu0 0.0
        %2055 = vmatpush1.xpose.msra.mxu0 0.0
        %2056 = vmatprep.subr.mxu0 0.0
        %2057 = vmatpush1.xpose.msra.mxu0 0.0
        %2058 = vmatprep.subr.mxu0 0.0
        %2059 = vmatpush1.xpose.msra.mxu0 0.0
        %2060 = vmatprep.subr.mxu0 0.0
        %2061 = vmatpush1.xpose.msra.mxu0 0.0
        %2062 = vmatprep.subr.mxu0 0.0
        %2063 = vmatpush1.xpose.msra.mxu0 0.0
        %2064 = vmatprep.subr.mxu0 0.0
        %2065 = vmatpush1.xpose.msra.mxu0 0.0
        %2066 = vmatprep.subr.mxu0 0.0
        %2067 = vmatpush1.xpose.msra.mxu0 0.0
        %2068 = vmatprep.subr.mxu0 0.0
        %2069 = vmatpush1.xpose.msra.mxu0 0.0
        %2070 = vmatprep.subr.mxu0 0.0
        %2071 = vmatpush1.xpose.msra.mxu0 0.0
        %2072 = vmatprep.subr.mxu0 0.0
        %2073 = vmatpush1.xpose.msra.mxu0 0.0
        %2074 = vmatprep.subr.mxu0 0.0
        %2075 = vmatpush1.xpose.msra.mxu0 0.0
        %2076 = vmatprep.subr.mxu0 0.0
        %2077 = vmatpush1.xpose.msra.mxu0 0.0
        %2078 = vmatprep.subr.mxu0 0.0
        %2079 = vmatpush1.xpose.msra.mxu0 0.0
        %2080 = vmatprep.subr.mxu0 0.0
        %2081 = vmatpush1.xpose.msra.mxu0 0.0
        %2082 = vmatprep.subr.mxu0 0.0
        %2083 = vmatpush1.xpose.msra.mxu0 %v2052
        %2084 = vmatprep.subr.mxu0 0.0
        %2085 = vmatpush1.xpose.msra.mxu0 %v2050
        %2086 = vmatprep.subr.mxu0 0.0
        %2087 = vmatpush2.xpose.msra.mxu0 0.0
        %2088 = vmatprep.subr.mxu0 0.0
        %2089 = vmatpush2.xpose.msra.mxu0 0.0
        %2090 = vmatprep.subr.mxu0 0.0
        %2091 = vmatpush2.xpose.msra.mxu0 0.0
        %2092 = vmatprep.subr.mxu0 0.0
        %2093 = vmatpush2.xpose.msra.mxu0 0.0
        %2094 = vmatprep.subr.mxu0 0.0
        %2095 = vmatpush2.xpose.msra.mxu0 0.0
        %2096 = vmatprep.subr.mxu0 0.0
        %2097 = vmatpush2.xpose.msra.mxu0 0.0
        %2098 = vmatprep.subr.mxu0 0.0
        %2099 = vmatpush2.xpose.msra.mxu0 0.0
        %2100 = vmatprep.subr.mxu0 0.0
        %2101 = vmatpush2.xpose.msra.mxu0 0.0
        %2102 = vmatprep.subr.mxu0 0.0
        %2103 = vmatpush2.xpose.msra.mxu0 0.0
        %2104 = vmatprep.subr.mxu0 0.0
        %2105 = vmatpush2.xpose.msra.mxu0 0.0
        %2106 = vmatprep.subr.mxu0 0.0
        %2107 = vmatpush2.xpose.msra.mxu0 0.0
        %2108 = vmatprep.subr.mxu0 0.0
        %2109 = vmatpush2.xpose.msra.mxu0 0.0
        %2110 = vmatprep.subr.mxu0 0.0
        %2111 = vmatpush2.xpose.msra.mxu0 0.0
        %2112 = vmatprep.subr.mxu0 0.0
        %2113 = vmatpush2.xpose.msra.mxu0 0.0
        %2114 = vmatprep.subr.mxu0 0.0
        %2115 = vmatpush2.xpose.msra.mxu0 0.0
        %2116 = vmatprep.subr.mxu0 0.0
        %2117 = vmatpush2.xpose.msra.mxu0 0.0
        %2118 = vmatprep.mubr.f32.mxu0 0.0
        %2119 = vmatmul.mubr.f32.gmra.mxu0 %v2046
        %v2120 = vpop.f32.mrf.mxu0
        %v2121 = vadd.f32 0.0, %v2120
        %v2122 = vpop.f32.mrf.mxu0
        %2123 = vmatprep.mubr.f32.mxu0 0.0
        %2124 = vmatmul.mubr.f32.gmra.mxu0 %v2048
        %v2125 = vpop.f32.mrf.mxu0
        %v2126 = vadd.f32 0.0, %v2125
        %v2127 = vpop.f32.mrf.mxu0
        %2128 = vdwg.mxu0
        %v2129 = vmul.f32 %v2121, 0.5
        %v2130 = vmul.f32 %v2126, 0.5
        %v2131 = vsel %vm764, %v2129, -inf
        %2132 = vmax.xlane.f32.xlu0 %v2131
        %v2133 = vpop.xlane.xlu0 %2132
        %v2134 = vsel %vm764, %v2130, -inf
        %2135 = vmax.xlane.f32.xlu0 %v2134
        %v2136 = vpop.xlane.xlu0 %2135
        %v2137 = vsub.f32 %v2129, %v2133
        %v2138 = vsub.f32 %v2130, %v2136
        %v2139 = vmul.f32 %v2137, 1.442695
        %v2140 = vpow.pop %v2139
        %v2141 = vmul.f32 %v2138, 1.442695
        %v2142 = vpow.pop %v2141
        %v2143 = vsel %vm764, %v2140, 0.0
        %2144 = vadd.xlane.f32.xlu0 %v2143
        %v2145 = vpop.xlane.xlu0 %2144
        %v2146 = vsel %vm764, %v2142, 0.0
        %2147 = vadd.xlane.f32.xlu0 %v2146
        %v2148 = vpop.xlane.xlu0 %2147
        %v2149 = vrcp.pop %v2145
        %v2150 = vrcp.pop %v2148
        %v2151 = vmul.f32 %v2140, %v2149
        %v2152 = vmul.f32 %v2142, %v2150
        %2153 = vrot.lane.b32.xlu0 %v1017, 44
        %v2154 = vpop.permute.xlu0 %2153
        %2155 = vrot.lane.b32.xlu0 %v1022, 44
        %v2156 = vpop.permute.xlu0 %2155
        %v2160 = vsel %vm764, %v2151, 0
        %v2163 = vsel %vm764, %v2152, 0
        %2165 = vmatprep.subr.mxu0 0.0
        %2166 = vmatpush1.msra.mxu0 0.0
        %2167 = vmatprep.subr.mxu0 0.0
        %2168 = vmatpush1.msra.mxu0 0.0
        %2169 = vmatprep.subr.mxu0 0.0
        %2170 = vmatpush1.msra.mxu0 0.0
        %2171 = vmatprep.subr.mxu0 0.0
        %2172 = vmatpush1.msra.mxu0 0.0
        %2173 = vmatprep.subr.mxu0 0.0
        %2174 = vmatpush1.msra.mxu0 0.0
        %2175 = vmatprep.subr.mxu0 0.0
        %2176 = vmatpush1.msra.mxu0 0.0
        %2177 = vmatprep.subr.mxu0 0.0
        %2178 = vmatpush1.msra.mxu0 0.0
        %2179 = vmatprep.subr.mxu0 0.0
        %2180 = vmatpush1.msra.mxu0 0.0
        %2181 = vmatprep.subr.mxu0 0.0
        %2182 = vmatpush1.msra.mxu0 0.0
        %2183 = vmatprep.subr.mxu0 0.0
        %2184 = vmatpush1.msra.mxu0 0.0
        %2185 = vmatprep.subr.mxu0 0.0
        %2186 = vmatpush1.msra.mxu0 0.0
        %2187 = vmatprep.subr.mxu0 0.0
        %2188 = vmatpush1.msra.mxu0 0.0
        %2189 = vmatprep.subr.mxu0 0.0
        %2190 = vmatpush1.msra.mxu0 0.0
        %2191 = vmatprep.subr.mxu0 0.0
        %2192 = vmatpush1.msra.mxu0 0.0
        %2193 = vmatprep.subr.mxu0 0.0
        %2194 = vmatpush1.msra.mxu0 %v2156
        %2195 = vmatprep.subr.mxu0 0.0
        %2196 = vmatpush1.msra.mxu0 %v2154
        %2197 = vmatprep.subr.mxu0 0.0
        %2198 = vmatpush2.msra.mxu0 0.0
        %2199 = vmatprep.subr.mxu0 0.0
        %2200 = vmatpush2.msra.mxu0 0.0
        %2201 = vmatprep.subr.mxu0 0.0
        %2202 = vmatpush2.msra.mxu0 0.0
        %2203 = vmatprep.subr.mxu0 0.0
        %2204 = vmatpush2.msra.mxu0 0.0
        %2205 = vmatprep.subr.mxu0 0.0
        %2206 = vmatpush2.msra.mxu0 0.0
        %2207 = vmatprep.subr.mxu0 0.0
        %2208 = vmatpush2.msra.mxu0 0.0
        %2209 = vmatprep.subr.mxu0 0.0
        %2210 = vmatpush2.msra.mxu0 0.0
        %2211 = vmatprep.subr.mxu0 0.0
        %2212 = vmatpush2.msra.mxu0 0.0
        %2213 = vmatprep.subr.mxu0 0.0
        %2214 = vmatpush2.msra.mxu0 0.0
        %2215 = vmatprep.subr.mxu0 0.0
        %2216 = vmatpush2.msra.mxu0 0.0
        %2217 = vmatprep.subr.mxu0 0.0
        %2218 = vmatpush2.msra.mxu0 0.0
        %2219 = vmatprep.subr.mxu0 0.0
        %2220 = vmatpush2.msra.mxu0 0.0
        %2221 = vmatprep.subr.mxu0 0.0
        %2222 = vmatpush2.msra.mxu0 0.0
        %2223 = vmatprep.subr.mxu0 0.0
        %2224 = vmatpush2.msra.mxu0 0.0
        %2225 = vmatprep.subr.mxu0 0.0
        %2226 = vmatpush2.msra.mxu0 0.0
        %2227 = vmatprep.subr.mxu0 0.0
        %2228 = vmatpush2.msra.mxu0 0.0
        %2229 = vmatprep.mubr.f32.mxu0 0.0
        %2230 = vmatmul.mubr.f32.gmra.mxu0 %v2160
        %v2231 = vpop.f32.mrf.mxu0
        %v2232 = vadd.f32 0.0, %v2231
        %v2233 = vpop.f32.mrf.mxu0
        %2234 = vmatprep.mubr.f32.mxu0 0.0
        %2235 = vmatmul.mubr.f32.gmra.mxu0 %v2163
        %v2236 = vpop.f32.mrf.mxu0
        %v2237 = vadd.f32 0.0, %v2236
        %v2238 = vpop.f32.mrf.mxu0
        %2239 = vdwg.mxu0
        %2240 = vrot.lane.b32.xlu0 %v1017, 104
        %v2241 = vpop.permute.xlu0 %2240
        %2242 = vrot.lane.b32.xlu0 %v1022, 104
        %v2243 = vpop.permute.xlu0 %2242
        %2244 = vrot.lane.b32.xlu0 %v1017, 72
        %v2245 = vpop.permute.xlu0 %2244
        %2246 = vrot.lane.b32.xlu0 %v1022, 72
        %v2247 = vpop.permute.xlu0 %2246
        %v2248 = vsel %vm1035, %v2241, 0
        %v2250 = vsel %vm1035, %v2243, 0
        %v2252 = vsel %vm1035, %v2245, 0
        %v2254 = vsel %vm1035, %v2247, 0
        %2256 = vmatprep.subr.mxu0 0.0
        %2257 = vmatpush1.xpose.msra.mxu0 0.0
        %2258 = vmatprep.subr.mxu0 0.0
        %2259 = vmatpush1.xpose.msra.mxu0 0.0
        %2260 = vmatprep.subr.mxu0 0.0
        %2261 = vmatpush1.xpose.msra.mxu0 0.0
        %2262 = vmatprep.subr.mxu0 0.0
        %2263 = vmatpush1.xpose.msra.mxu0 0.0
        %2264 = vmatprep.subr.mxu0 0.0
        %2265 = vmatpush1.xpose.msra.mxu0 0.0
        %2266 = vmatprep.subr.mxu0 0.0
        %2267 = vmatpush1.xpose.msra.mxu0 0.0
        %2268 = vmatprep.subr.mxu0 0.0
        %2269 = vmatpush1.xpose.msra.mxu0 0.0
        %2270 = vmatprep.subr.mxu0 0.0
        %2271 = vmatpush1.xpose.msra.mxu0 0.0
        %2272 = vmatprep.subr.mxu0 0.0
        %2273 = vmatpush1.xpose.msra.mxu0 0.0
        %2274 = vmatprep.subr.mxu0 0.0
        %2275 = vmatpush1.xpose.msra.mxu0 0.0
        %2276 = vmatprep.subr.mxu0 0.0
        %2277 = vmatpush1.xpose.msra.mxu0 0.0
        %2278 = vmatprep.subr.mxu0 0.0
        %2279 = vmatpush1.xpose.msra.mxu0 0.0
        %2280 = vmatprep.subr.mxu0 0.0
        %2281 = vmatpush1.xpose.msra.mxu0 0.0
        %2282 = vmatprep.subr.mxu0 0.0
        %2283 = vmatpush1.xpose.msra.mxu0 0.0
        %2284 = vmatprep.subr.mxu0 0.0
        %2285 = vmatpush1.xpose.msra.mxu0 %v2254
        %2286 = vmatprep.subr.mxu0 0.0
        %2287 = vmatpush1.xpose.msra.mxu0 %v2252
        %2288 = vmatprep.subr.mxu0 0.0
        %2289 = vmatpush2.xpose.msra.mxu0 0.0
        %2290 = vmatprep.subr.mxu0 0.0
        %2291 = vmatpush2.xpose.msra.mxu0 0.0
        %2292 = vmatprep.subr.mxu0 0.0
        %2293 = vmatpush2.xpose.msra.mxu0 0.0
        %2294 = vmatprep.subr.mxu0 0.0
        %2295 = vmatpush2.xpose.msra.mxu0 0.0
        %2296 = vmatprep.subr.mxu0 0.0
        %2297 = vmatpush2.xpose.msra.mxu0 0.0
        %2298 = vmatprep.subr.mxu0 0.0
        %2299 = vmatpush2.xpose.msra.mxu0 0.0
        %2300 = vmatprep.subr.mxu0 0.0
        %2301 = vmatpush2.xpose.msra.mxu0 0.0
        %2302 = vmatprep.subr.mxu0 0.0
        %2303 = vmatpush2.xpose.msra.mxu0 0.0
        %2304 = vmatprep.subr.mxu0 0.0
        %2305 = vmatpush2.xpose.msra.mxu0 0.0
        %2306 = vmatprep.subr.mxu0 0.0
        %2307 = vmatpush2.xpose.msra.mxu0 0.0
        %2308 = vmatprep.subr.mxu0 0.0
        %2309 = vmatpush2.xpose.msra.mxu0 0.0
        %2310 = vmatprep.subr.mxu0 0.0
        %2311 = vmatpush2.xpose.msra.mxu0 0.0
        %2312 = vmatprep.subr.mxu0 0.0
        %2313 = vmatpush2.xpose.msra.mxu0 0.0
        %2314 = vmatprep.subr.mxu0 0.0
        %2315 = vmatpush2.xpose.msra.mxu0 0.0
        %2316 = vmatprep.subr.mxu0 0.0
        %2317 = vmatpush2.xpose.msra.mxu0 0.0
        %2318 = vmatprep.subr.mxu0 0.0
        %2319 = vmatpush2.xpose.msra.mxu0 0.0
        %2320 = vmatprep.mubr.f32.mxu0 0.0
        %2321 = vmatmul.mubr.f32.gmra.mxu0 %v2248
        %v2322 = vpop.f32.mrf.mxu0
        %v2323 = vadd.f32 0.0, %v2322
        %v2324 = vpop.f32.mrf.mxu0
        %2325 = vmatprep.mubr.f32.mxu0 0.0
        %2326 = vmatmul.mubr.f32.gmra.mxu0 %v2250
        %v2327 = vpop.f32.mrf.mxu0
        %v2328 = vadd.f32 0.0, %v2327
        %v2329 = vpop.f32.mrf.mxu0
        %2330 = vdwg.mxu0
        %v2331 = vmul.f32 %v2323, 0.5
        %v2332 = vmul.f32 %v2328, 0.5
        %v2333 = vsel %vm764, %v2331, -inf
        %2334 = vmax.xlane.f32.xlu0 %v2333
        %v2335 = vpop.xlane.xlu0 %2334
        %v2336 = vsel %vm764, %v2332, -inf
        %2337 = vmax.xlane.f32.xlu0 %v2336
        %v2338 = vpop.xlane.xlu0 %2337
        %v2339 = vsub.f32 %v2331, %v2335
        %v2340 = vsub.f32 %v2332, %v2338
        %v2341 = vmul.f32 %v2339, 1.442695
        %v2342 = vpow.pop %v2341
        %v2343 = vmul.f32 %v2340, 1.442695
        %v2344 = vpow.pop %v2343
        %v2345 = vsel %vm764, %v2342, 0.0
        %2346 = vadd.xlane.f32.xlu0 %v2345
        %v2347 = vpop.xlane.xlu0 %2346
        %v2348 = vsel %vm764, %v2344, 0.0
        %2349 = vadd.xlane.f32.xlu0 %v2348
        %v2350 = vpop.xlane.xlu0 %2349
        %v2351 = vrcp.pop %v2347
        %v2352 = vrcp.pop %v2350
        %v2353 = vmul.f32 %v2342, %v2351
        %v2354 = vmul.f32 %v2344, %v2352
        %2355 = vrot.lane.b32.xlu0 %v1017, 40
        %v2356 = vpop.permute.xlu0 %2355
        %2357 = vrot.lane.b32.xlu0 %v1022, 40
        %v2358 = vpop.permute.xlu0 %2357
        %v2362 = vsel %vm764, %v2353, 0
        %v2365 = vsel %vm764, %v2354, 0
        %2367 = vmatprep.subr.mxu0 0.0
        %2368 = vmatpush1.msra.mxu0 0.0
        %2369 = vmatprep.subr.mxu0 0.0
        %2370 = vmatpush1.msra.mxu0 0.0
        %2371 = vmatprep.subr.mxu0 0.0
        %2372 = vmatpush1.msra.mxu0 0.0
        %2373 = vmatprep.subr.mxu0 0.0
        %2374 = vmatpush1.msra.mxu0 0.0
        %2375 = vmatprep.subr.mxu0 0.0
        %2376 = vmatpush1.msra.mxu0 0.0
        %2377 = vmatprep.subr.mxu0 0.0
        %2378 = vmatpush1.msra.mxu0 0.0
        %2379 = vmatprep.subr.mxu0 0.0
        %2380 = vmatpush1.msra.mxu0 0.0
        %2381 = vmatprep.subr.mxu0 0.0
        %2382 = vmatpush1.msra.mxu0 0.0
        %2383 = vmatprep.subr.mxu0 0.0
        %2384 = vmatpush1.msra.mxu0 0.0
        %2385 = vmatprep.subr.mxu0 0.0
        %2386 = vmatpush1.msra.mxu0 0.0
        %2387 = vmatprep.subr.mxu0 0.0
        %2388 = vmatpush1.msra.mxu0 0.0
        %2389 = vmatprep.subr.mxu0 0.0
        %2390 = vmatpush1.msra.mxu0 0.0
        %2391 = vmatprep.subr.mxu0 0.0
        %2392 = vmatpush1.msra.mxu0 0.0
        %2393 = vmatprep.subr.mxu0 0.0
        %2394 = vmatpush1.msra.mxu0 0.0
        %2395 = vmatprep.subr.mxu0 0.0
        %2396 = vmatpush1.msra.mxu0 %v2358
        %2397 = vmatprep.subr.mxu0 0.0
        %2398 = vmatpush1.msra.mxu0 %v2356
        %2399 = vmatprep.subr.mxu0 0.0
        %2400 = vmatpush2.msra.mxu0 0.0
        %2401 = vmatprep.subr.mxu0 0.0
        %2402 = vmatpush2.msra.mxu0 0.0
        %2403 = vmatprep.subr.mxu0 0.0
        %2404 = vmatpush2.msra.mxu0 0.0
        %2405 = vmatprep.subr.mxu0 0.0
        %2406 = vmatpush2.msra.mxu0 0.0
        %2407 = vmatprep.subr.mxu0 0.0
        %2408 = vmatpush2.msra.mxu0 0.0
        %2409 = vmatprep.subr.mxu0 0.0
        %2410 = vmatpush2.msra.mxu0 0.0
        %2411 = vmatprep.subr.mxu0 0.0
        %2412 = vmatpush2.msra.mxu0 0.0
        %2413 = vmatprep.subr.mxu0 0.0
        %2414 = vmatpush2.msra.mxu0 0.0
        %2415 = vmatprep.subr.mxu0 0.0
        %2416 = vmatpush2.msra.mxu0 0.0
        %2417 = vmatprep.subr.mxu0 0.0
        %2418 = vmatpush2.msra.mxu0 0.0
        %2419 = vmatprep.subr.mxu0 0.0
        %2420 = vmatpush2.msra.mxu0 0.0
        %2421 = vmatprep.subr.mxu0 0.0
        %2422 = vmatpush2.msra.mxu0 0.0
        %2423 = vmatprep.subr.mxu0 0.0
        %2424 = vmatpush2.msra.mxu0 0.0
        %2425 = vmatprep.subr.mxu0 0.0
        %2426 = vmatpush2.msra.mxu0 0.0
        %2427 = vmatprep.subr.mxu0 0.0
        %2428 = vmatpush2.msra.mxu0 0.0
        %2429 = vmatprep.subr.mxu0 0.0
        %2430 = vmatpush2.msra.mxu0 0.0
        %2431 = vmatprep.mubr.f32.mxu0 0.0
        %2432 = vmatmul.mubr.f32.gmra.mxu0 %v2362
        %v2433 = vpop.f32.mrf.mxu0
        %v2434 = vadd.f32 0.0, %v2433
        %v2435 = vpop.f32.mrf.mxu0
        %2436 = vmatprep.mubr.f32.mxu0 0.0
        %2437 = vmatmul.mubr.f32.gmra.mxu0 %v2365
        %v2438 = vpop.f32.mrf.mxu0
        %v2439 = vadd.f32 0.0, %v2438
        %v2440 = vpop.f32.mrf.mxu0
        %2441 = vdwg.mxu0
        %2442 = vrot.lane.b32.xlu0 %v1017, 100
        %v2443 = vpop.permute.xlu0 %2442
        %2444 = vrot.lane.b32.xlu0 %v1022, 100
        %v2445 = vpop.permute.xlu0 %2444
        %2446 = vrot.lane.b32.xlu0 %v1017, 68
        %v2447 = vpop.permute.xlu0 %2446
        %2448 = vrot.lane.b32.xlu0 %v1022, 68
        %v2449 = vpop.permute.xlu0 %2448
        %v2450 = vsel %vm1035, %v2443, 0
        %v2452 = vsel %vm1035, %v2445, 0
        %v2454 = vsel %vm1035, %v2447, 0
        %v2456 = vsel %vm1035, %v2449, 0
        %2458 = vmatprep.subr.mxu0 0.0
        %2459 = vmatpush1.xpose.msra.mxu0 0.0
        %2460 = vmatprep.subr.mxu0 0.0
        %2461 = vmatpush1.xpose.msra.mxu0 0.0
        %2462 = vmatprep.subr.mxu0 0.0
        %2463 = vmatpush1.xpose.msra.mxu0 0.0
        %2464 = vmatprep.subr.mxu0 0.0
        %2465 = vmatpush1.xpose.msra.mxu0 0.0
        %2466 = vmatprep.subr.mxu0 0.0
        %2467 = vmatpush1.xpose.msra.mxu0 0.0
        %2468 = vmatprep.subr.mxu0 0.0
        %2469 = vmatpush1.xpose.msra.mxu0 0.0
        %2470 = vmatprep.subr.mxu0 0.0
        %2471 = vmatpush1.xpose.msra.mxu0 0.0
        %2472 = vmatprep.subr.mxu0 0.0
        %2473 = vmatpush1.xpose.msra.mxu0 0.0
        %2474 = vmatprep.subr.mxu0 0.0
        %2475 = vmatpush1.xpose.msra.mxu0 0.0
        %2476 = vmatprep.subr.mxu0 0.0
        %2477 = vmatpush1.xpose.msra.mxu0 0.0
        %2478 = vmatprep.subr.mxu0 0.0
        %2479 = vmatpush1.xpose.msra.mxu0 0.0
        %2480 = vmatprep.subr.mxu0 0.0
        %2481 = vmatpush1.xpose.msra.mxu0 0.0
        %2482 = vmatprep.subr.mxu0 0.0
        %2483 = vmatpush1.xpose.msra.mxu0 0.0
        %2484 = vmatprep.subr.mxu0 0.0
        %2485 = vmatpush1.xpose.msra.mxu0 0.0
        %2486 = vmatprep.subr.mxu0 0.0
        %2487 = vmatpush1.xpose.msra.mxu0 %v2456
        %2488 = vmatprep.subr.mxu0 0.0
        %2489 = vmatpush1.xpose.msra.mxu0 %v2454
        %2490 = vmatprep.subr.mxu0 0.0
        %2491 = vmatpush2.xpose.msra.mxu0 0.0
        %2492 = vmatprep.subr.mxu0 0.0
        %2493 = vmatpush2.xpose.msra.mxu0 0.0
        %2494 = vmatprep.subr.mxu0 0.0
        %2495 = vmatpush2.xpose.msra.mxu0 0.0
        %2496 = vmatprep.subr.mxu0 0.0
        %2497 = vmatpush2.xpose.msra.mxu0 0.0
        %2498 = vmatprep.subr.mxu0 0.0
        %2499 = vmatpush2.xpose.msra.mxu0 0.0
        %2500 = vmatprep.subr.mxu0 0.0
        %2501 = vmatpush2.xpose.msra.mxu0 0.0
        %2502 = vmatprep.subr.mxu0 0.0
        %2503 = vmatpush2.xpose.msra.mxu0 0.0
        %2504 = vmatprep.subr.mxu0 0.0
        %2505 = vmatpush2.xpose.msra.mxu0 0.0
        %2506 = vmatprep.subr.mxu0 0.0
        %2507 = vmatpush2.xpose.msra.mxu0 0.0
        %2508 = vmatprep.subr.mxu0 0.0
        %2509 = vmatpush2.xpose.msra.mxu0 0.0
        %2510 = vmatprep.subr.mxu0 0.0
        %2511 = vmatpush2.xpose.msra.mxu0 0.0
        %2512 = vmatprep.subr.mxu0 0.0
        %2513 = vmatpush2.xpose.msra.mxu0 0.0
        %2514 = vmatprep.subr.mxu0 0.0
        %2515 = vmatpush2.xpose.msra.mxu0 0.0
        %2516 = vmatprep.subr.mxu0 0.0
        %2517 = vmatpush2.xpose.msra.mxu0 0.0
        %2518 = vmatprep.subr.mxu0 0.0
        %2519 = vmatpush2.xpose.msra.mxu0 0.0
        %2520 = vmatprep.subr.mxu0 0.0
        %2521 = vmatpush2.xpose.msra.mxu0 0.0
        %2522 = vmatprep.mubr.f32.mxu0 0.0
        %2523 = vmatmul.mubr.f32.gmra.mxu0 %v2450
        %v2524 = vpop.f32.mrf.mxu0
        %v2525 = vadd.f32 0.0, %v2524
        %v2526 = vpop.f32.mrf.mxu0
        %2527 = vmatprep.mubr.f32.mxu0 0.0
        %2528 = vmatmul.mubr.f32.gmra.mxu0 %v2452
        %v2529 = vpop.f32.mrf.mxu0
        %v2530 = vadd.f32 0.0, %v2529
        %v2531 = vpop.f32.mrf.mxu0
        %2532 = vdwg.mxu0
        %v2533 = vmul.f32 %v2525, 0.5
        %v2534 = vmul.f32 %v2530, 0.5
        %v2535 = vsel %vm764, %v2533, -inf
        %2536 = vmax.xlane.f32.xlu0 %v2535
        %v2537 = vpop.xlane.xlu0 %2536
        %v2538 = vsel %vm764, %v2534, -inf
        %2539 = vmax.xlane.f32.xlu0 %v2538
        %v2540 = vpop.xlane.xlu0 %2539
        %v2541 = vsub.f32 %v2533, %v2537
        %v2542 = vsub.f32 %v2534, %v2540
        %v2543 = vmul.f32 %v2541, 1.442695
        %v2544 = vpow.pop %v2543
        %v2545 = vmul.f32 %v2542, 1.442695
        %v2546 = vpow.pop %v2545
        %v2547 = vsel %vm764, %v2544, 0.0
        %2548 = vadd.xlane.f32.xlu0 %v2547
        %v2549 = vpop.xlane.xlu0 %2548
        %v2550 = vsel %vm764, %v2546, 0.0
        %2551 = vadd.xlane.f32.xlu0 %v2550
        %v2552 = vpop.xlane.xlu0 %2551
        %v2553 = vrcp.pop %v2549
        %v2554 = vrcp.pop %v2552
        %v2555 = vmul.f32 %v2544, %v2553
        %v2556 = vmul.f32 %v2546, %v2554
        %2557 = vrot.lane.b32.xlu0 %v1017, 36
        %v2558 = vpop.permute.xlu0 %2557
        %2559 = vrot.lane.b32.xlu0 %v1022, 36
        %v2560 = vpop.permute.xlu0 %2559
        %v2564 = vsel %vm764, %v2555, 0
        %v2567 = vsel %vm764, %v2556, 0
        %2569 = vmatprep.subr.mxu0 0.0
        %2570 = vmatpush1.msra.mxu0 0.0
        %2571 = vmatprep.subr.mxu0 0.0
        %2572 = vmatpush1.msra.mxu0 0.0
        %2573 = vmatprep.subr.mxu0 0.0
        %2574 = vmatpush1.msra.mxu0 0.0
        %2575 = vmatprep.subr.mxu0 0.0
        %2576 = vmatpush1.msra.mxu0 0.0
        %2577 = vmatprep.subr.mxu0 0.0
        %2578 = vmatpush1.msra.mxu0 0.0
        %2579 = vmatprep.subr.mxu0 0.0
        %2580 = vmatpush1.msra.mxu0 0.0
        %2581 = vmatprep.subr.mxu0 0.0
        %2582 = vmatpush1.msra.mxu0 0.0
        %2583 = vmatprep.subr.mxu0 0.0
        %2584 = vmatpush1.msra.mxu0 0.0
        %2585 = vmatprep.subr.mxu0 0.0
        %2586 = vmatpush1.msra.mxu0 0.0
        %2587 = vmatprep.subr.mxu0 0.0
        %2588 = vmatpush1.msra.mxu0 0.0
        %2589 = vmatprep.subr.mxu0 0.0
        %2590 = vmatpush1.msra.mxu0 0.0
        %2591 = vmatprep.subr.mxu0 0.0
        %2592 = vmatpush1.msra.mxu0 0.0
        %2593 = vmatprep.subr.mxu0 0.0
        %2594 = vmatpush1.msra.mxu0 0.0
        %2595 = vmatprep.subr.mxu0 0.0
        %2596 = vmatpush1.msra.mxu0 0.0
        %2597 = vmatprep.subr.mxu0 0.0
        %2598 = vmatpush1.msra.mxu0 %v2560
        %2599 = vmatprep.subr.mxu0 0.0
        %2600 = vmatpush1.msra.mxu0 %v2558
        %2601 = vmatprep.subr.mxu0 0.0
        %2602 = vmatpush2.msra.mxu0 0.0
        %2603 = vmatprep.subr.mxu0 0.0
        %2604 = vmatpush2.msra.mxu0 0.0
        %2605 = vmatprep.subr.mxu0 0.0
        %2606 = vmatpush2.msra.mxu0 0.0
        %2607 = vmatprep.subr.mxu0 0.0
        %2608 = vmatpush2.msra.mxu0 0.0
        %2609 = vmatprep.subr.mxu0 0.0
        %2610 = vmatpush2.msra.mxu0 0.0
        %2611 = vmatprep.subr.mxu0 0.0
        %2612 = vmatpush2.msra.mxu0 0.0
        %2613 = vmatprep.subr.mxu0 0.0
        %2614 = vmatpush2.msra.mxu0 0.0
        %2615 = vmatprep.subr.mxu0 0.0
        %2616 = vmatpush2.msra.mxu0 0.0
        %2617 = vmatprep.subr.mxu0 0.0
        %2618 = vmatpush2.msra.mxu0 0.0
        %2619 = vmatprep.subr.mxu0 0.0
        %2620 = vmatpush2.msra.mxu0 0.0
        %2621 = vmatprep.subr.mxu0 0.0
        %2622 = vmatpush2.msra.mxu0 0.0
        %2623 = vmatprep.subr.mxu0 0.0
        %2624 = vmatpush2.msra.mxu0 0.0
        %2625 = vmatprep.subr.mxu0 0.0
        %2626 = vmatpush2.msra.mxu0 0.0
        %2627 = vmatprep.subr.mxu0 0.0
        %2628 = vmatpush2.msra.mxu0 0.0
        %2629 = vmatprep.subr.mxu0 0.0
        %2630 = vmatpush2.msra.mxu0 0.0
        %2631 = vmatprep.subr.mxu0 0.0
        %2632 = vmatpush2.msra.mxu0 0.0
        %2633 = vmatprep.mubr.f32.mxu0 0.0
        %2634 = vmatmul.mubr.f32.gmra.mxu0 %v2564
        %v2635 = vpop.f32.mrf.mxu0
        %v2636 = vadd.f32 0.0, %v2635
        %v2637 = vpop.f32.mrf.mxu0
        %2638 = vmatprep.mubr.f32.mxu0 0.0
        %2639 = vmatmul.mubr.f32.gmra.mxu0 %v2567
        %v2640 = vpop.f32.mrf.mxu0
        %v2641 = vadd.f32 0.0, %v2640
        %v2642 = vpop.f32.mrf.mxu0
        %2643 = vdwg.mxu0
        %2646 = vrot.lane.b32.xlu0 %v1424, 4
        %v2647 = vpop.permute.xlu0 %2646
        %2648 = vrot.lane.b32.xlu0 %v1429, 4
        %v2649 = vpop.permute.xlu0 %2648
        %2654 = vrot.lane.b32.xlu0 %v1626, 8
        %v2655 = vpop.permute.xlu0 %2654
        %2656 = vrot.lane.b32.xlu0 %v1631, 8
        %v2657 = vpop.permute.xlu0 %2656
        %2662 = vrot.lane.b32.xlu0 %v1828, 12
        %v2663 = vpop.permute.xlu0 %2662
        %2664 = vrot.lane.b32.xlu0 %v1833, 12
        %v2665 = vpop.permute.xlu0 %2664
        %2670 = vrot.lane.b32.xlu0 %v2030, 16
        %v2671 = vpop.permute.xlu0 %2670
        %2672 = vrot.lane.b32.xlu0 %v2035, 16
        %v2673 = vpop.permute.xlu0 %2672
        %2678 = vrot.lane.b32.xlu0 %v2232, 20
        %v2679 = vpop.permute.xlu0 %2678
        %2680 = vrot.lane.b32.xlu0 %v2237, 20
        %v2681 = vpop.permute.xlu0 %2680
        %2686 = vrot.lane.b32.xlu0 %v2434, 24
        %v2687 = vpop.permute.xlu0 %2686
        %2688 = vrot.lane.b32.xlu0 %v2439, 24
        %v2689 = vpop.permute.xlu0 %2688
        %2694 = vrot.lane.b32.xlu0 %v2636, 28
        %v2695 = vpop.permute.xlu0 %2694
        %2696 = vrot.lane.b32.xlu0 %v2641, 28
        %v2697 = vpop.permute.xlu0 %2696
        %v2700 = vsel %vm1035, %v1222, %v2647
        %v2701 = vsel %vm1035, %v1227, %v2649
        %vm2702 = vcmask 64512
        %v2703 = vsel %vm2702, %v2700, %v2655
        %v2704 = vsel %vm2702, %v2701, %v2657
        %vm2705 = vcmask 97280
        %v2706 = vsel %vm2705, %v2703, %v2663
        %v2707 = vsel %vm2705, %v2704, %v2665
        %v2708 = vsel %vm764, %v2706, %v2671
        %v2709 = vsel %vm764, %v2707, %v2673
        %vm2710 = vcmask 162816
        %v2711 = vsel %vm2710, %v2708, %v2679
        %v2712 = vsel %vm2710, %v2709, %v2681
        %vm2713 = vcmask 195584
        %v2714 = vsel %vm2713, %v2711, %v2687
        %v2715 = vsel %vm2713, %v2712, %v2689
        %vm2716 = vcmask 228352
        %v2717 = vsel %vm2716, %v2714, %v2695
        %v2718 = vsel %vm2716, %v2715, %v2697
        %v2719 = vld [vmem:[#allocation12] sm:$0x1]
        %v2721 = vlaneseq
        %v2722 = vshrl.u32 %v2721, 7
        %v2723 = vsub.s32 0, %v2722
        %v2724 = vrot.slane %v2719, %v2723
        %v2727 = vsel %vm611, %v2717, 0
        %v2730 = vsel %vm611, %v2718, 0
        %2732 = vmatprep.subr.mxu0 0.0
        %2733 = vmatpush1.msra.mxu0 0.0
        %2734 = vmatprep.subr.mxu0 0.0
        %2735 = vmatpush1.msra.mxu0 0.0
        %2736 = vmatprep.subr.mxu0 0.0
        %2737 = vmatpush1.msra.mxu0 0.0
        %2738 = vmatprep.subr.mxu0 0.0
        %2739 = vmatpush1.msra.mxu0 0.0
        %2740 = vmatprep.subr.mxu0 0.0
        %2741 = vmatpush1.msra.mxu0 0.0
        %2742 = vmatprep.subr.mxu0 0.0
        %2743 = vmatpush1.msra.mxu0 0.0
        %2744 = vmatprep.subr.mxu0 0.0
        %2745 = vmatpush1.msra.mxu0 0.0
        %2746 = vmatprep.subr.mxu0 0.0
        %2747 = vmatpush1.msra.mxu0 0.0
        %2748 = vmatprep.subr.mxu0 0.0
        %2749 = vmatpush1.msra.mxu0 0.0
        %2750 = vmatprep.subr.mxu0 0.0
        %2751 = vmatpush1.msra.mxu0 0.0
        %2752 = vmatprep.subr.mxu0 0.0
        %2753 = vmatpush1.msra.mxu0 0.0
        %2754 = vmatprep.subr.mxu0 0.0
        %2755 = vmatpush1.msra.mxu0 0.0
        %2756 = vmatprep.subr.mxu0 0.0
        %2757 = vmatpush1.msra.mxu0 %v1028
        %2758 = vmatprep.subr.mxu0 0.0
        %2759 = vmatpush1.msra.mxu0 %v1027
        %2760 = vmatprep.subr.mxu0 0.0
        %2761 = vmatpush1.msra.mxu0 %v1026
        %2762 = vmatprep.subr.mxu0 0.0
        %2763 = vmatpush1.msra.mxu0 %v1025
        %2764 = vmatprep.subr.mxu0 0.0
        %2765 = vmatpush2.msra.mxu0 0.0
        %2766 = vmatprep.subr.mxu0 0.0
        %2767 = vmatpush2.msra.mxu0 0.0
        %2768 = vmatprep.subr.mxu0 0.0
        %2769 = vmatpush2.msra.mxu0 0.0
        %2770 = vmatprep.subr.mxu0 0.0
        %2771 = vmatpush2.msra.mxu0 0.0
        %2772 = vmatprep.subr.mxu0 0.0
        %2773 = vmatpush2.msra.mxu0 0.0
        %2774 = vmatprep.subr.mxu0 0.0
        %2775 = vmatpush2.msra.mxu0 0.0
        %2776 = vmatprep.subr.mxu0 0.0
        %2777 = vmatpush2.msra.mxu0 0.0
        %2778 = vmatprep.subr.mxu0 0.0
        %2779 = vmatpush2.msra.mxu0 0.0
        %2780 = vmatprep.subr.mxu0 0.0
        %2781 = vmatpush2.msra.mxu0 0.0
        %2782 = vmatprep.subr.mxu0 0.0
        %2783 = vmatpush2.msra.mxu0 0.0
        %2784 = vmatprep.subr.mxu0 0.0
        %2785 = vmatpush2.msra.mxu0 0.0
        %2786 = vmatprep.subr.mxu0 0.0
        %2787 = vmatpush2.msra.mxu0 0.0
        %2788 = vmatprep.subr.mxu0 0.0
        %2789 = vmatpush2.msra.mxu0 0.0
        %2790 = vmatprep.subr.mxu0 0.0
        %2791 = vmatpush2.msra.mxu0 0.0
        %2792 = vmatprep.subr.mxu0 0.0
        %2793 = vmatpush2.msra.mxu0 0.0
        %2794 = vmatprep.subr.mxu0 0.0
        %2795 = vmatpush2.msra.mxu0 0.0
        %2796 = vmatprep.mubr.f32.mxu0 0.0
        %2797 = vmatmul.mubr.f32.gmra.mxu0 %v2727
        %v2798 = vpop.f32.mrf.mxu0
        %v2799 = vadd.f32 %v2724, %v2798
        %v2800 = vpop.f32.mrf.mxu0
        %2801 = vmatprep.mubr.f32.mxu0 0.0
        %2802 = vmatmul.mubr.f32.gmra.mxu0 %v2730
        %v2803 = vpop.f32.mrf.mxu0
        %v2804 = vadd.f32 %v2724, %v2803
        %v2805 = vpop.f32.mrf.mxu0
        %2806 = vdwg.mxu0
        %v2807 = vadd.f32 %v2799, %v931
        %v2808 = vadd.f32 %v2804, %v932
        %v2809 = vld [vmem:[#allocation14] sm:$0xf]
        %v2812 = vunpack.c.l.s4 1966171168
        %v2813 = vunpack.c.0.s8 %v2812
        %v2814 = vlaneseq
        %v2815 = vshrl.u32 %v2814, 7
        %v2816 = vsub.s32 %v2813, %v2815
        %v2817 = vrot.slane %v2809, %v2816
        %v2818 = vcombine.high %v2817, %v2817
        %v2820 = vunpack.c.l.s4 1966171168
        %v2821 = vunpack.c.0.s8 %v2820
        %v2822 = vlaneseq
        %v2823 = vshrl.u32 %v2822, 7
        %v2824 = vsub.s32 %v2821, %v2823
        %v2825 = vrot.slane %v2817, %v2824
        %v2827 = vunpack.c.l.s4 1966171168
        %v2828 = vunpack.c.0.s8 %v2827
        %v2829 = vlaneseq
        %v2830 = vshrl.u32 %v2829, 7
        %v2831 = vsub.s32 %v2828, %v2830
        %v2832 = vrot.slane %v2818, %v2831
        %v2833 = vcombine.high %v2825, %v2825
        %v2834 = vcombine.high %v2832, %v2832
        %v2835 = vlaneseq
        %v2836 = vshrl.u32 %v2835, 7
        %v2837 = vsub.s32 0, %v2836
        %v2838 = vrot.slane %v2825, %v2837
        %v2839 = vlaneseq
        %v2840 = vshrl.u32 %v2839, 7
        %v2841 = vsub.s32 0, %v2840
        %v2842 = vrot.slane %v2832, %v2841
        %v2843 = vlaneseq
        %v2844 = vshrl.u32 %v2843, 7
        %v2845 = vsub.s32 0, %v2844
        %v2846 = vrot.slane %v2833, %v2845
        %v2847 = vlaneseq
        %v2848 = vshrl.u32 %v2847, 7
        %v2849 = vsub.s32 0, %v2848
        %v2850 = vrot.slane %v2834, %v2849
        %v2855 = vmul.f32 %v2807, %v2838
        %v2856 = vmul.f32 %v2808, %v2838
        %v2857 = vmul.f32 %v2807, %v2842
        %v2858 = vmul.f32 %v2808, %v2842
        %v2859 = vmul.f32 %v2807, %v2846
        %v2860 = vmul.f32 %v2808, %v2846
        %v2861 = vmul.f32 %v2807, %v2850
        %v2862 = vmul.f32 %v2808, %v2850
        %v2863 = vld [vmem:[%s10] sm:$0x1]
        %v2865 = vlaneseq
        %v2866 = vshrl.u32 %v2865, 7
        %v2867 = vsub.s32 0, %v2866
        %v2868 = vrot.slane %v2863, %v2867
        %v2870 = vadd.f32 %v2855, %v2868
        %v2871 = vadd.f32 %v2856, %v2868
        %v2872 = vadd.f32 %v2857, %v2868
        %v2873 = vadd.f32 %v2858, %v2868
        %v2874 = vadd.f32 %v2859, %v2868
        %v2875 = vadd.f32 %v2860, %v2868
        %v2876 = vadd.f32 %v2861, %v2868
        %v2877 = vadd.f32 %v2862, %v2868
        %v2878 = vsel %vm611, %v2870, 0.0
        %2879 = vadd.xlane.f32.xlu0 %v2878
        %v2880 = vpop.xlane.xlu0 %2879
        %v2881 = vsel %vm611, %v2871, 0.0
        %2882 = vadd.xlane.f32.xlu0 %v2881
        %v2883 = vpop.xlane.xlu0 %2882
        %v2884 = vsel %vm611, %v2872, 0.0
        %2885 = vadd.xlane.f32.xlu0 %v2884
        %v2886 = vpop.xlane.xlu0 %2885
        %v2887 = vsel %vm611, %v2873, 0.0
        %2888 = vadd.xlane.f32.xlu0 %v2887
        %v2889 = vpop.xlane.xlu0 %2888
        %v2890 = vsel %vm611, %v2874, 0.0
        %2891 = vadd.xlane.f32.xlu0 %v2890
        %v2892 = vpop.xlane.xlu0 %2891
        %v2893 = vsel %vm611, %v2875, 0.0
        %2894 = vadd.xlane.f32.xlu0 %v2893
        %v2895 = vpop.xlane.xlu0 %2894
        %v2896 = vsel %vm611, %v2876, 0.0
        %2897 = vadd.xlane.f32.xlu0 %v2896
        %v2898 = vpop.xlane.xlu0 %2897
        %v2899 = vsel %vm611, %v2877, 0.0
        %2900 = vadd.xlane.f32.xlu0 %v2899
        %v2901 = vpop.xlane.xlu0 %2900
        %v2902 = vrcp.pop 32.0
        %v2903 = vmul.f32 %v2880, %v2902
        %v2904 = vmul.f32 %v2883, %v2902
        %v2905 = vmul.f32 %v2886, %v2902
        %v2906 = vmul.f32 %v2889, %v2902
        %v2907 = vmul.f32 %v2892, %v2902
        %v2908 = vmul.f32 %v2895, %v2902
        %v2909 = vmul.f32 %v2898, %v2902
        %v2910 = vmul.f32 %v2901, %v2902
        %v2911 = vsub.f32 %v2870, %v2903
        %v2912 = vsub.f32 %v2871, %v2904
        %v2913 = vsub.f32 %v2872, %v2905
        %v2914 = vsub.f32 %v2873, %v2906
        %v2915 = vsub.f32 %v2874, %v2907
        %v2916 = vsub.f32 %v2875, %v2908
        %v2917 = vsub.f32 %v2876, %v2909
        %v2918 = vsub.f32 %v2877, %v2910
        %v2919 = vmul.f32 %v2911, %v2911
        %v2920 = vmul.f32 %v2912, %v2912
        %v2921 = vmul.f32 %v2913, %v2913
        %v2922 = vmul.f32 %v2914, %v2914
        %v2923 = vmul.f32 %v2915, %v2915
        %v2924 = vmul.f32 %v2916, %v2916
        %v2925 = vmul.f32 %v2917, %v2917
        %v2926 = vmul.f32 %v2918, %v2918
        %v2927 = vsel %vm611, %v2919, 0.0
        %2928 = vadd.xlane.f32.xlu0 %v2927
        %v2929 = vpop.xlane.xlu0 %2928
        %v2930 = vsel %vm611, %v2920, 0.0
        %2931 = vadd.xlane.f32.xlu0 %v2930
        %v2932 = vpop.xlane.xlu0 %2931
        %v2933 = vsel %vm611, %v2921, 0.0
        %2934 = vadd.xlane.f32.xlu0 %v2933
        %v2935 = vpop.xlane.xlu0 %2934
        %v2936 = vsel %vm611, %v2922, 0.0
        %2937 = vadd.xlane.f32.xlu0 %v2936
        %v2938 = vpop.xlane.xlu0 %2937
        %v2939 = vsel %vm611, %v2923, 0.0
        %2940 = vadd.xlane.f32.xlu0 %v2939
        %v2941 = vpop.xlane.xlu0 %2940
        %v2942 = vsel %vm611, %v2924, 0.0
        %2943 = vadd.xlane.f32.xlu0 %v2942
        %v2944 = vpop.xlane.xlu0 %2943
        %v2945 = vsel %vm611, %v2925, 0.0
        %2946 = vadd.xlane.f32.xlu0 %v2945
        %v2947 = vpop.xlane.xlu0 %2946
        %v2948 = vsel %vm611, %v2926, 0.0
        %2949 = vadd.xlane.f32.xlu0 %v2948
        %v2950 = vpop.xlane.xlu0 %2949
        %v2951 = vmul.f32 %v2929, %v2902
        %v2952 = vmul.f32 %v2932, %v2902
        %v2953 = vmul.f32 %v2935, %v2902
        %v2954 = vmul.f32 %v2938, %v2902
        %v2955 = vmul.f32 %v2941, %v2902
        %v2956 = vmul.f32 %v2944, %v2902
        %v2957 = vmul.f32 %v2947, %v2902
        %v2958 = vmul.f32 %v2950, %v2902
        %v2959 = vadd.f32 %v2951, 1e-05
        %v2960 = vadd.f32 %v2952, 1e-05
        %v2961 = vadd.f32 %v2953, 1e-05
        %v2962 = vadd.f32 %v2954, 1e-05
        %v2963 = vadd.f32 %v2955, 1e-05
        %v2964 = vadd.f32 %v2956, 1e-05
        %v2965 = vadd.f32 %v2957, 1e-05
        %v2966 = vadd.f32 %v2958, 1e-05
        %v2967 = vrsqrt.pop %v2959
        %v2968 = vrsqrt.pop %v2960
        %v2969 = vrsqrt.pop %v2961
        %v2970 = vrsqrt.pop %v2962
        %v2971 = vrsqrt.pop %v2963
        %v2972 = vrsqrt.pop %v2964
        %v2973 = vrsqrt.pop %v2965
        %v2974 = vrsqrt.pop %v2966
        %v2975 = vmul.f32 %v2911, %v2967
        %v2976 = vmul.f32 %v2912, %v2968
        %v2977 = vmul.f32 %v2913, %v2969
        %v2978 = vmul.f32 %v2914, %v2970
        %v2979 = vmul.f32 %v2915, %v2971
        %v2980 = vmul.f32 %v2916, %v2972
        %v2981 = vmul.f32 %v2917, %v2973
        %v2982 = vmul.f32 %v2918, %v2974
        %v2983 = vld [vmem:[%s11] sm:$0x1]
        %v2985 = vlaneseq
        %v2986 = vshrl.u32 %v2985, 7
        %v2987 = vsub.s32 0, %v2986
        %v2988 = vrot.slane %v2983, %v2987
        %v2990 = vmul.f32 %v2975, %v2988
        %v2991 = vmul.f32 %v2976, %v2988
        %v2992 = vmul.f32 %v2977, %v2988
        %v2993 = vmul.f32 %v2978, %v2988
        %v2994 = vmul.f32 %v2979, %v2988
        %v2995 = vmul.f32 %v2980, %v2988
        %v2996 = vmul.f32 %v2981, %v2988
        %v2997 = vmul.f32 %v2982, %v2988
        %v2998 = vld [vmem:[%s12] sm:$0x1]
        %v3000 = vlaneseq
        %v3001 = vshrl.u32 %v3000, 7
        %v3002 = vsub.s32 0, %v3001
        %v3003 = vrot.slane %v2998, %v3002
        %v3005 = vadd.f32 %v2990, %v3003
        %v3006 = vadd.f32 %v2991, %v3003
        %v3007 = vadd.f32 %v2992, %v3003
        %v3008 = vadd.f32 %v2993, %v3003
        %v3009 = vadd.f32 %v2994, %v3003
        %v3010 = vadd.f32 %v2995, %v3003
        %v3011 = vadd.f32 %v2996, %v3003
        %v3012 = vadd.f32 %v2997, %v3003
        %v3013 = vld [vmem:[%s13] sm:$0xff]
        %v3014 = vld [vmem:[%s13 + $0x8] sm:$0xff]
        %v3015 = vld [vmem:[%s13 + $0x10] sm:$0xff]
        %v3016 = vld [vmem:[%s13 + $0x18] sm:$0xff]
        %v3017 = vld [vmem:[%s14] sm:$0x1]
        %v3019 = vlaneseq
        %v3020 = vshrl.u32 %v3019, 7
        %v3021 = vsub.s32 0, %v3020
        %v3022 = vrot.slane %v3017, %v3021
        %v3025 = vsel %vm611, %v3005, 0
        %v3028 = vsel %vm611, %v3006, 0
        %v3031 = vsel %vm611, %v3007, 0
        %v3034 = vsel %vm611, %v3008, 0
        %v3037 = vsel %vm611, %v3009, 0
        %v3040 = vsel %vm611, %v3010, 0
        %v3043 = vsel %vm611, %v3011, 0
        %v3046 = vsel %vm611, %v3012, 0
        %3048 = vmatprep.subr.mxu0 0.0
        %3049 = vmatpush1.msra.mxu0 0.0
        %3050 = vmatprep.subr.mxu0 0.0
        %3051 = vmatpush1.msra.mxu0 0.0
        %3052 = vmatprep.subr.mxu0 0.0
        %3053 = vmatpush1.msra.mxu0 0.0
        %3054 = vmatprep.subr.mxu0 0.0
        %3055 = vmatpush1.msra.mxu0 0.0
        %3056 = vmatprep.subr.mxu0 0.0
        %3057 = vmatpush1.msra.mxu0 0.0
        %3058 = vmatprep.subr.mxu0 0.0
        %3059 = vmatpush1.msra.mxu0 0.0
        %3060 = vmatprep.subr.mxu0 0.0
        %3061 = vmatpush1.msra.mxu0 0.0
        %3062 = vmatprep.subr.mxu0 0.0
        %3063 = vmatpush1.msra.mxu0 0.0
        %3064 = vmatprep.subr.mxu0 0.0
        %3065 = vmatpush1.msra.mxu0 0.0
        %3066 = vmatprep.subr.mxu0 0.0
        %3067 = vmatpush1.msra.mxu0 0.0
        %3068 = vmatprep.subr.mxu0 0.0
        %3069 = vmatpush1.msra.mxu0 0.0
        %3070 = vmatprep.subr.mxu0 0.0
        %3071 = vmatpush1.msra.mxu0 0.0
        %3072 = vmatprep.subr.mxu0 0.0
        %3073 = vmatpush1.msra.mxu0 %v3016
        %3074 = vmatprep.subr.mxu0 0.0
        %3075 = vmatpush1.msra.mxu0 %v3015
        %3076 = vmatprep.subr.mxu0 0.0
        %3077 = vmatpush1.msra.mxu0 %v3014
        %3078 = vmatprep.subr.mxu0 0.0
        %3079 = vmatpush1.msra.mxu0 %v3013
        %3080 = vmatprep.subr.mxu0 0.0
        %3081 = vmatpush2.msra.mxu0 0.0
        %3082 = vmatprep.subr.mxu0 0.0
        %3083 = vmatpush2.msra.mxu0 0.0
        %3084 = vmatprep.subr.mxu0 0.0
        %3085 = vmatpush2.msra.mxu0 0.0
        %3086 = vmatprep.subr.mxu0 0.0
        %3087 = vmatpush2.msra.mxu0 0.0
        %3088 = vmatprep.subr.mxu0 0.0
        %3089 = vmatpush2.msra.mxu0 0.0
        %3090 = vmatprep.subr.mxu0 0.0
        %3091 = vmatpush2.msra.mxu0 0.0
        %3092 = vmatprep.subr.mxu0 0.0
        %3093 = vmatpush2.msra.mxu0 0.0
        %3094 = vmatprep.subr.mxu0 0.0
        %3095 = vmatpush2.msra.mxu0 0.0
        %3096 = vmatprep.subr.mxu0 0.0
        %3097 = vmatpush2.msra.mxu0 0.0
        %3098 = vmatprep.subr.mxu0 0.0
        %3099 = vmatpush2.msra.mxu0 0.0
        %3100 = vmatprep.subr.mxu0 0.0
        %3101 = vmatpush2.msra.mxu0 0.0
        %3102 = vmatprep.subr.mxu0 0.0
        %3103 = vmatpush2.msra.mxu0 0.0
        %3104 = vmatprep.subr.mxu0 0.0
        %3105 = vmatpush2.msra.mxu0 0.0
        %3106 = vmatprep.subr.mxu0 0.0
        %3107 = vmatpush2.msra.mxu0 0.0
        %3108 = vmatprep.subr.mxu0 0.0
        %3109 = vmatpush2.msra.mxu0 0.0
        %3110 = vmatprep.subr.mxu0 0.0
        %3111 = vmatpush2.msra.mxu0 0.0
        %3112 = vmatprep.mubr.f32.mxu0 0.0
        %3113 = vmatmul.mubr.f32.gmra.mxu0 %v3025
        %v3114 = vpop.f32.mrf.mxu0
        %v3115 = vadd.f32 %v3022, %v3114
        %v3116 = vpop.f32.mrf.mxu0
        %3117 = vmatprep.mubr.f32.mxu0 0.0
        %3118 = vmatmul.mubr.f32.gmra.mxu0 %v3028
        %v3119 = vpop.f32.mrf.mxu0
        %v3120 = vadd.f32 %v3022, %v3119
        %v3121 = vpop.f32.mrf.mxu0
        %3122 = vmatprep.mubr.f32.mxu0 0.0
        %3123 = vmatmul.mubr.f32.gmra.mxu0 %v3031
        %v3124 = vpop.f32.mrf.mxu0
        %v3125 = vadd.f32 %v3022, %v3124
        %v3126 = vpop.f32.mrf.mxu0
        %3127 = vmatprep.mubr.f32.mxu0 0.0
        %3128 = vmatmul.mubr.f32.gmra.mxu0 %v3034
        %v3129 = vpop.f32.mrf.mxu0
        %v3130 = vadd.f32 %v3022, %v3129
        %v3131 = vpop.f32.mrf.mxu0
        %3132 = vmatprep.mubr.f32.mxu0 0.0
        %3133 = vmatmul.mubr.f32.gmra.mxu0 %v3037
        %v3134 = vpop.f32.mrf.mxu0
        %v3135 = vadd.f32 %v3022, %v3134
        %v3136 = vpop.f32.mrf.mxu0
        %3137 = vmatprep.mubr.f32.mxu0 0.0
        %3138 = vmatmul.mubr.f32.gmra.mxu0 %v3040
        %v3139 = vpop.f32.mrf.mxu0
        %v3140 = vadd.f32 %v3022, %v3139
        %v3141 = vpop.f32.mrf.mxu0
        %3142 = vmatprep.mubr.f32.mxu0 0.0
        %3143 = vmatmul.mubr.f32.gmra.mxu0 %v3043
        %v3144 = vpop.f32.mrf.mxu0
        %v3145 = vadd.f32 %v3022, %v3144
        %v3146 = vpop.f32.mrf.mxu0
        %3147 = vmatprep.mubr.f32.mxu0 0.0
        %3148 = vmatmul.mubr.f32.gmra.mxu0 %v3046
        %v3149 = vpop.f32.mrf.mxu0
        %v3150 = vadd.f32 %v3022, %v3149
        %v3151 = vpop.f32.mrf.mxu0
        %3152 = vdwg.mxu0
        %3153 = vst.msk [vmem:[%s591] sm:$0xff] %vm611, %v3115
        %3154 = vst.msk [vmem:[%s591 + $0x8] sm:$0xff] %vm611, %v3120
        %3155 = vst.msk [vmem:[%s591 + $0x10] sm:$0xff] %vm611, %v3125
        %3156 = vst.msk [vmem:[%s591 + $0x18] sm:$0xff] %vm611, %v3130
        %3157 = vst.msk [vmem:[%s591 + $0x20] sm:$0xff] %vm611, %v3135
        %3158 = vst.msk [vmem:[%s591 + $0x28] sm:$0xff] %vm611, %v3140
        %3159 = vst.msk [vmem:[%s591 + $0x30] sm:$0xff] %vm611, %v3145
        %3160 = vst.msk [vmem:[%s591 + $0x38] sm:$0xff] %vm611, %v3150
        %s3161 = sand.u32 %s365, 1
        %s3162 = scalar_lea.sflag [#allocation5], %s3161
        %s3163 = sand.u32 %s365, 1
        %s3164 = smul.addr %s3163, 64
        %s3165 = scalar_lea.vmem [#allocation15], %s3164
        // Predicated region
        $region109: #{tpu_custom_call.1} parent=79 // pred_check
          %p3166 = pneg %p375
        $region110: #{tpu_custom_call.1} parent=79 // pred_check_branch
          %3168 = sbr.rel (%p3166) target = $region112
        $region111: #{tpu_custom_call.1} parent=79 // pred_region
          %s3170 = ssub.s32 1024, 1024
          %3171 = vsyncadd %s3162, %s3170
          %s3172 = smul.addr %s37, 8
          %s3173 = smul.addr %s3172, 128
          %s3174 = scalar_lea.hbm %s15, %s3173
          %s3175 = sshll.u32 %s3165, 4
          %s3176 = int_to_ptr.vmem [resolvable:$true] %s3175
          %3181 = dma.vmem_to_hbm [thread:$0]  %s3176, 1024, %s3174, %s3162, 128, 128, 8
        $region112: #{tpu_custom_call.1} parent=79 // pred_fallthru
          _
      $region80: #{tpu_custom_call.1} parent=5 // pred_fallthru
        _
      %p3182 = scmp.le.s32.totalorder 2, %s32
      // Predicated region
      $region113: #{tpu_custom_call.1} parent=5 // pred_check
        %p3183 = pneg %p3182
      $region114: #{tpu_custom_call.1} parent=5 // pred_check_branch
        %3185 = sbr.rel (%p3183) target = $region116
      $region115: #{tpu_custom_call.1} parent=5 // pred_region
        %s3186 = ssub.s32 %s32, 2
        // Predicated region
        $region117: #{tpu_custom_call.1} parent=115 // pred_check
          %p3187 = pneg %p381
        $region118: #{tpu_custom_call.1} parent=115 // pred_check_branch
          %3189 = sbr.rel (%p3187) target = $region120
        $region119: #{tpu_custom_call.1} parent=115 // pred_region
          %s3190 = sand.u32 %s366, 1
          %s3191 = scalar_lea.sflag [#allocation5], %s3190
          %s3192 = sand.u32 %s366, 1
          %s3193 = smul.addr %s3192, 64
          %s3194 = scalar_lea.vmem [#allocation15], %s3193
          %3195 = dma.done %s3191, 1024
        $region120: #{tpu_custom_call.1} parent=115 // pred_fallthru
          _
      $region116: #{tpu_custom_call.1} parent=5 // pred_fallthru
        _
    $region6: #{tpu_custom_call.1} parent=1 // loop_footer
      %s36 = sadd.s32 1, %s32
    $region7: #{tpu_custom_call.1} parent=1 // loop_footer_branch
      %31 = sbr.rel target = $region3
    $region8: #{tpu_custom_call.1} parent=1 // loop_exit
      _
    %3196 = vsyncpa [#allocation4], 1
    %s3197 = scalar_lea.sflag [#allocation4], 1
    %3198 = vsyncpa %s3197, 1
    %3199 = vsyncpa [#allocation7], 1
    %3200 = vsyncpa [#allocation10], 1
    %3201 = vsyncpa [#allocation13], 1
    %3202 = vsyncpa [#allocation5], 1
    %s3203 = scalar_lea.sflag [#allocation5], 1
    %3204 = vsyncpa %s3203, 1

</llo_original>
